<compile_context>
chip_gen: v6e
topology: v6e:2x2x1
jax: 0.10.0
libtpu: 0.0.40
codegen_flags: <defaults>
</compile_context>

<pallas_src>
import functools

import jax
import jax.numpy as jnp
from jax.experimental import pallas as pl
from jax.experimental.pallas import tpu as pltpu

EPS = 1e-6                 # norm_layer = partial(nn.LayerNorm, eps=1e-6)
_ROW_CAP = 2048            # max token rows per grid step (perf review: 1024-2048)
_MASK_ATTN_MAX_C = 256     # head-mask attention only while C fits one MXU k-tile
                           # (v6e/v7x; on v5e 128 would be ideal - perf only)


# --------------------------- hardware-aware sizing ----------------------------

def _vmem_capacity_bytes():
    try:
        info = pltpu.get_tpu_info()
        for attr in ("vmem_capacity_bytes", "vmem_size_bytes", "vmem_bytes"):
            v = getattr(info, attr, None)
            if v:
                return int(v)
    except Exception:
        pass
    return 64 * 1024 * 1024            # conservative default (v7x-sized VMEM)


def _vmem_limit_bytes():
    cap = _vmem_capacity_bytes()
    # ~75% of physical VMEM: 96 MiB on 128-MiB parts (v5e/v6e), 48 MiB on v7x.
    return max(32 * 1024 * 1024, min((cap * 3) // 4, 112 * 1024 * 1024))


def _rup(x, m):
    return ((x + m - 1) // m) * m


def _choose_bt_tile(bt_total, n, c, hid, d_proj, io_bytes, vmem_limit):
    """Batch items per grid step, sized from a padded VMEM estimate."""
    if bt_total <= 1:
        return 1
    if n % 8 != 0:
        # Flattening (bt, n, c) -> (bt*n, c) is only sublane-trivial when the
        # per-item row count is 8-aligned; otherwise process one item/step.
        # TODO(synk): pad n to a multiple of 8 (with masked attention) to lift this.
        return 1
    cp, hp = _rup(c, 128), _rup(hid, 128)
    np_l = _rup(n, 128)                              # lane width of (n, n) logits
    dp = _rup(d_proj, 128) if d_proj else 0
    per_item = (
        2 * 2 * n * cp * io_bytes                    # x in + out blocks, 2 buffers each
        + (2 * (n - 1) * dp * io_bytes if d_proj else 0)  # inner_flat blocks
        + n * (8 * cp + hp + np_l + dp) * 4          # live f32 activations (rough)
    )
    budget = int(vmem_limit * 0.6)                   # leave room for weights + spill
    max_items = max(1, min(budget // max(per_item, 1), _ROW_CAP // max(n, 1)))
    tile = 1
    for t in range(1, bt_total + 1):                 # largest divisor within budget
        if bt_total % t == 0 and t <= max_items:
            tile = t
    # keep >= 2 grid steps so v7x's two TensorCores both get work
    while tile > 1 and (bt_total // tile) < 2:
        tile -= 1
        while bt_total % tile:
            tile -= 1
    return tile


def _const_spec(shape):
    """Grid-invariant weight/param block: identical tile every step, so request
    a single VMEM buffer (big VMEM saving for real TNT weights on v7x)."""
    ndim = len(shape)
    index_map = lambda i, _nd=ndim: (0,) * _nd
    try:
        return pl.BlockSpec(shape, index_map, pipeline_mode=pl.Buffered(1))
    except Exception:          # older jax without pipeline_mode / Buffered
        return pl.BlockSpec(shape, index_map)


# ----------------------------- in-kernel helpers ------------------------------

def _layernorm(x, g, b, eps=EPS):
    # two-pass variance (review: E[x^2]-mu^2 can cancel catastrophically)
    mu = jnp.mean(x, axis=-1, keepdims=True)
    xc = x - mu
    var = jnp.mean(xc * xc, axis=-1, keepdims=True)
    return xc * jax.lax.rsqrt(var + eps) * g + b


def _gelu(x):
    # erf-based GELU (torch.nn.GELU default) via the A&S 7.1.26 rational
    # approximation; the reciprocal runs on the EUP so the VALU only sees the
    # polynomial / exp feed.
    a1, a2, a3, a4, a5 = 0.254829592, -0.284496736, 1.421413741, -1.453152027, 1.061405429
    p = 0.3275911
    z = x * 0.7071067811865476
    s = jnp.where(z >= 0.0, 1.0, -1.0)
    az = jnp.abs(z)
    t = pl.reciprocal(1.0 + p * az, approx=True)
    poly = ((((a5 * t + a4) * t + a3) * t + a2) * t + a1) * t
    erf = s * (1.0 - poly * jnp.exp(-az * az))
    return 0.5 * x * (1.0 + erf)


def _softmax_lastdim(logits):
    m = jnp.max(logits, axis=-1, keepdims=True)
    e = jnp.exp(logits - m)
    # exact denominator (review: approx reciprocal error can compound across blocks)
    return e / jnp.sum(e, axis=-1, keepdims=True)


def _mha(q, k, v, num_heads):
    """Multi-head attention on (bt, n, c) q/k/v -> (bt, n, c)."""
    bt, n, c = q.shape
    hd = c // num_heads
    scale = float(hd) ** -0.5

    def one_head(qh, kh, vh):
        logits = jnp.einsum('bnd,bmd->bnm', qh, kh,
                            preferred_element_type=jnp.float32) * scale
        probs = _softmax_lastdim(logits)
        return jnp.einsum('bnm,bmd->bnd', probs, vh,
                          preferred_element_type=jnp.float32)

    if num_heads == 1:
        return one_head(q, k, v)

    if c <= _MASK_ATTN_MAX_C:
        # Full-width column masks: contraction width c is at most one MXU
        # k-tile so masking costs no extra MXU passes, and we never slice the
        # lane axis at sub-128 head boundaries (no relayouts, no concatenate).
        lane = jax.lax.broadcasted_iota(jnp.int32, (1, 1, c), 2)
        ctx = None
        for h in range(num_heads):                   # static unroll
            m = (lane >= h * hd) & (lane < (h + 1) * hd)
            part = one_head(jnp.where(m, q, 0.0), k, jnp.where(m, v, 0.0))
            ctx = part if ctx is None else ctx + part
        return ctx

    # Large models (c > 256): true per-head contraction so QK^T / PV contract
    # only hd lanes per head instead of all c (2-3x fewer MXU passes at the
    # realistic TNT outer dims flagged in the review).
    parts = []
    for h in range(num_heads):
        lo, hi = h * hd, (h + 1) * hd
        parts.append(one_head(q[:, :, lo:hi], k[:, :, lo:hi], v[:, :, lo:hi]))
    return jnp.concatenate(parts, axis=-1)


# --------- fused kernel: [proj-add ->] LN1 -> MHA -> +x -> LN2 -> MLP -> +x ----

def _encoder_kernel(*refs, num_heads, has_proj):
    if has_proj:
        (x_ref, xf_ref, pg1_ref, pb1_ref, pw_ref, pg2_ref, pb2_ref,
         n1g_ref, n1b_ref, wqkv_ref, wo_ref, bo_ref,
         n2g_ref, n2b_ref, w1_ref, b1_ref, w2_ref, b2_ref, o_ref) = refs
    else:
        (x_ref, n1g_ref, n1b_ref, wqkv_ref, wo_ref, bo_ref,
         n2g_ref, n2b_ref, w1_ref, b1_ref, w2_ref, b2_ref, o_ref) = refs

    bt, n, c = x_ref.shape
    x = x_ref[...].astype(jnp.float32)                          # (bt, n, c)

    if has_proj:
        # outer[:, 1:] += LN2(LN1(inner_flat) @ W), fused into the same step
        d = xf_ref.shape[-1]
        xf = xf_ref[...].astype(jnp.float32).reshape(bt * (n - 1), d)
        upd = _layernorm(xf, pg1_ref[...], pb1_ref[...])
        upd = jnp.dot(upd, pw_ref[...], preferred_element_type=jnp.float32)
        upd = _layernorm(upd, pg2_ref[...], pb2_ref[...]).reshape(bt, n - 1, c)
        # class-token row 0 untouched; one small sublane splice per step,
        # amortized over the whole fused transformer block.
        x = jnp.concatenate([x[:, :1, :], x[:, 1:, :] + upd], axis=1)

    r = bt * n
    x2 = x.reshape(r, c)

    # ---- attention branch ----------------------------------------------------
    xn = _layernorm(x2, n1g_ref[...], n1b_ref[...])
    # Three dots against leading-axis slices of the (3, C, C) weight: no
    # lane-axis slicing of a (r, 3C) qkv tensor is ever needed.
    q = jnp.dot(xn, wqkv_ref[0], preferred_element_type=jnp.float32).reshape(bt, n, c)
    k = jnp.dot(xn, wqkv_ref[1], preferred_element_type=jnp.float32).reshape(bt, n, c)
    v = jnp.dot(xn, wqkv_ref[2], preferred_element_type=jnp.float32).reshape(bt, n, c)
    ctx = _mha(q, k, v, num_heads).reshape(r, c)
    attn = jnp.dot(ctx, wo_ref[...], preferred_element_type=jnp.float32) + bo_ref[...]
    x1 = x2 + attn                                               # residual 1

    # ---- MLP branch ------------------------------------------------------------
    xn2 = _layernorm(x1, n2g_ref[...], n2b_ref[...])
    h = _gelu(jnp.dot(xn2, w1_ref[...], preferred_element_type=jnp.float32) + b1_ref[...])
    y = jnp.dot(h, w2_ref[...], preferred_element_type=jnp.float32) + b2_ref[...]

    o_ref[...] = (x1 + y).reshape(bt, n, c).astype(o_ref.dtype)  # residual 2


def encoder_block(x, n1g, n1b, wqkv, wo, bo, n2g, n2b, w1, b1, w2, b2,
                  *, num_heads, proj=None):
    """x: (Bt, N, C) -> full pre-norm transformer block in ONE fused kernel.
    If `proj` is given, the TNT word->patch projection-add is fused in too:
    proj = (inner_flat (Bt, N-1, D), g1, b1, W (D, C), g2, b2)."""
    bt_total, n, c = x.shape
    assert c % num_heads == 0
    assert wqkv.shape == (3, c, c)
    hid = w1.shape[1]

    has_proj = proj is not None
    d_proj = int(proj[0].shape[-1]) if has_proj else 0

    vmem_limit = _vmem_limit_bytes()
    bt_tile = _choose_bt_tile(bt_total, n, c, hid, d_proj,
                              io_bytes=x.dtype.itemsize, vmem_limit=vmem_limit)
    grid = (bt_total // bt_tile,)

    in_specs = [pl.BlockSpec((bt_tile, n, c), lambda i: (i, 0, 0))]
    inputs = [x]
    if has_proj:
        inner_flat, pg1, pb1, pw, pg2, pb2 = proj
        in_specs += [
            pl.BlockSpec((bt_tile, n - 1, d_proj), lambda i: (i, 0, 0)),
            _const_spec((1, d_proj)), _const_spec((1, d_proj)),
            _const_spec((d_proj, c)),
            _const_spec((1, c)), _const_spec((1, c)),
        ]
        inputs += [inner_flat, pg1, pb1, pw, pg2, pb2]
    in_specs += [
        _const_spec((1, c)), _const_spec((1, c)),              # norm1
        _const_spec((3, c, c)),                                # fused q/k/v weight
        _const_spec((c, c)), _const_spec((1, c)),              # attn out proj
        _const_spec((1, c)), _const_spec((1, c)),              # norm2
        _const_spec((c, hid)), _const_spec((1, hid)),          # mlp fc1
        _const_spec((hid, c)), _const_spec((1, c)),            # mlp fc2
    ]
    inputs += [n1g, n1b, wqkv, wo, bo, n2g, n2b, w1, b1, w2, b2]

    kernel = functools.partial(_encoder_kernel, num_heads=num_heads,
                               has_proj=has_proj)
    return pl.pallas_call(
        kernel,
        out_shape=jax.ShapeDtypeStruct((bt_total, n, c), x.dtype),
        grid=grid,
        in_specs=in_specs,
        out_specs=pl.BlockSpec((bt_tile, n, c), lambda i: (i, 0, 0)),
        compiler_params=pltpu.CompilerParams(
            dimension_semantics=("parallel",),
            vmem_limit_bytes=vmem_limit),
    )(*inputs)


# ------------------------------- Block.forward ---------------------------------

def tnt_block_forward(inner_tokens, outer_tokens, p, *, inner_num_heads,
                      outer_num_heads):
    # inner transformer on word tokens (LN1 -> MHA -> +x -> LN2 -> MLP -> +x)
    inner = encoder_block(
        inner_tokens,
        p['in_n1_g'], p['in_n1_b'], p['in_attn_wqkv'], p['in_attn_wp'],
        p['in_attn_bp'], p['in_n2_g'], p['in_n2_b'],
        p['in_mlp_w1'], p['in_mlp_b1'], p['in_mlp_w2'], p['in_mlp_b2'],
        num_heads=inner_num_heads)

    # outer transformer with the word->patch projection fused into the same
    # kernel; the class token (row 0) is untouched by the projection-add.
    B, N, Co = outer_tokens.shape
    Bi, W, Ci = inner.shape
    inner_flat = inner.reshape(B, N - 1, W * Ci)     # free row-major view
    outer = encoder_block(
        outer_tokens,
        p['out_n1_g'], p['out_n1_b'], p['out_attn_wqkv'], p['out_attn_wp'],
        p['out_attn_bp'], p['out_n2_g'], p['out_n2_b'],
        p['out_mlp_w1'], p['out_mlp_b1'], p['out_mlp_w2'], p['out_mlp_b2'],
        num_heads=outer_num_heads,
        proj=(inner_flat, p['proj_n1_g'], p['proj_n1_b'], p['proj_w'],
              p['proj_n2_g'], p['proj_n2_b']))
    return inner, outer


# ------------------------------- parameter init --------------------------------

def init_params(key, inner_dim, outer_dim, num_words, mlp_ratio):
    ks = iter(jax.random.split(key, 9))
    ones = lambda d: jnp.ones((1, d), jnp.float32)
    zeros = lambda d: jnp.zeros((1, d), jnp.float32)
    lin = lambda k, *s: 0.02 * jax.random.normal(k, s, jnp.float32)
    D = num_words * inner_dim
    Hin, Hout = int(inner_dim * mlp_ratio), int(outer_dim * mlp_ratio)
    return {
        # inner attention (qkv_bias=False); stacked [q, k, v] weight (3, C, C)
        'in_n1_g': ones(inner_dim), 'in_n1_b': zeros(inner_dim),
        'in_attn_wqkv': lin(next(ks), 3, inner_dim, inner_dim),
        'in_attn_wp': lin(next(ks), inner_dim, inner_dim),
        'in_attn_bp': zeros(inner_dim),
        # inner MLP
        'in_n2_g': ones(inner_dim), 'in_n2_b': zeros(inner_dim),
        'in_mlp_w1': lin(next(ks), inner_dim, Hin), 'in_mlp_b1': zeros(Hin),
        'in_mlp_w2': lin(next(ks), Hin, inner_dim), 'in_mlp_b2': zeros(inner_dim),
        # word -> patch projection (bias=False)
        'proj_n1_g': ones(D), 'proj_n1_b': zeros(D),
        'proj_w': lin(next(ks), D, outer_dim),
        'proj_n2_g': ones(outer_dim), 'proj_n2_b': zeros(outer_dim),
        # outer attention
        'out_n1_g': ones(outer_dim), 'out_n1_b': zeros(outer_dim),
        'out_attn_wqkv': lin(next(ks), 3, outer_dim, outer_dim),
        'out_attn_wp': lin(next(ks), outer_dim, outer_dim),
        'out_attn_bp': zeros(outer_dim),
        # outer MLP
        'out_n2_g': ones(outer_dim), 'out_n2_b': zeros(outer_dim),
        'out_mlp_w1': lin(next(ks), outer_dim, Hout), 'out_mlp_b1': zeros(Hout),
        'out_mlp_w2': lin(next(ks), Hout, outer_dim), 'out_mlp_b2': zeros(outer_dim),
    }


# ----------------------------- pure-JAX reference ------------------------------

def _ref_layernorm(x, g, b):
    mu = jnp.mean(x, axis=-1, keepdims=True)
    var = jnp.mean(jnp.square(x - mu), axis=-1, keepdims=True)
    return (x - mu) / jnp.sqrt(var + EPS) * g + b


def _ref_attention(x, wqkv, wp, bp, num_heads):
    Bt, N, C = x.shape
    hd = C // num_heads
    q = (x @ wqkv[0]).reshape(Bt, N, num_heads, hd).transpose(0, 2, 1, 3)
    k = (x @ wqkv[1]).reshape(Bt, N, num_heads, hd).transpose(0, 2, 1, 3)
    v = (x @ wqkv[2]).reshape(Bt, N, num_heads, hd).transpose(0, 2, 1, 3)
    attn = jax.nn.softmax((q @ k.transpose(0, 1, 3, 2)) * (hd ** -0.5), axis=-1)
    ctx = (attn @ v).transpose(0, 2, 1, 3).reshape(Bt, N, C)
    return ctx @ wp + bp


def _ref_mlp(x, w1, b1, w2, b2):
    h = x @ w1 + b1
    h = 0.5 * h * (1.0 + jax.lax.erf(h * 0.7071067811865476))
    return h @ w2 + b2


def _ref_encoder(x, p, prefix, num_heads):
    g = lambda name: p[prefix + name]
    x = x + _ref_attention(_ref_layernorm(x, g('n1_g'), g('n1_b')),
                           g('attn_wqkv'), g('attn_wp'), g('attn_bp'), num_heads)
    x = x + _ref_mlp(_ref_layernorm(x, g('n2_g'), g('n2_b')),
                     g('mlp_w1'), g('mlp_b1'), g('mlp_w2'), g('mlp_b2'))
    return x


def _reference_forward(inner_tokens, outer_tokens, p, *, inner_num_heads,
                       outer_num_heads):
    inner = _ref_encoder(inner_tokens, p, 'in_', inner_num_heads)
    B, N, Co = outer_tokens.shape
    Bi, W, Ci = inner.shape
    inner_flat = inner.reshape(B, N - 1, W * Ci)
    upd = _ref_layernorm(inner_flat, p['proj_n1_g'], p['proj_n1_b']) @ p['proj_w']
    upd = _ref_layernorm(upd, p['proj_n2_g'], p['proj_n2_b'])
    outer = outer_tokens.at[:, 1:].add(upd)
    outer = _ref_encoder(outer, p, 'out_', outer_num_heads)
    return inner, outer


# ------------------------------------ main --------------------------------------

if __name__ == "__main__":
    B, num_patches, num_words = 2, 4, 8
    N = num_patches + 1                      # outer tokens incl. class token
    inner_dim, outer_dim = 32, 64
    inner_heads, outer_heads = 2, 4
    mlp_ratio = 4

    key = jax.random.PRNGKey(0)
    k_in, k_out, k_p = jax.random.split(key, 3)
    inner_tokens = jax.random.normal(
        k_in, (B * num_patches, num_words, inner_dim), jnp.float32)
    outer_tokens = jax.random.normal(k_out, (B, N, outer_dim), jnp.float32)
    params = init_params(k_p, inner_dim, outer_dim, num_words, mlp_ratio)

    fwd = jax.jit(functools.partial(tnt_block_forward,
                                    inner_num_heads=inner_heads,
                                    outer_num_heads=outer_heads))
    inner_out, outer_out = fwd(inner_tokens, outer_tokens, params)
    jax.block_until_ready((inner_out, outer_out))

    assert inner_out.shape == inner_tokens.shape
    assert outer_out.shape == outer_tokens.shape
    assert bool(jnp.all(jnp.isfinite(inner_out)))
    assert bool(jnp.all(jnp.isfinite(outer_out)))

    # numeric check against a pure-JAX reference (exact softmax denom / two-pass
    # LN keep the only approximation the GELU erf polynomial, ~1e-4 level)
    ref_inner, ref_outer = _reference_forward(
        inner_tokens, outer_tokens, params,
        inner_num_heads=inner_heads, outer_num_heads=outer_heads)
    err_i = float(jnp.max(jnp.abs(inner_out - ref_inner)))
    err_o = float(jnp.max(jnp.abs(outer_out - ref_outer)))
    assert err_i < 2e-2 and err_o < 2e-2, (err_i, err_o)

    print("KERNEL_OK")
</pallas_src>

<mosaic_0001>
module attributes {stable_mosaic.version = 11 : i64} {
  func.func @_encoder_kernel(%arg0: i32, %arg1: memref<4x8x32xf32, #tpu.memory_space<vmem>>, %arg2: memref<1x32xf32, #tpu.memory_space<vmem>>, %arg3: memref<1x32xf32, #tpu.memory_space<vmem>>, %arg4: memref<3x32x32xf32, #tpu.memory_space<vmem>>, %arg5: memref<32x32xf32, #tpu.memory_space<vmem>>, %arg6: memref<1x32xf32, #tpu.memory_space<vmem>>, %arg7: memref<1x32xf32, #tpu.memory_space<vmem>>, %arg8: memref<1x32xf32, #tpu.memory_space<vmem>>, %arg9: memref<32x128xf32, #tpu.memory_space<vmem>>, %arg10: memref<1x128xf32, #tpu.memory_space<vmem>>, %arg11: memref<128x32xf32, #tpu.memory_space<vmem>>, %arg12: memref<1x32xf32, #tpu.memory_space<vmem>>, %arg13: memref<4x8x32xf32, #tpu.memory_space<vmem>>) attributes {dimension_semantics = [#tpu.dimension_semantics<parallel>], iteration_bounds = array<i64: 2>, scalar_prefetch = 0 : i64, scratch_operands = 0 : i64, tpu.core_type = #tpu.core_type<tc>, window_params = [{transform_indices = @transform_0, window_bounds = array<i64: 4, 8, 32>}, {pipeline_mode = #tpu.pipeline_mode<synchronous>, transform_indices = @transform_1, window_bounds = array<i64: 1, 32>}, {pipeline_mode = #tpu.pipeline_mode<synchronous>, transform_indices = @transform_2, window_bounds = array<i64: 1, 32>}, {pipeline_mode = #tpu.pipeline_mode<synchronous>, transform_indices = @transform_3, window_bounds = array<i64: 3, 32, 32>}, {pipeline_mode = #tpu.pipeline_mode<synchronous>, transform_indices = @transform_4, window_bounds = array<i64: 32, 32>}, {pipeline_mode = #tpu.pipeline_mode<synchronous>, transform_indices = @transform_5, window_bounds = array<i64: 1, 32>}, {pipeline_mode = #tpu.pipeline_mode<synchronous>, transform_indices = @transform_6, window_bounds = array<i64: 1, 32>}, {pipeline_mode = #tpu.pipeline_mode<synchronous>, transform_indices = @transform_7, window_bounds = array<i64: 1, 32>}, {pipeline_mode = #tpu.pipeline_mode<synchronous>, transform_indices = @transform_8, window_bounds = array<i64: 32, 128>}, {pipeline_mode = #tpu.pipeline_mode<synchronous>, transform_indices = @transform_9, window_bounds = array<i64: 1, 128>}, {pipeline_mode = #tpu.pipeline_mode<synchronous>, transform_indices = @transform_10, window_bounds = array<i64: 128, 32>}, {pipeline_mode = #tpu.pipeline_mode<synchronous>, transform_indices = @transform_11, window_bounds = array<i64: 1, 32>}, {transform_indices = @transform_12, window_bounds = array<i64: 4, 8, 32>}]} {
    %c0 = arith.constant 0 : index
    %c0_0 = arith.constant 0 : index
    %c0_1 = arith.constant 0 : index
    %0 = vector.load %arg1[%c0, %c0_0, %c0_1] : memref<4x8x32xf32, #tpu.memory_space<vmem>>, vector<4x8x32xf32>
    %1 = vector.shape_cast %0 : vector<4x8x32xf32> to vector<32x32xf32>
    %c0_2 = arith.constant 0 : index
    %c0_3 = arith.constant 0 : index
    %2 = vector.load %arg2[%c0_2, %c0_3] : memref<1x32xf32, #tpu.memory_space<vmem>>, vector<1x32xf32>
    %c0_4 = arith.constant 0 : index
    %c0_5 = arith.constant 0 : index
    %3 = vector.load %arg3[%c0_4, %c0_5] : memref<1x32xf32, #tpu.memory_space<vmem>>, vector<1x32xf32>
    %cst = arith.constant dense<0.000000e+00> : vector<32xf32>
    %4 = vector.multi_reduction <add>, %1, %cst [1] : vector<32x32xf32> to vector<32xf32>
    %5 = vector.shape_cast %4 : vector<32xf32> to vector<32x1xf32>
    %cst_6 = arith.constant 3.200000e+01 : f32
    %6 = vector.broadcast %cst_6 : f32 to vector<32x1xf32>
    %7 = arith.divf %5, %6 : vector<32x1xf32>
    %8 = vector.broadcast %7 : vector<32x1xf32> to vector<32x32xf32>
    %9 = arith.subf %1, %8 : vector<32x32xf32>
    %10 = arith.mulf %9, %9 : vector<32x32xf32>
    %cst_7 = arith.constant dense<0.000000e+00> : vector<32xf32>
    %11 = vector.multi_reduction <add>, %10, %cst_7 [1] : vector<32x32xf32> to vector<32xf32>
    %12 = vector.shape_cast %11 : vector<32xf32> to vector<32x1xf32>
    %cst_8 = arith.constant 3.200000e+01 : f32
    %13 = vector.broadcast %cst_8 : f32 to vector<32x1xf32>
    %14 = arith.divf %12, %13 : vector<32x1xf32>
    %cst_9 = arith.constant 9.99999997E-7 : f32
    %15 = vector.broadcast %cst_9 : f32 to vector<32x1xf32>
    %16 = arith.addf %14, %15 : vector<32x1xf32>
    %17 = math.rsqrt %16 : vector<32x1xf32>
    %18 = vector.broadcast %17 : vector<32x1xf32> to vector<32x32xf32>
    %19 = arith.mulf %9, %18 : vector<32x32xf32>
    %20 = vector.broadcast %2 : vector<1x32xf32> to vector<32x32xf32>
    %21 = arith.mulf %19, %20 : vector<32x32xf32>
    %22 = vector.broadcast %3 : vector<1x32xf32> to vector<32x32xf32>
    %23 = arith.addf %21, %22 : vector<32x32xf32>
    %c0_10 = arith.constant 0 : index
    %c0_11 = arith.constant 0 : index
    %c0_12 = arith.constant 0 : index
    %24 = vector.load %arg4[%c0_10, %c0_11, %c0_12] : memref<3x32x32xf32, #tpu.memory_space<vmem>>, vector<1x32x32xf32>
    %25 = vector.shape_cast %24 : vector<1x32x32xf32> to vector<32x32xf32>
    %cst_13 = arith.constant dense<0.000000e+00> : vector<32x32xf32>
    %26 = tpu.matmul %23, %25, %cst_13 {dimension_numbers = #tpu.dot_dimension_numbers<[1], [0], [0], [1], [0, 0, 1, 1], [], []>} : vector<32x32xf32>, vector<32x32xf32>, vector<32x32xf32> -> vector<32x32xf32>
    %27 = vector.shape_cast %26 : vector<32x32xf32> to vector<4x8x32xf32>
    %c1 = arith.constant 1 : index
    %c0_14 = arith.constant 0 : index
    %c0_15 = arith.constant 0 : index
    %28 = vector.load %arg4[%c1, %c0_14, %c0_15] : memref<3x32x32xf32, #tpu.memory_space<vmem>>, vector<1x32x32xf32>
    %29 = vector.shape_cast %28 : vector<1x32x32xf32> to vector<32x32xf32>
    %cst_16 = arith.constant dense<0.000000e+00> : vector<32x32xf32>
    %30 = tpu.matmul %23, %29, %cst_16 {dimension_numbers = #tpu.dot_dimension_numbers<[1], [0], [0], [1], [0, 0, 1, 1], [], []>} : vector<32x32xf32>, vector<32x32xf32>, vector<32x32xf32> -> vector<32x32xf32>
    %31 = vector.shape_cast %30 : vector<32x32xf32> to vector<4x8x32xf32>
    %c2 = arith.constant 2 : index
    %c0_17 = arith.constant 0 : index
    %c0_18 = arith.constant 0 : index
    %32 = vector.load %arg4[%c2, %c0_17, %c0_18] : memref<3x32x32xf32, #tpu.memory_space<vmem>>, vector<1x32x32xf32>
    %33 = vector.shape_cast %32 : vector<1x32x32xf32> to vector<32x32xf32>
    %cst_19 = arith.constant dense<0.000000e+00> : vector<32x32xf32>
    %34 = tpu.matmul %23, %33, %cst_19 {dimension_numbers = #tpu.dot_dimension_numbers<[1], [0], [0], [1], [0, 0, 1, 1], [], []>} : vector<32x32xf32>, vector<32x32xf32>, vector<32x32xf32> -> vector<32x32xf32>
    %35 = vector.shape_cast %34 : vector<32x32xf32> to vector<4x8x32xf32>
    %36 = tpu.iota {dimensions = array<i32: 2>} : vector<1x1x32xi32>
    %c0_i32 = arith.constant 0 : i32
    %37 = vector.broadcast %c0_i32 : i32 to vector<1x1x32xi32>
    %38 = arith.cmpi sge, %36, %37 : vector<1x1x32xi32>
    %c16_i32 = arith.constant 16 : i32
    %39 = vector.broadcast %c16_i32 : i32 to vector<1x1x32xi32>
    %40 = arith.cmpi slt, %36, %39 : vector<1x1x32xi32>
    %41 = arith.andi %38, %40 : vector<1x1x32xi1>
    %cst_20 = arith.constant 0.000000e+00 : f32
    %42 = vector.shape_cast %41 : vector<1x1x32xi1> to vector<1x1x32xi1>
    %43 = vector.broadcast %42 : vector<1x1x32xi1> to vector<4x8x32xi1>
    %44 = vector.broadcast %cst_20 : f32 to vector<4x8x32xf32>
    %45 = arith.select %43, %27, %44 : vector<4x8x32xi1>, vector<4x8x32xf32>
    %cst_21 = arith.constant 0.000000e+00 : f32
    %46 = vector.shape_cast %41 : vector<1x1x32xi1> to vector<1x1x32xi1>
    %47 = vector.broadcast %46 : vector<1x1x32xi1> to vector<4x8x32xi1>
    %48 = vector.broadcast %cst_21 : f32 to vector<4x8x32xf32>
    %49 = arith.select %47, %35, %48 : vector<4x8x32xi1>, vector<4x8x32xf32>
    "tpu.trace_start"() <{level = 10 : i32, message = "bnd,bmd->bnm"}> : () -> ()
    %cst_22 = arith.constant dense<0.000000e+00> : vector<4x8x8xf32>
    %50 = tpu.matmul %45, %31, %cst_22 {dimension_numbers = #tpu.dot_dimension_numbers<[2], [2], [1], [1], [0, 0, 0, 1, 1, 1], [0], [0]>} : vector<4x8x32xf32>, vector<4x8x32xf32>, vector<4x8x8xf32> -> vector<4x8x8xf32>
    "tpu.trace_stop"() : () -> ()
    %cst_23 = arith.constant 2.500000e-01 : f32
    %51 = vector.broadcast %cst_23 : f32 to vector<4x8x8xf32>
    %52 = arith.mulf %50, %51 : vector<4x8x8xf32>
    %cst_24 = arith.constant dense<0xFF800000> : vector<4x8xf32>
    %53 = vector.multi_reduction <maximumf>, %52, %cst_24 [2] : vector<4x8x8xf32> to vector<4x8xf32>
    %54 = vector.shape_cast %53 : vector<4x8xf32> to vector<4x8x1xf32>
    %55 = vector.broadcast %54 : vector<4x8x1xf32> to vector<4x8x8xf32>
    %56 = arith.subf %52, %55 : vector<4x8x8xf32>
    %57 = math.exp %56 : vector<4x8x8xf32>
    %cst_25 = arith.constant dense<0.000000e+00> : vector<4x8xf32>
    %58 = vector.multi_reduction <add>, %57, %cst_25 [2] : vector<4x8x8xf32> to vector<4x8xf32>
    %59 = vector.shape_cast %58 : vector<4x8xf32> to vector<4x8x1xf32>
    %60 = vector.broadcast %59 : vector<4x8x1xf32> to vector<4x8x8xf32>
    %61 = arith.divf %57, %60 : vector<4x8x8xf32>
    "tpu.trace_start"() <{level = 10 : i32, message = "bnm,bmd->bnd"}> : () -> ()
    %cst_26 = arith.constant dense<0.000000e+00> : vector<4x8x32xf32>
    %62 = tpu.matmul %61, %49, %cst_26 {dimension_numbers = #tpu.dot_dimension_numbers<[2], [1], [1], [2], [0, 0, 0, 1, 1, 2], [0], [0]>} : vector<4x8x8xf32>, vector<4x8x32xf32>, vector<4x8x32xf32> -> vector<4x8x32xf32>
    %c16_i32_27 = arith.constant 16 : i32
    "tpu.trace_stop"() : () -> ()
    %63 = vector.broadcast %c16_i32_27 : i32 to vector<1x1x32xi32>
    %64 = arith.cmpi sge, %36, %63 : vector<1x1x32xi32>
    %c32_i32 = arith.constant 32 : i32
    %65 = vector.broadcast %c32_i32 : i32 to vector<1x1x32xi32>
    %66 = arith.cmpi slt, %36, %65 : vector<1x1x32xi32>
    %67 = arith.andi %64, %66 : vector<1x1x32xi1>
    %cst_28 = arith.constant 0.000000e+00 : f32
    %68 = vector.shape_cast %67 : vector<1x1x32xi1> to vector<1x1x32xi1>
    %69 = vector.broadcast %68 : vector<1x1x32xi1> to vector<4x8x32xi1>
    %70 = vector.broadcast %cst_28 : f32 to vector<4x8x32xf32>
    %71 = arith.select %69, %27, %70 : vector<4x8x32xi1>, vector<4x8x32xf32>
    %cst_29 = arith.constant 0.000000e+00 : f32
    %72 = vector.shape_cast %67 : vector<1x1x32xi1> to vector<1x1x32xi1>
    %73 = vector.broadcast %72 : vector<1x1x32xi1> to vector<4x8x32xi1>
    %74 = vector.broadcast %cst_29 : f32 to vector<4x8x32xf32>
    %75 = arith.select %73, %35, %74 : vector<4x8x32xi1>, vector<4x8x32xf32>
    "tpu.trace_start"() <{level = 10 : i32, message = "bnd,bmd->bnm"}> : () -> ()
    %cst_30 = arith.constant dense<0.000000e+00> : vector<4x8x8xf32>
    %76 = tpu.matmul %71, %31, %cst_30 {dimension_numbers = #tpu.dot_dimension_numbers<[2], [2], [1], [1], [0, 0, 0, 1, 1, 1], [0], [0]>} : vector<4x8x32xf32>, vector<4x8x32xf32>, vector<4x8x8xf32> -> vector<4x8x8xf32>
    "tpu.trace_stop"() : () -> ()
    %cst_31 = arith.constant 2.500000e-01 : f32
    %77 = vector.broadcast %cst_31 : f32 to vector<4x8x8xf32>
    %78 = arith.mulf %76, %77 : vector<4x8x8xf32>
    %cst_32 = arith.constant dense<0xFF800000> : vector<4x8xf32>
    %79 = vector.multi_reduction <maximumf>, %78, %cst_32 [2] : vector<4x8x8xf32> to vector<4x8xf32>
    %80 = vector.shape_cast %79 : vector<4x8xf32> to vector<4x8x1xf32>
    %81 = vector.broadcast %80 : vector<4x8x1xf32> to vector<4x8x8xf32>
    %82 = arith.subf %78, %81 : vector<4x8x8xf32>
    %83 = math.exp %82 : vector<4x8x8xf32>
    %cst_33 = arith.constant dense<0.000000e+00> : vector<4x8xf32>
    %84 = vector.multi_reduction <add>, %83, %cst_33 [2] : vector<4x8x8xf32> to vector<4x8xf32>
    %85 = vector.shape_cast %84 : vector<4x8xf32> to vector<4x8x1xf32>
    %86 = vector.broadcast %85 : vector<4x8x1xf32> to vector<4x8x8xf32>
    %87 = arith.divf %83, %86 : vector<4x8x8xf32>
    "tpu.trace_start"() <{level = 10 : i32, message = "bnm,bmd->bnd"}> : () -> ()
    %cst_34 = arith.constant dense<0.000000e+00> : vector<4x8x32xf32>
    %88 = tpu.matmul %87, %75, %cst_34 {dimension_numbers = #tpu.dot_dimension_numbers<[2], [1], [1], [2], [0, 0, 0, 1, 1, 2], [0], [0]>} : vector<4x8x8xf32>, vector<4x8x32xf32>, vector<4x8x32xf32> -> vector<4x8x32xf32>
    "tpu.trace_stop"() : () -> ()
    %89 = arith.addf %62, %88 : vector<4x8x32xf32>
    %90 = vector.shape_cast %89 : vector<4x8x32xf32> to vector<32x32xf32>
    %c0_35 = arith.constant 0 : index
    %c0_36 = arith.constant 0 : index
    %91 = vector.load %arg5[%c0_35, %c0_36] : memref<32x32xf32, #tpu.memory_space<vmem>>, vector<32x32xf32>
    %cst_37 = arith.constant dense<0.000000e+00> : vector<32x32xf32>
    %92 = tpu.matmul %90, %91, %cst_37 {dimension_numbers = #tpu.dot_dimension_numbers<[1], [0], [0], [1], [0, 0, 1, 1], [], []>} : vector<32x32xf32>, vector<32x32xf32>, vector<32x32xf32> -> vector<32x32xf32>
    %c0_38 = arith.constant 0 : index
    %c0_39 = arith.constant 0 : index
    %93 = vector.load %arg6[%c0_38, %c0_39] : memref<1x32xf32, #tpu.memory_space<vmem>>, vector<1x32xf32>
    %94 = vector.broadcast %93 : vector<1x32xf32> to vector<32x32xf32>
    %95 = arith.addf %92, %94 : vector<32x32xf32>
    %96 = arith.addf %1, %95 : vector<32x32xf32>
    %c0_40 = arith.constant 0 : index
    %c0_41 = arith.constant 0 : index
    %97 = vector.load %arg7[%c0_40, %c0_41] : memref<1x32xf32, #tpu.memory_space<vmem>>, vector<1x32xf32>
    %c0_42 = arith.constant 0 : index
    %c0_43 = arith.constant 0 : index
    %98 = vector.load %arg8[%c0_42, %c0_43] : memref<1x32xf32, #tpu.memory_space<vmem>>, vector<1x32xf32>
    %cst_44 = arith.constant dense<0.000000e+00> : vector<32xf32>
    %99 = vector.multi_reduction <add>, %96, %cst_44 [1] : vector<32x32xf32> to vector<32xf32>
    %100 = vector.shape_cast %99 : vector<32xf32> to vector<32x1xf32>
    %cst_45 = arith.constant 3.200000e+01 : f32
    %101 = vector.broadcast %cst_45 : f32 to vector<32x1xf32>
    %102 = arith.divf %100, %101 : vector<32x1xf32>
    %103 = vector.broadcast %102 : vector<32x1xf32> to vector<32x32xf32>
    %104 = arith.subf %96, %103 : vector<32x32xf32>
    %105 = arith.mulf %104, %104 : vector<32x32xf32>
    %cst_46 = arith.constant dense<0.000000e+00> : vector<32xf32>
    %106 = vector.multi_reduction <add>, %105, %cst_46 [1] : vector<32x32xf32> to vector<32xf32>
    %107 = vector.shape_cast %106 : vector<32xf32> to vector<32x1xf32>
    %cst_47 = arith.constant 3.200000e+01 : f32
    %108 = vector.broadcast %cst_47 : f32 to vector<32x1xf32>
    %109 = arith.divf %107, %108 : vector<32x1xf32>
    %cst_48 = arith.constant 9.99999997E-7 : f32
    %110 = vector.broadcast %cst_48 : f32 to vector<32x1xf32>
    %111 = arith.addf %109, %110 : vector<32x1xf32>
    %112 = math.rsqrt %111 : vector<32x1xf32>
    %113 = vector.broadcast %112 : vector<32x1xf32> to vector<32x32xf32>
    %114 = arith.mulf %104, %113 : vector<32x32xf32>
    %115 = vector.broadcast %97 : vector<1x32xf32> to vector<32x32xf32>
    %116 = arith.mulf %114, %115 : vector<32x32xf32>
    %117 = vector.broadcast %98 : vector<1x32xf32> to vector<32x32xf32>
    %118 = arith.addf %116, %117 : vector<32x32xf32>
    %c0_49 = arith.constant 0 : index
    %c0_50 = arith.constant 0 : index
    %119 = vector.load %arg9[%c0_49, %c0_50] : memref<32x128xf32, #tpu.memory_space<vmem>>, vector<32x128xf32>
    %cst_51 = arith.constant dense<0.000000e+00> : vector<32x128xf32>
    %120 = tpu.matmul %118, %119, %cst_51 {dimension_numbers = #tpu.dot_dimension_numbers<[1], [0], [0], [1], [0, 0, 1, 1], [], []>} : vector<32x32xf32>, vector<32x128xf32>, vector<32x128xf32> -> vector<32x128xf32>
    %c0_52 = arith.constant 0 : index
    %c0_53 = arith.constant 0 : index
    %121 = vector.load %arg10[%c0_52, %c0_53] : memref<1x128xf32, #tpu.memory_space<vmem>>, vector<1x128xf32>
    %122 = vector.broadcast %121 : vector<1x128xf32> to vector<32x128xf32>
    %123 = arith.addf %120, %122 : vector<32x128xf32>
    %cst_54 = arith.constant 0.707106769 : f32
    %124 = vector.broadcast %cst_54 : f32 to vector<32x128xf32>
    %125 = arith.mulf %123, %124 : vector<32x128xf32>
    %cst_55 = arith.constant 0.000000e+00 : f32
    %126 = vector.broadcast %cst_55 : f32 to vector<32x128xf32>
    %127 = arith.cmpf oge, %125, %126 : vector<32x128xf32>
    %cst_56 = arith.constant 1.000000e+00 : f32
    %cst_57 = arith.constant -1.000000e+00 : f32
    %128 = vector.broadcast %cst_56 : f32 to vector<32x128xf32>
    %129 = vector.broadcast %cst_57 : f32 to vector<32x128xf32>
    %130 = arith.select %127, %128, %129 : vector<32x128xi1>, vector<32x128xf32>
    %131 = math.absf %125 : vector<32x128xf32>
    %cst_58 = arith.constant 0.327591091 : f32
    %132 = vector.broadcast %cst_58 : f32 to vector<32x128xf32>
    %133 = arith.mulf %132, %131 : vector<32x128xf32>
    %cst_59 = arith.constant 1.000000e+00 : f32
    %134 = vector.broadcast %cst_59 : f32 to vector<32x128xf32>
    %135 = arith.addf %134, %133 : vector<32x128xf32>
    %136 = tpu.reciprocal %135 {approx = true} : vector<32x128xf32> -> vector<32x128xf32>
    %cst_60 = arith.constant 1.06140542 : f32
    %137 = vector.broadcast %cst_60 : f32 to vector<32x128xf32>
    %138 = arith.mulf %137, %136 : vector<32x128xf32>
    %cst_61 = arith.constant -1.45315206 : f32
    %139 = vector.broadcast %cst_61 : f32 to vector<32x128xf32>
    %140 = arith.addf %138, %139 : vector<32x128xf32>
    %141 = arith.mulf %140, %136 : vector<32x128xf32>
    %cst_62 = arith.constant 1.42141378 : f32
    %142 = vector.broadcast %cst_62 : f32 to vector<32x128xf32>
    %143 = arith.addf %141, %142 : vector<32x128xf32>
    %144 = arith.mulf %143, %136 : vector<32x128xf32>
    %cst_63 = arith.constant -0.284496725 : f32
    %145 = vector.broadcast %cst_63 : f32 to vector<32x128xf32>
    %146 = arith.addf %144, %145 : vector<32x128xf32>
    %147 = arith.mulf %146, %136 : vector<32x128xf32>
    %cst_64 = arith.constant 0.254829586 : f32
    %148 = vector.broadcast %cst_64 : f32 to vector<32x128xf32>
    %149 = arith.addf %147, %148 : vector<32x128xf32>
    %150 = arith.mulf %149, %136 : vector<32x128xf32>
    %cst_65 = arith.constant 0.000000e+00 : f32
    %151 = vector.broadcast %cst_65 : f32 to vector<32x128xf32>
    %152 = arith.subf %151, %131 : vector<32x128xf32>
    %153 = arith.mulf %152, %131 : vector<32x128xf32>
    %154 = math.exp %153 : vector<32x128xf32>
    %155 = arith.mulf %150, %154 : vector<32x128xf32>
    %cst_66 = arith.constant 1.000000e+00 : f32
    %156 = vector.broadcast %cst_66 : f32 to vector<32x128xf32>
    %157 = arith.subf %156, %155 : vector<32x128xf32>
    %158 = arith.mulf %130, %157 : vector<32x128xf32>
    %cst_67 = arith.constant 5.000000e-01 : f32
    %159 = vector.broadcast %cst_67 : f32 to vector<32x128xf32>
    %160 = arith.mulf %159, %123 : vector<32x128xf32>
    %cst_68 = arith.constant 1.000000e+00 : f32
    %161 = vector.broadcast %cst_68 : f32 to vector<32x128xf32>
    %162 = arith.addf %161, %158 : vector<32x128xf32>
    %163 = arith.mulf %160, %162 : vector<32x128xf32>
    %c0_69 = arith.constant 0 : index
    %c0_70 = arith.constant 0 : index
    %164 = vector.load %arg11[%c0_69, %c0_70] : memref<128x32xf32, #tpu.memory_space<vmem>>, vector<128x32xf32>
    %cst_71 = arith.constant dense<0.000000e+00> : vector<32x32xf32>
    %165 = tpu.matmul %163, %164, %cst_71 {dimension_numbers = #tpu.dot_dimension_numbers<[1], [0], [0], [1], [0, 0, 1, 1], [], []>} : vector<32x128xf32>, vector<128x32xf32>, vector<32x32xf32> -> vector<32x32xf32>
    %c0_72 = arith.constant 0 : index
    %c0_73 = arith.constant 0 : index
    %166 = vector.load %arg12[%c0_72, %c0_73] : memref<1x32xf32, #tpu.memory_space<vmem>>, vector<1x32xf32>
    %167 = vector.broadcast %166 : vector<1x32xf32> to vector<32x32xf32>
    %168 = arith.addf %165, %167 : vector<32x32xf32>
    %169 = arith.addf %96, %168 : vector<32x32xf32>
    %170 = vector.shape_cast %169 : vector<32x32xf32> to vector<4x8x32xf32>
    %c0_74 = arith.constant 0 : index
    %c0_75 = arith.constant 0 : index
    %c0_76 = arith.constant 0 : index
    %171 = vector.load %arg13[%c0_74, %c0_75, %c0_76] : memref<4x8x32xf32, #tpu.memory_space<vmem>>, vector<4x8x32xf32>
    tpu.vector_store %arg13[%c0_74, %c0_75, %c0_76], %170 {strides = array<i32>} : memref<4x8x32xf32, #tpu.memory_space<vmem>>, vector<4x8x32xf32>,
    return
  }
  func.func @transform_0(%arg0: i32) -> (i32, i32, i32) {
    %c0_i32 = arith.constant 0 : i32
    %c0_i32_0 = arith.constant 0 : i32
    %c0_i32_1 = arith.constant 0 : i32
    return %arg0, %c0_i32, %c0_i32_0 : i32, i32, i32
  }
  func.func @transform_1(%arg0: i32) -> (i32, i32) {
    %c0_i32 = arith.constant 0 : i32
    %c0_i32_0 = arith.constant 0 : i32
    %c0_i32_1 = arith.constant 0 : i32
    return %c0_i32, %c0_i32_0 : i32, i32
  }
  func.func @transform_2(%arg0: i32) -> (i32, i32) {
    %c0_i32 = arith.constant 0 : i32
    %c0_i32_0 = arith.constant 0 : i32
    %c0_i32_1 = arith.constant 0 : i32
    return %c0_i32, %c0_i32_0 : i32, i32
  }
  func.func @transform_3(%arg0: i32) -> (i32, i32, i32) {
    %c0_i32 = arith.constant 0 : i32
    %c0_i32_0 = arith.constant 0 : i32
    %c0_i32_1 = arith.constant 0 : i32
    %c0_i32_2 = arith.constant 0 : i32
    return %c0_i32, %c0_i32_0, %c0_i32_1 : i32, i32, i32
  }
  func.func @transform_4(%arg0: i32) -> (i32, i32) {
    %c0_i32 = arith.constant 0 : i32
    %c0_i32_0 = arith.constant 0 : i32
    %c0_i32_1 = arith.constant 0 : i32
    return %c0_i32, %c0_i32_0 : i32, i32
  }
  func.func @transform_5(%arg0: i32) -> (i32, i32) {
    %c0_i32 = arith.constant 0 : i32
    %c0_i32_0 = arith.constant 0 : i32
    %c0_i32_1 = arith.constant 0 : i32
    return %c0_i32, %c0_i32_0 : i32, i32
  }
  func.func @transform_6(%arg0: i32) -> (i32, i32) {
    %c0_i32 = arith.constant 0 : i32
    %c0_i32_0 = arith.constant 0 : i32
    %c0_i32_1 = arith.constant 0 : i32
    return %c0_i32, %c0_i32_0 : i32, i32
  }
  func.func @transform_7(%arg0: i32) -> (i32, i32) {
    %c0_i32 = arith.constant 0 : i32
    %c0_i32_0 = arith.constant 0 : i32
    %c0_i32_1 = arith.constant 0 : i32
    return %c0_i32, %c0_i32_0 : i32, i32
  }
  func.func @transform_8(%arg0: i32) -> (i32, i32) {
    %c0_i32 = arith.constant 0 : i32
    %c0_i32_0 = arith.constant 0 : i32
    %c0_i32_1 = arith.constant 0 : i32
    return %c0_i32, %c0_i32_0 : i32, i32
  }
  func.func @transform_9(%arg0: i32) -> (i32, i32) {
    %c0_i32 = arith.constant 0 : i32
    %c0_i32_0 = arith.constant 0 : i32
    %c0_i32_1 = arith.constant 0 : i32
    return %c0_i32, %c0_i32_0 : i32, i32
  }
  func.func @transform_10(%arg0: i32) -> (i32, i32) {
    %c0_i32 = arith.constant 0 : i32
    %c0_i32_0 = arith.constant 0 : i32
    %c0_i32_1 = arith.constant 0 : i32
    return %c0_i32, %c0_i32_0 : i32, i32
  }
  func.func @transform_11(%arg0: i32) -> (i32, i32) {
    %c0_i32 = arith.constant 0 : i32
    %c0_i32_0 = arith.constant 0 : i32
    %c0_i32_1 = arith.constant 0 : i32
    return %c0_i32, %c0_i32_0 : i32, i32
  }
  func.func @transform_12(%arg0: i32) -> (i32, i32, i32) {
    %c0_i32 = arith.constant 0 : i32
    %c0_i32_0 = arith.constant 0 : i32
    %c0_i32_1 = arith.constant 0 : i32
    return %arg0, %c0_i32, %c0_i32_0 : i32, i32, i32
  }
}

module attributes {stable_mosaic.version = 11 : i64} {
  func.func @_encoder_kernel(%arg0: i32, %arg1: memref<1x5x64xf32, #tpu.memory_space<vmem>>, %arg2: memref<1x4x256xf32, #tpu.memory_space<vmem>>, %arg3: memref<1x256xf32, #tpu.memory_space<vmem>>, %arg4: memref<1x256xf32, #tpu.memory_space<vmem>>, %arg5: memref<256x64xf32, #tpu.memory_space<vmem>>, %arg6: memref<1x64xf32, #tpu.memory_space<vmem>>, %arg7: memref<1x64xf32, #tpu.memory_space<vmem>>, %arg8: memref<1x64xf32, #tpu.memory_space<vmem>>, %arg9: memref<1x64xf32, #tpu.memory_space<vmem>>, %arg10: memref<3x64x64xf32, #tpu.memory_space<vmem>>, %arg11: memref<64x64xf32, #tpu.memory_space<vmem>>, %arg12: memref<1x64xf32, #tpu.memory_space<vmem>>, %arg13: memref<1x64xf32, #tpu.memory_space<vmem>>, %arg14: memref<1x64xf32, #tpu.memory_space<vmem>>, %arg15: memref<64x256xf32, #tpu.memory_space<vmem>>, %arg16: memref<1x256xf32, #tpu.memory_space<vmem>>, %arg17: memref<256x64xf32, #tpu.memory_space<vmem>>, %arg18: memref<1x64xf32, #tpu.memory_space<vmem>>, %arg19: memref<1x5x64xf32, #tpu.memory_space<vmem>>) attributes {dimension_semantics = [#tpu.dimension_semantics<parallel>], iteration_bounds = array<i64: 2>, scalar_prefetch = 0 : i64, scratch_operands = 0 : i64, tpu.core_type = #tpu.core_type<tc>, window_params = [{transform_indices = @transform_0, window_bounds = array<i64: 1, 5, 64>}, {transform_indices = @transform_1, window_bounds = array<i64: 1, 4, 256>}, {pipeline_mode = #tpu.pipeline_mode<synchronous>, transform_indices = @transform_2, window_bounds = array<i64: 1, 256>}, {pipeline_mode = #tpu.pipeline_mode<synchronous>, transform_indices = @transform_3, window_bounds = array<i64: 1, 256>}, {pipeline_mode = #tpu.pipeline_mode<synchronous>, transform_indices = @transform_4, window_bounds = array<i64: 256, 64>}, {pipeline_mode = #tpu.pipeline_mode<synchronous>, transform_indices = @transform_5, window_bounds = array<i64: 1, 64>}, {pipeline_mode = #tpu.pipeline_mode<synchronous>, transform_indices = @transform_6, window_bounds = array<i64: 1, 64>}, {pipeline_mode = #tpu.pipeline_mode<synchronous>, transform_indices = @transform_7, window_bounds = array<i64: 1, 64>}, {pipeline_mode = #tpu.pipeline_mode<synchronous>, transform_indices = @transform_8, window_bounds = array<i64: 1, 64>}, {pipeline_mode = #tpu.pipeline_mode<synchronous>, transform_indices = @transform_9, window_bounds = array<i64: 3, 64, 64>}, {pipeline_mode = #tpu.pipeline_mode<synchronous>, transform_indices = @transform_10, window_bounds = array<i64: 64, 64>}, {pipeline_mode = #tpu.pipeline_mode<synchronous>, transform_indices = @transform_11, window_bounds = array<i64: 1, 64>}, {pipeline_mode = #tpu.pipeline_mode<synchronous>, transform_indices = @transform_12, window_bounds = array<i64: 1, 64>}, {pipeline_mode = #tpu.pipeline_mode<synchronous>, transform_indices = @transform_13, window_bounds = array<i64: 1, 64>}, {pipeline_mode = #tpu.pipeline_mode<synchronous>, transform_indices = @transform_14, window_bounds = array<i64: 64, 256>}, {pipeline_mode = #tpu.pipeline_mode<synchronous>, transform_indices = @transform_15, window_bounds = array<i64: 1, 256>}, {pipeline_mode = #tpu.pipeline_mode<synchronous>, transform_indices = @transform_16, window_bounds = array<i64: 256, 64>}, {pipeline_mode = #tpu.pipeline_mode<synchronous>, transform_indices = @transform_17, window_bounds = array<i64: 1, 64>}, {transform_indices = @transform_18, window_bounds = array<i64: 1, 5, 64>}]} {
    %c0 = arith.constant 0 : index
    %c0_0 = arith.constant 0 : index
    %c0_1 = arith.constant 0 : index
    %0 = vector.load %arg1[%c0, %c0_0, %c0_1] : memref<1x5x64xf32, #tpu.memory_space<vmem>>, vector<1x5x64xf32>
    %c0_2 = arith.constant 0 : index
    %c0_3 = arith.constant 0 : index
    %c0_4 = arith.constant 0 : index
    %1 = vector.load %arg2[%c0_2, %c0_3, %c0_4] : memref<1x4x256xf32, #tpu.memory_space<vmem>>, vector<1x4x256xf32>
    %2 = vector.shape_cast %1 : vector<1x4x256xf32> to vector<4x256xf32>
    %c0_5 = arith.constant 0 : index
    %c0_6 = arith.constant 0 : index
    %3 = vector.load %arg3[%c0_5, %c0_6] : memref<1x256xf32, #tpu.memory_space<vmem>>, vector<1x256xf32>
    %c0_7 = arith.constant 0 : index
    %c0_8 = arith.constant 0 : index
    %4 = vector.load %arg4[%c0_7, %c0_8] : memref<1x256xf32, #tpu.memory_space<vmem>>, vector<1x256xf32>
    %cst = arith.constant dense<0.000000e+00> : vector<4xf32>
    %5 = vector.multi_reduction <add>, %2, %cst [1] : vector<4x256xf32> to vector<4xf32>
    %6 = vector.shape_cast %5 : vector<4xf32> to vector<4x1xf32>
    %cst_9 = arith.constant 2.560000e+02 : f32
    %7 = vector.broadcast %cst_9 : f32 to vector<4x1xf32>
    %8 = arith.divf %6, %7 : vector<4x1xf32>
    %9 = vector.broadcast %8 : vector<4x1xf32> to vector<4x256xf32>
    %10 = arith.subf %2, %9 : vector<4x256xf32>
    %11 = arith.mulf %10, %10 : vector<4x256xf32>
    %cst_10 = arith.constant dense<0.000000e+00> : vector<4xf32>
    %12 = vector.multi_reduction <add>, %11, %cst_10 [1] : vector<4x256xf32> to vector<4xf32>
    %13 = vector.shape_cast %12 : vector<4xf32> to vector<4x1xf32>
    %cst_11 = arith.constant 2.560000e+02 : f32
    %14 = vector.broadcast %cst_11 : f32 to vector<4x1xf32>
    %15 = arith.divf %13, %14 : vector<4x1xf32>
    %cst_12 = arith.constant 9.99999997E-7 : f32
    %16 = vector.broadcast %cst_12 : f32 to vector<4x1xf32>
    %17 = arith.addf %15, %16 : vector<4x1xf32>
    %18 = math.rsqrt %17 : vector<4x1xf32>
    %19 = vector.broadcast %18 : vector<4x1xf32> to vector<4x256xf32>
    %20 = arith.mulf %10, %19 : vector<4x256xf32>
    %21 = vector.broadcast %3 : vector<1x256xf32> to vector<4x256xf32>
    %22 = arith.mulf %20, %21 : vector<4x256xf32>
    %23 = vector.broadcast %4 : vector<1x256xf32> to vector<4x256xf32>
    %24 = arith.addf %22, %23 : vector<4x256xf32>
    %c0_13 = arith.constant 0 : index
    %c0_14 = arith.constant 0 : index
    %25 = vector.load %arg5[%c0_13, %c0_14] : memref<256x64xf32, #tpu.memory_space<vmem>>, vector<256x64xf32>
    %cst_15 = arith.constant dense<0.000000e+00> : vector<4x64xf32>
    %26 = tpu.matmul %24, %25, %cst_15 {dimension_numbers = #tpu.dot_dimension_numbers<[1], [0], [0], [1], [0, 0, 1, 1], [], []>} : vector<4x256xf32>, vector<256x64xf32>, vector<4x64xf32> -> vector<4x64xf32>
    %c0_16 = arith.constant 0 : index
    %c0_17 = arith.constant 0 : index
    %27 = vector.load %arg6[%c0_16, %c0_17] : memref<1x64xf32, #tpu.memory_space<vmem>>, vector<1x64xf32>
    %c0_18 = arith.constant 0 : index
    %c0_19 = arith.constant 0 : index
    %28 = vector.load %arg7[%c0_18, %c0_19] : memref<1x64xf32, #tpu.memory_space<vmem>>, vector<1x64xf32>
    %cst_20 = arith.constant dense<0.000000e+00> : vector<4xf32>
    %29 = vector.multi_reduction <add>, %26, %cst_20 [1] : vector<4x64xf32> to vector<4xf32>
    %30 = vector.shape_cast %29 : vector<4xf32> to vector<4x1xf32>
    %cst_21 = arith.constant 6.400000e+01 : f32
    %31 = vector.broadcast %cst_21 : f32 to vector<4x1xf32>
    %32 = arith.divf %30, %31 : vector<4x1xf32>
    %33 = vector.broadcast %32 : vector<4x1xf32> to vector<4x64xf32>
    %34 = arith.subf %26, %33 : vector<4x64xf32>
    %35 = arith.mulf %34, %34 : vector<4x64xf32>
    %cst_22 = arith.constant dense<0.000000e+00> : vector<4xf32>
    %36 = vector.multi_reduction <add>, %35, %cst_22 [1] : vector<4x64xf32> to vector<4xf32>
    %37 = vector.shape_cast %36 : vector<4xf32> to vector<4x1xf32>
    %cst_23 = arith.constant 6.400000e+01 : f32
    %38 = vector.broadcast %cst_23 : f32 to vector<4x1xf32>
    %39 = arith.divf %37, %38 : vector<4x1xf32>
    %cst_24 = arith.constant 9.99999997E-7 : f32
    %40 = vector.broadcast %cst_24 : f32 to vector<4x1xf32>
    %41 = arith.addf %39, %40 : vector<4x1xf32>
    %42 = math.rsqrt %41 : vector<4x1xf32>
    %43 = vector.broadcast %42 : vector<4x1xf32> to vector<4x64xf32>
    %44 = arith.mulf %34, %43 : vector<4x64xf32>
    %45 = vector.broadcast %27 : vector<1x64xf32> to vector<4x64xf32>
    %46 = arith.mulf %44, %45 : vector<4x64xf32>
    %47 = vector.broadcast %28 : vector<1x64xf32> to vector<4x64xf32>
    %48 = arith.addf %46, %47 : vector<4x64xf32>
    %49 = vector.shape_cast %48 : vector<4x64xf32> to vector<1x4x64xf32>
    %50 = vector.extract_strided_slice %0 {offsets = [0, 0, 0], sizes = [1, 1, 64], strides = [1, 1, 1]} : vector<1x5x64xf32> to vector<1x1x64xf32>
    %51 = vector.extract_strided_slice %0 {offsets = [0, 1, 0], sizes = [1, 4, 64], strides = [1, 1, 1]} : vector<1x5x64xf32> to vector<1x4x64xf32>
    %52 = arith.addf %51, %49 : vector<1x4x64xf32>
    %53 = tpu.concatenate %50, %52 in 1 : vector<1x1x64xf32>, vector<1x4x64xf32> -> vector<1x5x64xf32>
    %54 = vector.shape_cast %53 : vector<1x5x64xf32> to vector<5x64xf32>
    %c0_25 = arith.constant 0 : index
    %c0_26 = arith.constant 0 : index
    %55 = vector.load %arg8[%c0_25, %c0_26] : memref<1x64xf32, #tpu.memory_space<vmem>>, vector<1x64xf32>
    %c0_27 = arith.constant 0 : index
    %c0_28 = arith.constant 0 : index
    %56 = vector.load %arg9[%c0_27, %c0_28] : memref<1x64xf32, #tpu.memory_space<vmem>>, vector<1x64xf32>
    %cst_29 = arith.constant dense<0.000000e+00> : vector<5xf32>
    %57 = vector.multi_reduction <add>, %54, %cst_29 [1] : vector<5x64xf32> to vector<5xf32>
    %58 = vector.shape_cast %57 : vector<5xf32> to vector<5x1xf32>
    %cst_30 = arith.constant 6.400000e+01 : f32
    %59 = vector.broadcast %cst_30 : f32 to vector<5x1xf32>
    %60 = arith.divf %58, %59 : vector<5x1xf32>
    %61 = vector.broadcast %60 : vector<5x1xf32> to vector<5x64xf32>
    %62 = arith.subf %54, %61 : vector<5x64xf32>
    %63 = arith.mulf %62, %62 : vector<5x64xf32>
    %cst_31 = arith.constant dense<0.000000e+00> : vector<5xf32>
    %64 = vector.multi_reduction <add>, %63, %cst_31 [1] : vector<5x64xf32> to vector<5xf32>
    %65 = vector.shape_cast %64 : vector<5xf32> to vector<5x1xf32>
    %cst_32 = arith.constant 6.400000e+01 : f32
    %66 = vector.broadcast %cst_32 : f32 to vector<5x1xf32>
    %67 = arith.divf %65, %66 : vector<5x1xf32>
    %cst_33 = arith.constant 9.99999997E-7 : f32
    %68 = vector.broadcast %cst_33 : f32 to vector<5x1xf32>
    %69 = arith.addf %67, %68 : vector<5x1xf32>
    %70 = math.rsqrt %69 : vector<5x1xf32>
    %71 = vector.broadcast %70 : vector<5x1xf32> to vector<5x64xf32>
    %72 = arith.mulf %62, %71 : vector<5x64xf32>
    %73 = vector.broadcast %55 : vector<1x64xf32> to vector<5x64xf32>
    %74 = arith.mulf %72, %73 : vector<5x64xf32>
    %75 = vector.broadcast %56 : vector<1x64xf32> to vector<5x64xf32>
    %76 = arith.addf %74, %75 : vector<5x64xf32>
    %c0_34 = arith.constant 0 : index
    %c0_35 = arith.constant 0 : index
    %c0_36 = arith.constant 0 : index
    %77 = vector.load %arg10[%c0_34, %c0_35, %c0_36] : memref<3x64x64xf32, #tpu.memory_space<vmem>>, vector<1x64x64xf32>
    %78 = vector.shape_cast %77 : vector<1x64x64xf32> to vector<64x64xf32>
    %cst_37 = arith.constant dense<0.000000e+00> : vector<5x64xf32>
    %79 = tpu.matmul %76, %78, %cst_37 {dimension_numbers = #tpu.dot_dimension_numbers<[1], [0], [0], [1], [0, 0, 1, 1], [], []>} : vector<5x64xf32>, vector<64x64xf32>, vector<5x64xf32> -> vector<5x64xf32>
    %80 = vector.shape_cast %79 : vector<5x64xf32> to vector<1x5x64xf32>
    %c1 = arith.constant 1 : index
    %c0_38 = arith.constant 0 : index
    %c0_39 = arith.constant 0 : index
    %81 = vector.load %arg10[%c1, %c0_38, %c0_39] : memref<3x64x64xf32, #tpu.memory_space<vmem>>, vector<1x64x64xf32>
    %82 = vector.shape_cast %81 : vector<1x64x64xf32> to vector<64x64xf32>
    %cst_40 = arith.constant dense<0.000000e+00> : vector<5x64xf32>
    %83 = tpu.matmul %76, %82, %cst_40 {dimension_numbers = #tpu.dot_dimension_numbers<[1], [0], [0], [1], [0, 0, 1, 1], [], []>} : vector<5x64xf32>, vector<64x64xf32>, vector<5x64xf32> -> vector<5x64xf32>
    %84 = vector.shape_cast %83 : vector<5x64xf32> to vector<1x5x64xf32>
    %c2 = arith.constant 2 : index
    %c0_41 = arith.constant 0 : index
    %c0_42 = arith.constant 0 : index
    %85 = vector.load %arg10[%c2, %c0_41, %c0_42] : memref<3x64x64xf32, #tpu.memory_space<vmem>>, vector<1x64x64xf32>
    %86 = vector.shape_cast %85 : vector<1x64x64xf32> to vector<64x64xf32>
    %cst_43 = arith.constant dense<0.000000e+00> : vector<5x64xf32>
    %87 = tpu.matmul %76, %86, %cst_43 {dimension_numbers = #tpu.dot_dimension_numbers<[1], [0], [0], [1], [0, 0, 1, 1], [], []>} : vector<5x64xf32>, vector<64x64xf32>, vector<5x64xf32> -> vector<5x64xf32>
    %88 = vector.shape_cast %87 : vector<5x64xf32> to vector<1x5x64xf32>
    %89 = tpu.iota {dimensions = array<i32: 2>} : vector<1x1x64xi32>
    %c0_i32 = arith.constant 0 : i32
    %90 = vector.broadcast %c0_i32 : i32 to vector<1x1x64xi32>
    %91 = arith.cmpi sge, %89, %90 : vector<1x1x64xi32>
    %c16_i32 = arith.constant 16 : i32
    %92 = vector.broadcast %c16_i32 : i32 to vector<1x1x64xi32>
    %93 = arith.cmpi slt, %89, %92 : vector<1x1x64xi32>
    %94 = arith.andi %91, %93 : vector<1x1x64xi1>
    %cst_44 = arith.constant 0.000000e+00 : f32
    %95 = vector.shape_cast %94 : vector<1x1x64xi1> to vector<1x1x64xi1>
    %96 = vector.broadcast %95 : vector<1x1x64xi1> to vector<1x5x64xi1>
    %97 = vector.broadcast %cst_44 : f32 to vector<1x5x64xf32>
    %98 = arith.select %96, %80, %97 : vector<1x5x64xi1>, vector<1x5x64xf32>
    %cst_45 = arith.constant 0.000000e+00 : f32
    %99 = vector.shape_cast %94 : vector<1x1x64xi1> to vector<1x1x64xi1>
    %100 = vector.broadcast %99 : vector<1x1x64xi1> to vector<1x5x64xi1>
    %101 = vector.broadcast %cst_45 : f32 to vector<1x5x64xf32>
    %102 = arith.select %100, %88, %101 : vector<1x5x64xi1>, vector<1x5x64xf32>
    "tpu.trace_start"() <{level = 10 : i32, message = "bnd,bmd->bnm"}> : () -> ()
    %cst_46 = arith.constant dense<0.000000e+00> : vector<1x5x5xf32>
    %103 = tpu.matmul %98, %84, %cst_46 {dimension_numbers = #tpu.dot_dimension_numbers<[2], [2], [1], [1], [0, 0, 0, 1, 1, 1], [0], [0]>} : vector<1x5x64xf32>, vector<1x5x64xf32>, vector<1x5x5xf32> -> vector<1x5x5xf32>
    "tpu.trace_stop"() : () -> ()
    %cst_47 = arith.constant 2.500000e-01 : f32
    %104 = vector.broadcast %cst_47 : f32 to vector<1x5x5xf32>
    %105 = arith.mulf %103, %104 : vector<1x5x5xf32>
    %cst_48 = arith.constant dense<0xFF800000> : vector<1x5xf32>
    %106 = vector.multi_reduction <maximumf>, %105, %cst_48 [2] : vector<1x5x5xf32> to vector<1x5xf32>
    %107 = vector.shape_cast %106 : vector<1x5xf32> to vector<1x5x1xf32>
    %108 = vector.broadcast %107 : vector<1x5x1xf32> to vector<1x5x5xf32>
    %109 = arith.subf %105, %108 : vector<1x5x5xf32>
    %110 = math.exp %109 : vector<1x5x5xf32>
    %cst_49 = arith.constant dense<0.000000e+00> : vector<1x5xf32>
    %111 = vector.multi_reduction <add>, %110, %cst_49 [2] : vector<1x5x5xf32> to vector<1x5xf32>
    %112 = vector.shape_cast %111 : vector<1x5xf32> to vector<1x5x1xf32>
    %113 = vector.broadcast %112 : vector<1x5x1xf32> to vector<1x5x5xf32>
    %114 = arith.divf %110, %113 : vector<1x5x5xf32>
    "tpu.trace_start"() <{level = 10 : i32, message = "bnm,bmd->bnd"}> : () -> ()
    %cst_50 = arith.constant dense<0.000000e+00> : vector<1x5x64xf32>
    %115 = tpu.matmul %114, %102, %cst_50 {dimension_numbers = #tpu.dot_dimension_numbers<[2], [1], [1], [2], [0, 0, 0, 1, 1, 2], [0], [0]>} : vector<1x5x5xf32>, vector<1x5x64xf32>, vector<1x5x64xf32> -> vector<1x5x64xf32>
    %c16_i32_51 = arith.constant 16 : i32
    "tpu.trace_stop"() : () -> ()
    %116 = vector.broadcast %c16_i32_51 : i32 to vector<1x1x64xi32>
    %117 = arith.cmpi sge, %89, %116 : vector<1x1x64xi32>
    %c32_i32 = arith.constant 32 : i32
    %118 = vector.broadcast %c32_i32 : i32 to vector<1x1x64xi32>
    %119 = arith.cmpi slt, %89, %118 : vector<1x1x64xi32>
    %120 = arith.andi %117, %119 : vector<1x1x64xi1>
    %cst_52 = arith.constant 0.000000e+00 : f32
    %121 = vector.shape_cast %120 : vector<1x1x64xi1> to vector<1x1x64xi1>
    %122 = vector.broadcast %121 : vector<1x1x64xi1> to vector<1x5x64xi1>
    %123 = vector.broadcast %cst_52 : f32 to vector<1x5x64xf32>
    %124 = arith.select %122, %80, %123 : vector<1x5x64xi1>, vector<1x5x64xf32>
    %cst_53 = arith.constant 0.000000e+00 : f32
    %125 = vector.shape_cast %120 : vector<1x1x64xi1> to vector<1x1x64xi1>
    %126 = vector.broadcast %125 : vector<1x1x64xi1> to vector<1x5x64xi1>
    %127 = vector.broadcast %cst_53 : f32 to vector<1x5x64xf32>
    %128 = arith.select %126, %88, %127 : vector<1x5x64xi1>, vector<1x5x64xf32>
    "tpu.trace_start"() <{level = 10 : i32, message = "bnd,bmd->bnm"}> : () -> ()
    %cst_54 = arith.constant dense<0.000000e+00> : vector<1x5x5xf32>
    %129 = tpu.matmul %124, %84, %cst_54 {dimension_numbers = #tpu.dot_dimension_numbers<[2], [2], [1], [1], [0, 0, 0, 1, 1, 1], [0], [0]>} : vector<1x5x64xf32>, vector<1x5x64xf32>, vector<1x5x5xf32> -> vector<1x5x5xf32>
    "tpu.trace_stop"() : () -> ()
    %cst_55 = arith.constant 2.500000e-01 : f32
    %130 = vector.broadcast %cst_55 : f32 to vector<1x5x5xf32>
    %131 = arith.mulf %129, %130 : vector<1x5x5xf32>
    %cst_56 = arith.constant dense<0xFF800000> : vector<1x5xf32>
    %132 = vector.multi_reduction <maximumf>, %131, %cst_56 [2] : vector<1x5x5xf32> to vector<1x5xf32>
    %133 = vector.shape_cast %132 : vector<1x5xf32> to vector<1x5x1xf32>
    %134 = vector.broadcast %133 : vector<1x5x1xf32> to vector<1x5x5xf32>
    %135 = arith.subf %131, %134 : vector<1x5x5xf32>
    %136 = math.exp %135 : vector<1x5x5xf32>
    %cst_57 = arith.constant dense<0.000000e+00> : vector<1x5xf32>
    %137 = vector.multi_reduction <add>, %136, %cst_57 [2] : vector<1x5x5xf32> to vector<1x5xf32>
    %138 = vector.shape_cast %137 : vector<1x5xf32> to vector<1x5x1xf32>
    %139 = vector.broadcast %138 : vector<1x5x1xf32> to vector<1x5x5xf32>
    %140 = arith.divf %136, %139 : vector<1x5x5xf32>
    "tpu.trace_start"() <{level = 10 : i32, message = "bnm,bmd->bnd"}> : () -> ()
    %cst_58 = arith.constant dense<0.000000e+00> : vector<1x5x64xf32>
    %141 = tpu.matmul %140, %128, %cst_58 {dimension_numbers = #tpu.dot_dimension_numbers<[2], [1], [1], [2], [0, 0, 0, 1, 1, 2], [0], [0]>} : vector<1x5x5xf32>, vector<1x5x64xf32>, vector<1x5x64xf32> -> vector<1x5x64xf32>
    "tpu.trace_stop"() : () -> ()
    %142 = arith.addf %115, %141 : vector<1x5x64xf32>
    %c32_i32_59 = arith.constant 32 : i32
    %143 = vector.broadcast %c32_i32_59 : i32 to vector<1x1x64xi32>
    %144 = arith.cmpi sge, %89, %143 : vector<1x1x64xi32>
    %c48_i32 = arith.constant 48 : i32
    %145 = vector.broadcast %c48_i32 : i32 to vector<1x1x64xi32>
    %146 = arith.cmpi slt, %89, %145 : vector<1x1x64xi32>
    %147 = arith.andi %144, %146 : vector<1x1x64xi1>
    %cst_60 = arith.constant 0.000000e+00 : f32
    %148 = vector.shape_cast %147 : vector<1x1x64xi1> to vector<1x1x64xi1>
    %149 = vector.broadcast %148 : vector<1x1x64xi1> to vector<1x5x64xi1>
    %150 = vector.broadcast %cst_60 : f32 to vector<1x5x64xf32>
    %151 = arith.select %149, %80, %150 : vector<1x5x64xi1>, vector<1x5x64xf32>
    %cst_61 = arith.constant 0.000000e+00 : f32
    %152 = vector.shape_cast %147 : vector<1x1x64xi1> to vector<1x1x64xi1>
    %153 = vector.broadcast %152 : vector<1x1x64xi1> to vector<1x5x64xi1>
    %154 = vector.broadcast %cst_61 : f32 to vector<1x5x64xf32>
    %155 = arith.select %153, %88, %154 : vector<1x5x64xi1>, vector<1x5x64xf32>
    "tpu.trace_start"() <{level = 10 : i32, message = "bnd,bmd->bnm"}> : () -> ()
    %cst_62 = arith.constant dense<0.000000e+00> : vector<1x5x5xf32>
    %156 = tpu.matmul %151, %84, %cst_62 {dimension_numbers = #tpu.dot_dimension_numbers<[2], [2], [1], [1], [0, 0, 0, 1, 1, 1], [0], [0]>} : vector<1x5x64xf32>, vector<1x5x64xf32>, vector<1x5x5xf32> -> vector<1x5x5xf32>
    "tpu.trace_stop"() : () -> ()
    %cst_63 = arith.constant 2.500000e-01 : f32
    %157 = vector.broadcast %cst_63 : f32 to vector<1x5x5xf32>
    %158 = arith.mulf %156, %157 : vector<1x5x5xf32>
    %cst_64 = arith.constant dense<0xFF800000> : vector<1x5xf32>
    %159 = vector.multi_reduction <maximumf>, %158, %cst_64 [2] : vector<1x5x5xf32> to vector<1x5xf32>
    %160 = vector.shape_cast %159 : vector<1x5xf32> to vector<1x5x1xf32>
    %161 = vector.broadcast %160 : vector<1x5x1xf32> to vector<1x5x5xf32>
    %162 = arith.subf %158, %161 : vector<1x5x5xf32>
    %163 = math.exp %162 : vector<1x5x5xf32>
    %cst_65 = arith.constant dense<0.000000e+00> : vector<1x5xf32>
    %164 = vector.multi_reduction <add>, %163, %cst_65 [2] : vector<1x5x5xf32> to vector<1x5xf32>
    %165 = vector.shape_cast %164 : vector<1x5xf32> to vector<1x5x1xf32>
    %166 = vector.broadcast %165 : vector<1x5x1xf32> to vector<1x5x5xf32>
    %167 = arith.divf %163, %166 : vector<1x5x5xf32>
    "tpu.trace_start"() <{level = 10 : i32, message = "bnm,bmd->bnd"}> : () -> ()
    %cst_66 = arith.constant dense<0.000000e+00> : vector<1x5x64xf32>
    %168 = tpu.matmul %167, %155, %cst_66 {dimension_numbers = #tpu.dot_dimension_numbers<[2], [1], [1], [2], [0, 0, 0, 1, 1, 2], [0], [0]>} : vector<1x5x5xf32>, vector<1x5x64xf32>, vector<1x5x64xf32> -> vector<1x5x64xf32>
    "tpu.trace_stop"() : () -> ()
    %169 = arith.addf %142, %168 : vector<1x5x64xf32>
    %c48_i32_67 = arith.constant 48 : i32
    %170 = vector.broadcast %c48_i32_67 : i32 to vector<1x1x64xi32>
    %171 = arith.cmpi sge, %89, %170 : vector<1x1x64xi32>
    %c64_i32 = arith.constant 64 : i32
    %172 = vector.broadcast %c64_i32 : i32 to vector<1x1x64xi32>
    %173 = arith.cmpi slt, %89, %172 : vector<1x1x64xi32>
    %174 = arith.andi %171, %173 : vector<1x1x64xi1>
    %cst_68 = arith.constant 0.000000e+00 : f32
    %175 = vector.shape_cast %174 : vector<1x1x64xi1> to vector<1x1x64xi1>
    %176 = vector.broadcast %175 : vector<1x1x64xi1> to vector<1x5x64xi1>
    %177 = vector.broadcast %cst_68 : f32 to vector<1x5x64xf32>
    %178 = arith.select %176, %80, %177 : vector<1x5x64xi1>, vector<1x5x64xf32>
    %cst_69 = arith.constant 0.000000e+00 : f32
    %179 = vector.shape_cast %174 : vector<1x1x64xi1> to vector<1x1x64xi1>
    %180 = vector.broadcast %179 : vector<1x1x64xi1> to vector<1x5x64xi1>
    %181 = vector.broadcast %cst_69 : f32 to vector<1x5x64xf32>
    %182 = arith.select %180, %88, %181 : vector<1x5x64xi1>, vector<1x5x64xf32>
    "tpu.trace_start"() <{level = 10 : i32, message = "bnd,bmd->bnm"}> : () -> ()
    %cst_70 = arith.constant dense<0.000000e+00> : vector<1x5x5xf32>
    %183 = tpu.matmul %178, %84, %cst_70 {dimension_numbers = #tpu.dot_dimension_numbers<[2], [2], [1], [1], [0, 0, 0, 1, 1, 1], [0], [0]>} : vector<1x5x64xf32>, vector<1x5x64xf32>, vector<1x5x5xf32> -> vector<1x5x5xf32>
    "tpu.trace_stop"() : () -> ()
    %cst_71 = arith.constant 2.500000e-01 : f32
    %184 = vector.broadcast %cst_71 : f32 to vector<1x5x5xf32>
    %185 = arith.mulf %183, %184 : vector<1x5x5xf32>
    %cst_72 = arith.constant dense<0xFF800000> : vector<1x5xf32>
    %186 = vector.multi_reduction <maximumf>, %185, %cst_72 [2] : vector<1x5x5xf32> to vector<1x5xf32>
    %187 = vector.shape_cast %186 : vector<1x5xf32> to vector<1x5x1xf32>
    %188 = vector.broadcast %187 : vector<1x5x1xf32> to vector<1x5x5xf32>
    %189 = arith.subf %185, %188 : vector<1x5x5xf32>
    %190 = math.exp %189 : vector<1x5x5xf32>
    %cst_73 = arith.constant dense<0.000000e+00> : vector<1x5xf32>
    %191 = vector.multi_reduction <add>, %190, %cst_73 [2] : vector<1x5x5xf32> to vector<1x5xf32>
    %192 = vector.shape_cast %191 : vector<1x5xf32> to vector<1x5x1xf32>
    %193 = vector.broadcast %192 : vector<1x5x1xf32> to vector<1x5x5xf32>
    %194 = arith.divf %190, %193 : vector<1x5x5xf32>
    "tpu.trace_start"() <{level = 10 : i32, message = "bnm,bmd->bnd"}> : () -> ()
    %cst_74 = arith.constant dense<0.000000e+00> : vector<1x5x64xf32>
    %195 = tpu.matmul %194, %182, %cst_74 {dimension_numbers = #tpu.dot_dimension_numbers<[2], [1], [1], [2], [0, 0, 0, 1, 1, 2], [0], [0]>} : vector<1x5x5xf32>, vector<1x5x64xf32>, vector<1x5x64xf32> -> vector<1x5x64xf32>
    "tpu.trace_stop"() : () -> ()
    %196 = arith.addf %169, %195 : vector<1x5x64xf32>
    %197 = vector.shape_cast %196 : vector<1x5x64xf32> to vector<5x64xf32>
    %c0_75 = arith.constant 0 : index
    %c0_76 = arith.constant 0 : index
    %198 = vector.load %arg11[%c0_75, %c0_76] : memref<64x64xf32, #tpu.memory_space<vmem>>, vector<64x64xf32>
    %cst_77 = arith.constant dense<0.000000e+00> : vector<5x64xf32>
    %199 = tpu.matmul %197, %198, %cst_77 {dimension_numbers = #tpu.dot_dimension_numbers<[1], [0], [0], [1], [0, 0, 1, 1], [], []>} : vector<5x64xf32>, vector<64x64xf32>, vector<5x64xf32> -> vector<5x64xf32>
    %c0_78 = arith.constant 0 : index
    %c0_79 = arith.constant 0 : index
    %200 = vector.load %arg12[%c0_78, %c0_79] : memref<1x64xf32, #tpu.memory_space<vmem>>, vector<1x64xf32>
    %201 = vector.broadcast %200 : vector<1x64xf32> to vector<5x64xf32>
    %202 = arith.addf %199, %201 : vector<5x64xf32>
    %203 = arith.addf %54, %202 : vector<5x64xf32>
    %c0_80 = arith.constant 0 : index
    %c0_81 = arith.constant 0 : index
    %204 = vector.load %arg13[%c0_80, %c0_81] : memref<1x64xf32, #tpu.memory_space<vmem>>, vector<1x64xf32>
    %c0_82 = arith.constant 0 : index
    %c0_83 = arith.constant 0 : index
    %205 = vector.load %arg14[%c0_82, %c0_83] : memref<1x64xf32, #tpu.memory_space<vmem>>, vector<1x64xf32>
    %cst_84 = arith.constant dense<0.000000e+00> : vector<5xf32>
    %206 = vector.multi_reduction <add>, %203, %cst_84 [1] : vector<5x64xf32> to vector<5xf32>
    %207 = vector.shape_cast %206 : vector<5xf32> to vector<5x1xf32>
    %cst_85 = arith.constant 6.400000e+01 : f32
    %208 = vector.broadcast %cst_85 : f32 to vector<5x1xf32>
    %209 = arith.divf %207, %208 : vector<5x1xf32>
    %210 = vector.broadcast %209 : vector<5x1xf32> to vector<5x64xf32>
    %211 = arith.subf %203, %210 : vector<5x64xf32>
    %212 = arith.mulf %211, %211 : vector<5x64xf32>
    %cst_86 = arith.constant dense<0.000000e+00> : vector<5xf32>
    %213 = vector.multi_reduction <add>, %212, %cst_86 [1] : vector<5x64xf32> to vector<5xf32>
    %214 = vector.shape_cast %213 : vector<5xf32> to vector<5x1xf32>
    %cst_87 = arith.constant 6.400000e+01 : f32
    %215 = vector.broadcast %cst_87 : f32 to vector<5x1xf32>
    %216 = arith.divf %214, %215 : vector<5x1xf32>
    %cst_88 = arith.constant 9.99999997E-7 : f32
    %217 = vector.broadcast %cst_88 : f32 to vector<5x1xf32>
    %218 = arith.addf %216, %217 : vector<5x1xf32>
    %219 = math.rsqrt %218 : vector<5x1xf32>
    %220 = vector.broadcast %219 : vector<5x1xf32> to vector<5x64xf32>
    %221 = arith.mulf %211, %220 : vector<5x64xf32>
    %222 = vector.broadcast %204 : vector<1x64xf32> to vector<5x64xf32>
    %223 = arith.mulf %221, %222 : vector<5x64xf32>
    %224 = vector.broadcast %205 : vector<1x64xf32> to vector<5x64xf32>
    %225 = arith.addf %223, %224 : vector<5x64xf32>
    %c0_89 = arith.constant 0 : index
    %c0_90 = arith.constant 0 : index
    %226 = vector.load %arg15[%c0_89, %c0_90] : memref<64x256xf32, #tpu.memory_space<vmem>>, vector<64x256xf32>
    %cst_91 = arith.constant dense<0.000000e+00> : vector<5x256xf32>
    %227 = tpu.matmul %225, %226, %cst_91 {dimension_numbers = #tpu.dot_dimension_numbers<[1], [0], [0], [1], [0, 0, 1, 1], [], []>} : vector<5x64xf32>, vector<64x256xf32>, vector<5x256xf32> -> vector<5x256xf32>
    %c0_92 = arith.constant 0 : index
    %c0_93 = arith.constant 0 : index
    %228 = vector.load %arg16[%c0_92, %c0_93] : memref<1x256xf32, #tpu.memory_space<vmem>>, vector<1x256xf32>
    %229 = vector.broadcast %228 : vector<1x256xf32> to vector<5x256xf32>
    %230 = arith.addf %227, %229 : vector<5x256xf32>
    %cst_94 = arith.constant 0.707106769 : f32
    %231 = vector.broadcast %cst_94 : f32 to vector<5x256xf32>
    %232 = arith.mulf %230, %231 : vector<5x256xf32>
    %cst_95 = arith.constant 0.000000e+00 : f32
    %233 = vector.broadcast %cst_95 : f32 to vector<5x256xf32>
    %234 = arith.cmpf oge, %232, %233 : vector<5x256xf32>
    %cst_96 = arith.constant 1.000000e+00 : f32
    %cst_97 = arith.constant -1.000000e+00 : f32
    %235 = vector.broadcast %cst_96 : f32 to vector<5x256xf32>
    %236 = vector.broadcast %cst_97 : f32 to vector<5x256xf32>
    %237 = arith.select %234, %235, %236 : vector<5x256xi1>, vector<5x256xf32>
    %238 = math.absf %232 : vector<5x256xf32>
    %cst_98 = arith.constant 0.327591091 : f32
    %239 = vector.broadcast %cst_98 : f32 to vector<5x256xf32>
    %240 = arith.mulf %239, %238 : vector<5x256xf32>
    %cst_99 = arith.constant 1.000000e+00 : f32
    %241 = vector.broadcast %cst_99 : f32 to vector<5x256xf32>
    %242 = arith.addf %241, %240 : vector<5x256xf32>
    %243 = tpu.reciprocal %242 {approx = true} : vector<5x256xf32> -> vector<5x256xf32>
    %cst_100 = arith.constant 1.06140542 : f32
    %244 = vector.broadcast %cst_100 : f32 to vector<5x256xf32>
    %245 = arith.mulf %244, %243 : vector<5x256xf32>
    %cst_101 = arith.constant -1.45315206 : f32
    %246 = vector.broadcast %cst_101 : f32 to vector<5x256xf32>
    %247 = arith.addf %245, %246 : vector<5x256xf32>
    %248 = arith.mulf %247, %243 : vector<5x256xf32>
    %cst_102 = arith.constant 1.42141378 : f32
    %249 = vector.broadcast %cst_102 : f32 to vector<5x256xf32>
    %250 = arith.addf %248, %249 : vector<5x256xf32>
    %251 = arith.mulf %250, %243 : vector<5x256xf32>
    %cst_103 = arith.constant -0.284496725 : f32
    %252 = vector.broadcast %cst_103 : f32 to vector<5x256xf32>
    %253 = arith.addf %251, %252 : vector<5x256xf32>
    %254 = arith.mulf %253, %243 : vector<5x256xf32>
    %cst_104 = arith.constant 0.254829586 : f32
    %255 = vector.broadcast %cst_104 : f32 to vector<5x256xf32>
    %256 = arith.addf %254, %255 : vector<5x256xf32>
    %257 = arith.mulf %256, %243 : vector<5x256xf32>
    %cst_105 = arith.constant 0.000000e+00 : f32
    %258 = vector.broadcast %cst_105 : f32 to vector<5x256xf32>
    %259 = arith.subf %258, %238 : vector<5x256xf32>
    %260 = arith.mulf %259, %238 : vector<5x256xf32>
    %261 = math.exp %260 : vector<5x256xf32>
    %262 = arith.mulf %257, %261 : vector<5x256xf32>
    %cst_106 = arith.constant 1.000000e+00 : f32
    %263 = vector.broadcast %cst_106 : f32 to vector<5x256xf32>
    %264 = arith.subf %263, %262 : vector<5x256xf32>
    %265 = arith.mulf %237, %264 : vector<5x256xf32>
    %cst_107 = arith.constant 5.000000e-01 : f32
    %266 = vector.broadcast %cst_107 : f32 to vector<5x256xf32>
    %267 = arith.mulf %266, %230 : vector<5x256xf32>
    %cst_108 = arith.constant 1.000000e+00 : f32
    %268 = vector.broadcast %cst_108 : f32 to vector<5x256xf32>
    %269 = arith.addf %268, %265 : vector<5x256xf32>
    %270 = arith.mulf %267, %269 : vector<5x256xf32>
    %c0_109 = arith.constant 0 : index
    %c0_110 = arith.constant 0 : index
    %271 = vector.load %arg17[%c0_109, %c0_110] : memref<256x64xf32, #tpu.memory_space<vmem>>, vector<256x64xf32>
    %cst_111 = arith.constant dense<0.000000e+00> : vector<5x64xf32>
    %272 = tpu.matmul %270, %271, %cst_111 {dimension_numbers = #tpu.dot_dimension_numbers<[1], [0], [0], [1], [0, 0, 1, 1], [], []>} : vector<5x256xf32>, vector<256x64xf32>, vector<5x64xf32> -> vector<5x64xf32>
    %c0_112 = arith.constant 0 : index
    %c0_113 = arith.constant 0 : index
    %273 = vector.load %arg18[%c0_112, %c0_113] : memref<1x64xf32, #tpu.memory_space<vmem>>, vector<1x64xf32>
    %274 = vector.broadcast %273 : vector<1x64xf32> to vector<5x64xf32>
    %275 = arith.addf %272, %274 : vector<5x64xf32>
    %276 = arith.addf %203, %275 : vector<5x64xf32>
    %277 = vector.shape_cast %276 : vector<5x64xf32> to vector<1x5x64xf32>
    %c0_114 = arith.constant 0 : index
    %c0_115 = arith.constant 0 : index
    %c0_116 = arith.constant 0 : index
    %278 = vector.load %arg19[%c0_114, %c0_115, %c0_116] : memref<1x5x64xf32, #tpu.memory_space<vmem>>, vector<1x5x64xf32>
    tpu.vector_store %arg19[%c0_114, %c0_115, %c0_116], %277 {strides = array<i32>} : memref<1x5x64xf32, #tpu.memory_space<vmem>>, vector<1x5x64xf32>,
    return
  }
  func.func @transform_0(%arg0: i32) -> (i32, i32, i32) {
    %c0_i32 = arith.constant 0 : i32
    %c0_i32_0 = arith.constant 0 : i32
    %c0_i32_1 = arith.constant 0 : i32
    return %arg0, %c0_i32, %c0_i32_0 : i32, i32, i32
  }
  func.func @transform_1(%arg0: i32) -> (i32, i32, i32) {
    %c0_i32 = arith.constant 0 : i32
    %c0_i32_0 = arith.constant 0 : i32
    %c0_i32_1 = arith.constant 0 : i32
    return %arg0, %c0_i32, %c0_i32_0 : i32, i32, i32
  }
  func.func @transform_2(%arg0: i32) -> (i32, i32) {
    %c0_i32 = arith.constant 0 : i32
    %c0_i32_0 = arith.constant 0 : i32
    %c0_i32_1 = arith.constant 0 : i32
    return %c0_i32, %c0_i32_0 : i32, i32
  }
  func.func @transform_3(%arg0: i32) -> (i32, i32) {
    %c0_i32 = arith.constant 0 : i32
    %c0_i32_0 = arith.constant 0 : i32
    %c0_i32_1 = arith.constant 0 : i32
    return %c0_i32, %c0_i32_0 : i32, i32
  }
  func.func @transform_4(%arg0: i32) -> (i32, i32) {
    %c0_i32 = arith.constant 0 : i32
    %c0_i32_0 = arith.constant 0 : i32
    %c0_i32_1 = arith.constant 0 : i32
    return %c0_i32, %c0_i32_0 : i32, i32
  }
  func.func @transform_5(%arg0: i32) -> (i32, i32) {
    %c0_i32 = arith.constant 0 : i32
    %c0_i32_0 = arith.constant 0 : i32
    %c0_i32_1 = arith.constant 0 : i32
    return %c0_i32, %c0_i32_0 : i32, i32
  }
  func.func @transform_6(%arg0: i32) -> (i32, i32) {
    %c0_i32 = arith.constant 0 : i32
    %c0_i32_0 = arith.constant 0 : i32
    %c0_i32_1 = arith.constant 0 : i32
    return %c0_i32, %c0_i32_0 : i32, i32
  }
  func.func @transform_7(%arg0: i32) -> (i32, i32) {
    %c0_i32 = arith.constant 0 : i32
    %c0_i32_0 = arith.constant 0 : i32
    %c0_i32_1 = arith.constant 0 : i32
    return %c0_i32, %c0_i32_0 : i32, i32
  }
  func.func @transform_8(%arg0: i32) -> (i32, i32) {
    %c0_i32 = arith.constant 0 : i32
    %c0_i32_0 = arith.constant 0 : i32
    %c0_i32_1 = arith.constant 0 : i32
    return %c0_i32, %c0_i32_0 : i32, i32
  }
  func.func @transform_9(%arg0: i32) -> (i32, i32, i32) {
    %c0_i32 = arith.constant 0 : i32
    %c0_i32_0 = arith.constant 0 : i32
    %c0_i32_1 = arith.constant 0 : i32
    %c0_i32_2 = arith.constant 0 : i32
    return %c0_i32, %c0_i32_0, %c0_i32_1 : i32, i32, i32
  }
  func.func @transform_10(%arg0: i32) -> (i32, i32) {
    %c0_i32 = arith.constant 0 : i32
    %c0_i32_0 = arith.constant 0 : i32
    %c0_i32_1 = arith.constant 0 : i32
    return %c0_i32, %c0_i32_0 : i32, i32
  }
  func.func @transform_11(%arg0: i32) -> (i32, i32) {
    %c0_i32 = arith.constant 0 : i32
    %c0_i32_0 = arith.constant 0 : i32
    %c0_i32_1 = arith.constant 0 : i32
    return %c0_i32, %c0_i32_0 : i32, i32
  }
  func.func @transform_12(%arg0: i32) -> (i32, i32) {
    %c0_i32 = arith.constant 0 : i32
    %c0_i32_0 = arith.constant 0 : i32
    %c0_i32_1 = arith.constant 0 : i32
    return %c0_i32, %c0_i32_0 : i32, i32
  }
  func.func @transform_13(%arg0: i32) -> (i32, i32) {
    %c0_i32 = arith.constant 0 : i32
    %c0_i32_0 = arith.constant 0 : i32
    %c0_i32_1 = arith.constant 0 : i32
    return %c0_i32, %c0_i32_0 : i32, i32
  }
  func.func @transform_14(%arg0: i32) -> (i32, i32) {
    %c0_i32 = arith.constant 0 : i32
    %c0_i32_0 = arith.constant 0 : i32
    %c0_i32_1 = arith.constant 0 : i32
    return %c0_i32, %c0_i32_0 : i32, i32
  }
  func.func @transform_15(%arg0: i32) -> (i32, i32) {
    %c0_i32 = arith.constant 0 : i32
    %c0_i32_0 = arith.constant 0 : i32
    %c0_i32_1 = arith.constant 0 : i32
    return %c0_i32, %c0_i32_0 : i32, i32
  }
  func.func @transform_16(%arg0: i32) -> (i32, i32) {
    %c0_i32 = arith.constant 0 : i32
    %c0_i32_0 = arith.constant 0 : i32
    %c0_i32_1 = arith.constant 0 : i32
    return %c0_i32, %c0_i32_0 : i32, i32
  }
  func.func @transform_17(%arg0: i32) -> (i32, i32) {
    %c0_i32 = arith.constant 0 : i32
    %c0_i32_0 = arith.constant 0 : i32
    %c0_i32_1 = arith.constant 0 : i32
    return %c0_i32, %c0_i32_0 : i32, i32
  }
  func.func @transform_18(%arg0: i32) -> (i32, i32, i32) {
    %c0_i32 = arith.constant 0 : i32
    %c0_i32_0 = arith.constant 0 : i32
    %c0_i32_1 = arith.constant 0 : i32
    return %arg0, %c0_i32, %c0_i32_0 : i32, i32, i32
  }
}

</mosaic_0001>

<llo_original>
// kernel: tnt_block_forward.2
$region0: #{tnt_block_forward.2}
  #allocation0 [shape = 'u32[]', space=smem, size = 0x4, offset = 0x4, fixed_abs, tag = 'smem constant byte address 0x4 - core index']
  #allocation1 [shape = 'u32[144,128]{1,0:T(1,128)}', space=vmem, size = 0x12000, scoped, tag = 'internal scratch']
  %s0 = inlined_call_operand.vmem [shape: f32[8,8,32], index: 0, kind: input, shape index: {}]
  %s1 = inlined_call_operand.vmem [shape: f32[1,32], index: 1, kind: input, shape index: {}]
  %s2 = inlined_call_operand.vmem [shape: f32[1,32], index: 2, kind: input, shape index: {}]
  %s3 = inlined_call_operand.vmem [shape: f32[3,32,32], index: 3, kind: input, shape index: {}]
  %s4 = inlined_call_operand.hbm [shape: f32[32,32], index: 4, kind: input, shape index: {}]
  %s5 = inlined_call_operand.vmem [shape: f32[1,32], index: 5, kind: input, shape index: {}]
  %s6 = inlined_call_operand.vmem [shape: f32[1,32], index: 6, kind: input, shape index: {}]
  %s7 = inlined_call_operand.vmem [shape: f32[1,32], index: 7, kind: input, shape index: {}]
  %s8 = inlined_call_operand.hbm [shape: f32[32,128], index: 8, kind: input, shape index: {}]
  %s9 = inlined_call_operand.vmem [shape: f32[1,128], index: 9, kind: input, shape index: {}]
  %s10 = inlined_call_operand.vmem [shape: f32[128,32], index: 10, kind: input, shape index: {}]
  %s11 = inlined_call_operand.vmem [shape: f32[1,32], index: 11, kind: input, shape index: {}]
  %s12 = inlined_call_operand.vmem [shape: f32[8,8,32], index: 12, kind: output, shape index: {}]
  %s13 = sld [smem:[#allocation0]]
  $region89: #{tnt_block_forward.2} parent=0
    _
  %s15 = ssub.s32 1, %s13
  %s16 = scalar_select 0, %s15, %s13
  $region1: #{tnt_block_forward.2} parent=0
    #allocation2 [shape = 'u8[16384]{0}', space=vmem, size = 0x4000, scoped, tag = 'input window, operand 4, single buffered']
    #allocation3 [shape = 's32[2]{0}', space=sflag, size = 0x8, scoped, tag = 'scoped memory for tnt_block_forward.2']
    #allocation4 [shape = 'u8[16384]{0}', space=vmem, size = 0x4000, scoped, tag = 'input window, operand 8, single buffered']
    #allocation5 [shape = 's32[1]{0}', space=sflag, size = 0x4, scoped, tag = 'scoped memory for tnt_block_forward.2']
    %17 = vsyncpa [#allocation3], 0
    %18 = vsyncpa [#allocation5], 0
    loop: start=0, step=1, limit=4
    $region2: #{tnt_block_forward.2} parent=1 // loop_pre_header
      _
    $region3: #{tnt_block_forward.2} parent=1 // loop_header
      %s20 = sphi 0, %s24
      %p21 = scmp.ge.s32.totalorder %s20, 4
      %s30 = sphi 0, %s32
      %s33 = sphi 0, %s30
      %s34 = sphi 0, %s33
      %s50 = sphi 0, %s34
      %s54 = sphi 0, %s54
      %s56 = sphi 0, %s54
      %s57 = sphi 0, %s56
      %s71 = sphi 0, %s57
      %s75 = sphi 0, %s75
      %s77 = sphi 0, %s75
      %s78 = sphi 0, %s77
      %s92 = sphi 0, %s78
      %s96 = sphi 0, %s96
      %s98 = sphi 0, %s96
      %s99 = sphi 0, %s98
      %s113 = sphi 0, %s99
      %s117 = sphi 0, %s117
      %s119 = sphi 0, %s117
      %s120 = sphi 0, %s119
      %s134 = sphi 0, %s120
      %s138 = sphi 0, %s138
      %s140 = sphi 0, %s138
      %s141 = sphi 0, %s140
      %s155 = sphi 0, %s141
      %s159 = sphi 0, %s159
      %s161 = sphi 0, %s159
      %s162 = sphi 0, %s161
      %s176 = sphi 0, %s162
      %s180 = sphi 0, %s180
      %s182 = sphi 0, %s180
      %s183 = sphi 0, %s182
      %s197 = sphi 0, %s183
      %s201 = sphi 0, %s201
      %s203 = sphi 0, %s201
      %s204 = sphi 0, %s203
      %s218 = sphi 0, %s204
      %s222 = sphi 0, %s222
      %s224 = sphi 0, %s222
      %s225 = sphi 0, %s224
      %s239 = sphi 0, %s225
      %s243 = sphi 0, %s243
      %s245 = sphi 0, %s243
      %s246 = sphi 0, %s245
      %s260 = sphi 0, %s246
      %s264 = sphi 0, %s264
      %s266 = sphi 0, %s264
      %s267 = sphi 0, %s266
      %s281 = sphi 0, %s267
      %s287 = sphi 0, %s289
      %s290 = sphi 0, %s287
      %s291 = sphi 0, %s290
      %s307 = sphi 0, %s291
    $region4: #{tnt_block_forward.2} parent=1 // loop_header_branch
      %23 = sbr.rel (%p21) target = $region8
    $region5: #{tnt_block_forward.2} parent=1 // loop_body
      %s25 = ssub.s32 %s20, 1
      %s26 = ssub.s32 %s20, 2
      %s27 = sadd.s32 %s20, 1
      %s28 = ssub.s32 %s20, %s27
      %p29 = scmp.eq.s32.totalorder %s28, 0
      %s31 = sadd.s32 %s30, 1
      %s32 = scalar_select %p29, %s30, %s31
      %p35 = pneg %p29
      %p36 = scmp.eq.s32.totalorder %s20, 1
      %p37 = por %p35, %p36
      %p38 = scmp.ne.s32.totalorder %s30, %s33
      %p39 = scmp.eq.s32.totalorder %s20, 0
      %p40 = por %p38, %p39
      %p41 = scmp.ne.s32.totalorder %s30, %s33
      %p42 = scmp.eq.s32.totalorder %s25, 1
      %p43 = por %p41, %p42
      %p44 = scmp.ne.s32.totalorder %s33, %s34
      %p45 = scmp.eq.s32.totalorder %s25, 0
      %p46 = por %p44, %p45
      %p47 = scmp.ne.s32.totalorder %s33, %s34
      %p48 = scmp.eq.s32.totalorder %s26, 1
      %p49 = por %p47, %p48
      %p51 = scmp.ne.s32.totalorder %s34, %s50
      %p52 = scmp.eq.s32.totalorder %s26, 0
      %p53 = por %p51, %p52
      %s55 = sadd.s32 %s54, 1
      %p58 = scmp.eq.s32.totalorder %s20, 1
      %p59 = scmp.ne.s32.totalorder %s54, %s56
      %p60 = scmp.eq.s32.totalorder %s20, 0
      %p61 = por %p59, %p60
      %p62 = scmp.ne.s32.totalorder %s54, %s56
      %p63 = scmp.eq.s32.totalorder %s25, 1
      %p64 = por %p62, %p63
      %p65 = scmp.ne.s32.totalorder %s56, %s57
      %p66 = scmp.eq.s32.totalorder %s25, 0
      %p67 = por %p65, %p66
      %p68 = scmp.ne.s32.totalorder %s56, %s57
      %p69 = scmp.eq.s32.totalorder %s26, 1
      %p70 = por %p68, %p69
      %p72 = scmp.ne.s32.totalorder %s57, %s71
      %p73 = scmp.eq.s32.totalorder %s26, 0
      %p74 = por %p72, %p73
      %s76 = sadd.s32 %s75, 1
      %p79 = scmp.eq.s32.totalorder %s20, 1
      %p80 = scmp.ne.s32.totalorder %s75, %s77
      %p81 = scmp.eq.s32.totalorder %s20, 0
      %p82 = por %p80, %p81
      %p83 = scmp.ne.s32.totalorder %s75, %s77
      %p84 = scmp.eq.s32.totalorder %s25, 1
      %p85 = por %p83, %p84
      %p86 = scmp.ne.s32.totalorder %s77, %s78
      %p87 = scmp.eq.s32.totalorder %s25, 0
      %p88 = por %p86, %p87
      %p89 = scmp.ne.s32.totalorder %s77, %s78
      %p90 = scmp.eq.s32.totalorder %s26, 1
      %p91 = por %p89, %p90
      %p93 = scmp.ne.s32.totalorder %s78, %s92
      %p94 = scmp.eq.s32.totalorder %s26, 0
      %p95 = por %p93, %p94
      %s97 = sadd.s32 %s96, 1
      %p100 = scmp.eq.s32.totalorder %s20, 1
      %p101 = scmp.ne.s32.totalorder %s96, %s98
      %p102 = scmp.eq.s32.totalorder %s20, 0
      %p103 = por %p101, %p102
      %p104 = scmp.ne.s32.totalorder %s96, %s98
      %p105 = scmp.eq.s32.totalorder %s25, 1
      %p106 = por %p104, %p105
      %p107 = scmp.ne.s32.totalorder %s98, %s99
      %p108 = scmp.eq.s32.totalorder %s25, 0
      %p109 = por %p107, %p108
      %p110 = scmp.ne.s32.totalorder %s98, %s99
      %p111 = scmp.eq.s32.totalorder %s26, 1
      %p112 = por %p110, %p111
      %p114 = scmp.ne.s32.totalorder %s99, %s113
      %p115 = scmp.eq.s32.totalorder %s26, 0
      %p116 = por %p114, %p115
      %s118 = sadd.s32 %s117, 1
      %p121 = scmp.eq.s32.totalorder %s20, 1
      %p122 = scmp.ne.s32.totalorder %s117, %s119
      %p123 = scmp.eq.s32.totalorder %s20, 0
      %p124 = por %p122, %p123
      %p125 = scmp.ne.s32.totalorder %s117, %s119
      %p126 = scmp.eq.s32.totalorder %s25, 1
      %p127 = por %p125, %p126
      %p128 = scmp.ne.s32.totalorder %s119, %s120
      %p129 = scmp.eq.s32.totalorder %s25, 0
      %p130 = por %p128, %p129
      %p131 = scmp.ne.s32.totalorder %s119, %s120
      %p132 = scmp.eq.s32.totalorder %s26, 1
      %p133 = por %p131, %p132
      %p135 = scmp.ne.s32.totalorder %s120, %s134
      %p136 = scmp.eq.s32.totalorder %s26, 0
      %p137 = por %p135, %p136
      %s139 = sadd.s32 %s138, 1
      %p142 = scmp.eq.s32.totalorder %s20, 1
      %p143 = scmp.ne.s32.totalorder %s138, %s140
      %p144 = scmp.eq.s32.totalorder %s20, 0
      %p145 = por %p143, %p144
      %p146 = scmp.ne.s32.totalorder %s138, %s140
      %p147 = scmp.eq.s32.totalorder %s25, 1
      %p148 = por %p146, %p147
      %p149 = scmp.ne.s32.totalorder %s140, %s141
      %p150 = scmp.eq.s32.totalorder %s25, 0
      %p151 = por %p149, %p150
      %p152 = scmp.ne.s32.totalorder %s140, %s141
      %p153 = scmp.eq.s32.totalorder %s26, 1
      %p154 = por %p152, %p153
      %p156 = scmp.ne.s32.totalorder %s141, %s155
      %p157 = scmp.eq.s32.totalorder %s26, 0
      %p158 = por %p156, %p157
      %s160 = sadd.s32 %s159, 1
      %p163 = scmp.eq.s32.totalorder %s20, 1
      %p164 = scmp.ne.s32.totalorder %s159, %s161
      %p165 = scmp.eq.s32.totalorder %s20, 0
      %p166 = por %p164, %p165
      %p167 = scmp.ne.s32.totalorder %s159, %s161
      %p168 = scmp.eq.s32.totalorder %s25, 1
      %p169 = por %p167, %p168
      %p170 = scmp.ne.s32.totalorder %s161, %s162
      %p171 = scmp.eq.s32.totalorder %s25, 0
      %p172 = por %p170, %p171
      %p173 = scmp.ne.s32.totalorder %s161, %s162
      %p174 = scmp.eq.s32.totalorder %s26, 1
      %p175 = por %p173, %p174
      %p177 = scmp.ne.s32.totalorder %s162, %s176
      %p178 = scmp.eq.s32.totalorder %s26, 0
      %p179 = por %p177, %p178
      %s181 = sadd.s32 %s180, 1
      %p184 = scmp.eq.s32.totalorder %s20, 1
      %p185 = scmp.ne.s32.totalorder %s180, %s182
      %p186 = scmp.eq.s32.totalorder %s20, 0
      %p187 = por %p185, %p186
      %p188 = scmp.ne.s32.totalorder %s180, %s182
      %p189 = scmp.eq.s32.totalorder %s25, 1
      %p190 = por %p188, %p189
      %p191 = scmp.ne.s32.totalorder %s182, %s183
      %p192 = scmp.eq.s32.totalorder %s25, 0
      %p193 = por %p191, %p192
      %p194 = scmp.ne.s32.totalorder %s182, %s183
      %p195 = scmp.eq.s32.totalorder %s26, 1
      %p196 = por %p194, %p195
      %p198 = scmp.ne.s32.totalorder %s183, %s197
      %p199 = scmp.eq.s32.totalorder %s26, 0
      %p200 = por %p198, %p199
      %s202 = sadd.s32 %s201, 1
      %p205 = scmp.eq.s32.totalorder %s20, 1
      %p206 = scmp.ne.s32.totalorder %s201, %s203
      %p207 = scmp.eq.s32.totalorder %s20, 0
      %p208 = por %p206, %p207
      %p209 = scmp.ne.s32.totalorder %s201, %s203
      %p210 = scmp.eq.s32.totalorder %s25, 1
      %p211 = por %p209, %p210
      %p212 = scmp.ne.s32.totalorder %s203, %s204
      %p213 = scmp.eq.s32.totalorder %s25, 0
      %p214 = por %p212, %p213
      %p215 = scmp.ne.s32.totalorder %s203, %s204
      %p216 = scmp.eq.s32.totalorder %s26, 1
      %p217 = por %p215, %p216
      %p219 = scmp.ne.s32.totalorder %s204, %s218
      %p220 = scmp.eq.s32.totalorder %s26, 0
      %p221 = por %p219, %p220
      %s223 = sadd.s32 %s222, 1
      %p226 = scmp.eq.s32.totalorder %s20, 1
      %p227 = scmp.ne.s32.totalorder %s222, %s224
      %p228 = scmp.eq.s32.totalorder %s20, 0
      %p229 = por %p227, %p228
      %p230 = scmp.ne.s32.totalorder %s222, %s224
      %p231 = scmp.eq.s32.totalorder %s25, 1
      %p232 = por %p230, %p231
      %p233 = scmp.ne.s32.totalorder %s224, %s225
      %p234 = scmp.eq.s32.totalorder %s25, 0
      %p235 = por %p233, %p234
      %p236 = scmp.ne.s32.totalorder %s224, %s225
      %p237 = scmp.eq.s32.totalorder %s26, 1
      %p238 = por %p236, %p237
      %p240 = scmp.ne.s32.totalorder %s225, %s239
      %p241 = scmp.eq.s32.totalorder %s26, 0
      %p242 = por %p240, %p241
      %s244 = sadd.s32 %s243, 1
      %p247 = scmp.eq.s32.totalorder %s20, 1
      %p248 = scmp.ne.s32.totalorder %s243, %s245
      %p249 = scmp.eq.s32.totalorder %s20, 0
      %p250 = por %p248, %p249
      %p251 = scmp.ne.s32.totalorder %s243, %s245
      %p252 = scmp.eq.s32.totalorder %s25, 1
      %p253 = por %p251, %p252
      %p254 = scmp.ne.s32.totalorder %s245, %s246
      %p255 = scmp.eq.s32.totalorder %s25, 0
      %p256 = por %p254, %p255
      %p257 = scmp.ne.s32.totalorder %s245, %s246
      %p258 = scmp.eq.s32.totalorder %s26, 1
      %p259 = por %p257, %p258
      %p261 = scmp.ne.s32.totalorder %s246, %s260
      %p262 = scmp.eq.s32.totalorder %s26, 0
      %p263 = por %p261, %p262
      %s265 = sadd.s32 %s264, 1
      %p268 = scmp.eq.s32.totalorder %s20, 1
      %p269 = scmp.ne.s32.totalorder %s264, %s266
      %p270 = scmp.eq.s32.totalorder %s20, 0
      %p271 = por %p269, %p270
      %p272 = scmp.ne.s32.totalorder %s264, %s266
      %p273 = scmp.eq.s32.totalorder %s25, 1
      %p274 = por %p272, %p273
      %p275 = scmp.ne.s32.totalorder %s266, %s267
      %p276 = scmp.eq.s32.totalorder %s25, 0
      %p277 = por %p275, %p276
      %p278 = scmp.ne.s32.totalorder %s266, %s267
      %p279 = scmp.eq.s32.totalorder %s26, 1
      %p280 = por %p278, %p279
      %p282 = scmp.ne.s32.totalorder %s267, %s281
      %p283 = scmp.eq.s32.totalorder %s26, 0
      %p284 = por %p282, %p283
      %s285 = ssub.s32 %s20, %s27
      %p286 = scmp.eq.s32.totalorder %s285, 0
      %s288 = sadd.s32 %s287, 1
      %s289 = scalar_select %p286, %s287, %s288
      %p292 = pneg %p286
      %p293 = scmp.eq.s32.totalorder %s20, 1
      %p294 = por %p292, %p293
      %p295 = scmp.ne.s32.totalorder %s287, %s290
      %p296 = scmp.eq.s32.totalorder %s20, 0
      %p297 = por %p295, %p296
      %p298 = scmp.ne.s32.totalorder %s287, %s290
      %p299 = scmp.eq.s32.totalorder %s25, 1
      %p300 = por %p298, %p299
      %p301 = scmp.ne.s32.totalorder %s290, %s291
      %p302 = scmp.eq.s32.totalorder %s25, 0
      %p303 = por %p301, %p302
      %p304 = scmp.ne.s32.totalorder %s290, %s291
      %p305 = scmp.eq.s32.totalorder %s26, 1
      %p306 = por %p304, %p305
      %p308 = scmp.ne.s32.totalorder %s291, %s307
      %p309 = scmp.eq.s32.totalorder %s26, 0
      %p310 = por %p308, %p309
      %p311 = scmp.le.s32.totalorder 1, %s20
      %p312 = scmp.lt.s32.totalorder %s20, 3
      %p313 = pnand %p311, %p312
      %p314 = pneg %p313
      // Predicated region
      $region9: #{tnt_block_forward.2} parent=5 // pred_check
        _
      $region10: #{tnt_block_forward.2} parent=5 // pred_check_branch
        %316 = sbr.rel (%p313) target = $region12
      $region11: #{tnt_block_forward.2} parent=5 // pred_region
        %s317 = ssub.s32 %s20, 1
        // Predicated region
        $region13: #{tnt_block_forward.2} parent=11 // pred_check
          %p318 = pneg %p67
        $region14: #{tnt_block_forward.2} parent=11 // pred_check_branch
          %320 = sbr.rel (%p318) target = $region16
        $region15: #{tnt_block_forward.2} parent=11 // pred_region
          _
        $region16: #{tnt_block_forward.2} parent=11 // pred_fallthru
          _
        // Predicated region
        $region17: #{tnt_block_forward.2} parent=11 // pred_check
          %p321 = pneg %p88
        $region18: #{tnt_block_forward.2} parent=11 // pred_check_branch
          %323 = sbr.rel (%p321) target = $region20
        $region19: #{tnt_block_forward.2} parent=11 // pred_region
          _
        $region20: #{tnt_block_forward.2} parent=11 // pred_fallthru
          _
        // Predicated region
        $region21: #{tnt_block_forward.2} parent=11 // pred_check
          %p324 = pneg %p109
        $region22: #{tnt_block_forward.2} parent=11 // pred_check_branch
          %326 = sbr.rel (%p324) target = $region24
        $region23: #{tnt_block_forward.2} parent=11 // pred_region
          _
        $region24: #{tnt_block_forward.2} parent=11 // pred_fallthru
          _
        // Predicated region
        $region25: #{tnt_block_forward.2} parent=11 // pred_check
          %p327 = pneg %p130
        $region26: #{tnt_block_forward.2} parent=11 // pred_check_branch
          %329 = sbr.rel (%p327) target = $region28
        $region27: #{tnt_block_forward.2} parent=11 // pred_region
          %s331 = ssub.s32 512, 512
          %332 = vsyncadd [#allocation3], %s331
          %s333 = sshll.u32 [#allocation2], 4
          %s334 = int_to_ptr.vmem [resolvable:$true] %s333
          %339 = dma.hbm_to_vmem [thread:$0]  %s4, 512, %s334, [#allocation3], 128, 128, 8
        $region28: #{tnt_block_forward.2} parent=11 // pred_fallthru
          _
        // Predicated region
        $region29: #{tnt_block_forward.2} parent=11 // pred_check
          %p340 = pneg %p151
        $region30: #{tnt_block_forward.2} parent=11 // pred_check_branch
          %342 = sbr.rel (%p340) target = $region32
        $region31: #{tnt_block_forward.2} parent=11 // pred_region
          _
        $region32: #{tnt_block_forward.2} parent=11 // pred_fallthru
          _
        // Predicated region
        $region33: #{tnt_block_forward.2} parent=11 // pred_check
          %p343 = pneg %p172
        $region34: #{tnt_block_forward.2} parent=11 // pred_check_branch
          %345 = sbr.rel (%p343) target = $region36
        $region35: #{tnt_block_forward.2} parent=11 // pred_region
          _
        $region36: #{tnt_block_forward.2} parent=11 // pred_fallthru
          _
        // Predicated region
        $region37: #{tnt_block_forward.2} parent=11 // pred_check
          %p346 = pneg %p193
        $region38: #{tnt_block_forward.2} parent=11 // pred_check_branch
          %348 = sbr.rel (%p346) target = $region40
        $region39: #{tnt_block_forward.2} parent=11 // pred_region
          _
        $region40: #{tnt_block_forward.2} parent=11 // pred_fallthru
          _
        // Predicated region
        $region41: #{tnt_block_forward.2} parent=11 // pred_check
          %p349 = pneg %p214
        $region42: #{tnt_block_forward.2} parent=11 // pred_check_branch
          %351 = sbr.rel (%p349) target = $region44
        $region43: #{tnt_block_forward.2} parent=11 // pred_region
          %s353 = ssub.s32 512, 512
          %354 = vsyncadd [#allocation5], %s353
          %s355 = sshll.u32 [#allocation4], 4
          %s356 = int_to_ptr.vmem [resolvable:$true] %s355
          %361 = dma.hbm_to_vmem [thread:$0]  %s8, 512, %s356, [#allocation5], 128, 128, 8
        $region44: #{tnt_block_forward.2} parent=11 // pred_fallthru
          _
        // Predicated region
        $region45: #{tnt_block_forward.2} parent=11 // pred_check
          %p362 = pneg %p235
        $region46: #{tnt_block_forward.2} parent=11 // pred_check_branch
          %364 = sbr.rel (%p362) target = $region48
        $region47: #{tnt_block_forward.2} parent=11 // pred_region
          _
        $region48: #{tnt_block_forward.2} parent=11 // pred_fallthru
          _
        // Predicated region
        $region49: #{tnt_block_forward.2} parent=11 // pred_check
          %p365 = pneg %p256
        $region50: #{tnt_block_forward.2} parent=11 // pred_check_branch
          %367 = sbr.rel (%p365) target = $region52
        $region51: #{tnt_block_forward.2} parent=11 // pred_region
          _
        $region52: #{tnt_block_forward.2} parent=11 // pred_fallthru
          _
        // Predicated region
        $region53: #{tnt_block_forward.2} parent=11 // pred_check
          %p368 = pneg %p277
        $region54: #{tnt_block_forward.2} parent=11 // pred_check_branch
          %370 = sbr.rel (%p368) target = $region56
        $region55: #{tnt_block_forward.2} parent=11 // pred_region
          _
        $region56: #{tnt_block_forward.2} parent=11 // pred_fallthru
          _
      $region12: #{tnt_block_forward.2} parent=5 // pred_fallthru
        _
      %p371 = scmp.lt.s32.totalorder %s20, 2
      // Predicated region
      $region57: #{tnt_block_forward.2} parent=5 // pred_check
        %p372 = pneg %p371
      $region58: #{tnt_block_forward.2} parent=5 // pred_check_branch
        %374 = sbr.rel (%p372) target = $region60
      $region59: #{tnt_block_forward.2} parent=5 // pred_region
        // Predicated region
        $region61: #{tnt_block_forward.2} parent=59 // pred_check
          %p375 = pneg %p40
        $region62: #{tnt_block_forward.2} parent=59 // pred_check_branch
          %377 = sbr.rel (%p375) target = $region64
        $region63: #{tnt_block_forward.2} parent=59 // pred_region
          %s378 = smul.u32 4, %s20
          %p379 = scmp.lt.s32.totalorder %s378, 7
          %s380 = scalar_select %p379, %s378, 7
          %s381 = smul.addr %s380, 8
          %s382 = scalar_lea.vmem %s0, %s381
          %s383 = smul.u32 4, %s20
        $region64: #{tnt_block_forward.2} parent=59 // pred_fallthru
          _
      $region60: #{tnt_block_forward.2} parent=5 // pred_fallthru
        _
      %p384 = scmp.le.s32.totalorder 1, %s20
      %p385 = scmp.lt.s32.totalorder %s20, 3
      %p386 = pnand %p384, %p385
      %p387 = pneg %p386
      // Predicated region
      $region65: #{tnt_block_forward.2} parent=5 // pred_check
        _
      $region66: #{tnt_block_forward.2} parent=5 // pred_check_branch
        %389 = sbr.rel (%p386) target = $region68
      $region67: #{tnt_block_forward.2} parent=5 // pred_region
        %s390 = ssub.s32 %s20, 1
        // Predicated region
        $region69: #{tnt_block_forward.2} parent=67 // pred_check
          %p391 = pneg %p130
        $region70: #{tnt_block_forward.2} parent=67 // pred_check_branch
          %393 = sbr.rel (%p391) target = $region72
        $region71: #{tnt_block_forward.2} parent=67 // pred_region
          %394 = dma.done [#allocation3], 512
        $region72: #{tnt_block_forward.2} parent=67 // pred_fallthru
          _
        // Predicated region
        $region73: #{tnt_block_forward.2} parent=67 // pred_check
          %p395 = pneg %p214
        $region74: #{tnt_block_forward.2} parent=67 // pred_check_branch
          %397 = sbr.rel (%p395) target = $region76
        $region75: #{tnt_block_forward.2} parent=67 // pred_region
          %398 = dma.done [#allocation5], 512
        $region76: #{tnt_block_forward.2} parent=67 // pred_fallthru
          _
        %s399 = smul.u32 4, %s25
        %p400 = scmp.lt.s32.totalorder %s399, 7
        %s401 = scalar_select %p400, %s399, 7
        %s402 = smul.addr %s401, 8
        %s403 = scalar_lea.vmem %s0, %s402
        %p404 = pneg %p46
        %p405 = pneg %p43
        %p406 = pneg %p67
        %p407 = pneg %p64
        %p408 = pneg %p88
        %p409 = pneg %p85
        %p410 = pneg %p109
        %p411 = pneg %p106
        %p412 = pneg %p130
        %p413 = pneg %p127
        %p414 = pneg %p151
        %p415 = pneg %p148
        %p416 = pneg %p172
        %p417 = pneg %p169
        %p418 = pneg %p193
        %p419 = pneg %p190
        %p420 = pneg %p214
        %p421 = pneg %p211
        %p422 = pneg %p235
        %p423 = pneg %p232
        %p424 = pneg %p256
        %p425 = pneg %p253
        %p426 = pneg %p277
        %p427 = pneg %p274
        %p428 = pneg %p303
        %p429 = pneg %p300
        %s430 = smul.u32 4, %s25
        %p431 = scmp.lt.s32.totalorder %s430, 7
        %s432 = scalar_select %p431, %s430, 7
        %s433 = smul.addr %s432, 8
        %s434 = scalar_lea.vmem %s12, %s433
        %s435 = smul.u32 4, %s25
        %p436 = scmp.lt.s32.totalorder %s435, 7
        %s437 = scalar_select %p436, %s435, 7
        %s438 = smul.addr %s437, 8
        %s439 = scalar_lea.vmem %s0, %s438
        %s440 = smul.u32 4, %s25
        %s441 = smul.u32 4, %s25
        %p442 = scmp.lt.s32.totalorder %s441, 7
        %s443 = scalar_select %p442, %s441, 7
        %s444 = smul.addr %s443, 8
        %s445 = scalar_lea.vmem %s12, %s444
        %s446 = smul.u32 4, %s25
        %v447 = vld [vmem:[%s439] sm:$0xff]
        %v448 = vld [vmem:[%s439 + $0x8] sm:$0xff]
        %v449 = vld [vmem:[%s439 + $0x10] sm:$0xff]
        %v450 = vld [vmem:[%s439 + $0x18] sm:$0xff]
        %v451 = vld [vmem:[%s1] sm:$0x1]
        %v452 = vld [vmem:[%s2] sm:$0x1]
        %vm453 = vcmask 261120
        %v454 = vsel %vm453, %v447, 0.0
        %455 = vadd.xlane.f32.xlu0 %v454
        %v456 = vpop.xlane.xlu0 %455
        %v457 = vsel %vm453, %v448, 0.0
        %458 = vadd.xlane.f32.xlu0 %v457
        %v459 = vpop.xlane.xlu0 %458
        %v460 = vsel %vm453, %v449, 0.0
        %461 = vadd.xlane.f32.xlu0 %v460
        %v462 = vpop.xlane.xlu0 %461
        %v463 = vsel %vm453, %v450, 0.0
        %464 = vadd.xlane.f32.xlu0 %v463
        %v465 = vpop.xlane.xlu0 %464
        %v466 = vrcp.pop 32.0
        %v467 = vmul.f32 %v456, %v466
        %v468 = vmul.f32 %v459, %v466
        %v469 = vmul.f32 %v462, %v466
        %v470 = vmul.f32 %v465, %v466
        %v471 = vsub.f32 %v447, %v467
        %v472 = vsub.f32 %v448, %v468
        %v473 = vsub.f32 %v449, %v469
        %v474 = vsub.f32 %v450, %v470
        %v475 = vmul.f32 %v471, %v471
        %v476 = vmul.f32 %v472, %v472
        %v477 = vmul.f32 %v473, %v473
        %v478 = vmul.f32 %v474, %v474
        %v479 = vsel %vm453, %v475, 0.0
        %480 = vadd.xlane.f32.xlu0 %v479
        %v481 = vpop.xlane.xlu0 %480
        %v482 = vsel %vm453, %v476, 0.0
        %483 = vadd.xlane.f32.xlu0 %v482
        %v484 = vpop.xlane.xlu0 %483
        %v485 = vsel %vm453, %v477, 0.0
        %486 = vadd.xlane.f32.xlu0 %v485
        %v487 = vpop.xlane.xlu0 %486
        %v488 = vsel %vm453, %v478, 0.0
        %489 = vadd.xlane.f32.xlu0 %v488
        %v490 = vpop.xlane.xlu0 %489
        %v491 = vmul.f32 %v481, %v466
        %v492 = vmul.f32 %v484, %v466
        %v493 = vmul.f32 %v487, %v466
        %v494 = vmul.f32 %v490, %v466
        %v495 = vadd.f32 %v491, 1e-06
        %v496 = vadd.f32 %v492, 1e-06
        %v497 = vadd.f32 %v493, 1e-06
        %v498 = vadd.f32 %v494, 1e-06
        %v499 = vrsqrt.pop %v495
        %v500 = vrsqrt.pop %v496
        %v501 = vrsqrt.pop %v497
        %v502 = vrsqrt.pop %v498
        %v503 = vmul.f32 %v471, %v499
        %v504 = vmul.f32 %v472, %v500
        %v505 = vmul.f32 %v473, %v501
        %v506 = vmul.f32 %v474, %v502
        %v508 = vlaneseq
        %v509 = vshrl.u32 %v508, 7
        %v510 = vsub.s32 0, %v509
        %v511 = vrot.slane %v451, %v510
        %v513 = vmul.f32 %v503, %v511
        %v514 = vmul.f32 %v504, %v511
        %v515 = vmul.f32 %v505, %v511
        %v516 = vmul.f32 %v506, %v511
        %v518 = vlaneseq
        %v519 = vshrl.u32 %v518, 7
        %v520 = vsub.s32 0, %v519
        %v521 = vrot.slane %v452, %v520
        %v523 = vadd.f32 %v513, %v521
        %v524 = vadd.f32 %v514, %v521
        %v525 = vadd.f32 %v515, %v521
        %v526 = vadd.f32 %v516, %v521
        %v527 = vld [vmem:[%s3] sm:$0xff]
        %v528 = vld [vmem:[%s3 + $0x8] sm:$0xff]
        %v529 = vld [vmem:[%s3 + $0x10] sm:$0xff]
        %v530 = vld [vmem:[%s3 + $0x18] sm:$0xff]
        %v532 = vsel %vm453, %v523, 0
        %v535 = vsel %vm453, %v524, 0
        %v538 = vsel %vm453, %v525, 0
        %v541 = vsel %vm453, %v526, 0
        %543 = vmatprep.subr.mxu0 0.0
        %544 = vmatpush1.msra.mxu0 0.0
        %545 = vmatprep.subr.mxu0 0.0
        %546 = vmatpush1.msra.mxu0 0.0
        %547 = vmatprep.subr.mxu0 0.0
        %548 = vmatpush1.msra.mxu0 0.0
        %549 = vmatprep.subr.mxu0 0.0
        %550 = vmatpush1.msra.mxu0 0.0
        %551 = vmatprep.subr.mxu0 0.0
        %552 = vmatpush1.msra.mxu0 0.0
        %553 = vmatprep.subr.mxu0 0.0
        %554 = vmatpush1.msra.mxu0 0.0
        %555 = vmatprep.subr.mxu0 0.0
        %556 = vmatpush1.msra.mxu0 0.0
        %557 = vmatprep.subr.mxu0 0.0
        %558 = vmatpush1.msra.mxu0 0.0
        %559 = vmatprep.subr.mxu0 0.0
        %560 = vmatpush1.msra.mxu0 0.0
        %561 = vmatprep.subr.mxu0 0.0
        %562 = vmatpush1.msra.mxu0 0.0
        %563 = vmatprep.subr.mxu0 0.0
        %564 = vmatpush1.msra.mxu0 0.0
        %565 = vmatprep.subr.mxu0 0.0
        %566 = vmatpush1.msra.mxu0 0.0
        %567 = vmatprep.subr.mxu0 0.0
        %568 = vmatpush1.msra.mxu0 %v530
        %569 = vmatprep.subr.mxu0 0.0
        %570 = vmatpush1.msra.mxu0 %v529
        %571 = vmatprep.subr.mxu0 0.0
        %572 = vmatpush1.msra.mxu0 %v528
        %573 = vmatprep.subr.mxu0 0.0
        %574 = vmatpush1.msra.mxu0 %v527
        %575 = vmatprep.subr.mxu0 0.0
        %576 = vmatpush2.msra.mxu0 0.0
        %577 = vmatprep.subr.mxu0 0.0
        %578 = vmatpush2.msra.mxu0 0.0
        %579 = vmatprep.subr.mxu0 0.0
        %580 = vmatpush2.msra.mxu0 0.0
        %581 = vmatprep.subr.mxu0 0.0
        %582 = vmatpush2.msra.mxu0 0.0
        %583 = vmatprep.subr.mxu0 0.0
        %584 = vmatpush2.msra.mxu0 0.0
        %585 = vmatprep.subr.mxu0 0.0
        %586 = vmatpush2.msra.mxu0 0.0
        %587 = vmatprep.subr.mxu0 0.0
        %588 = vmatpush2.msra.mxu0 0.0
        %589 = vmatprep.subr.mxu0 0.0
        %590 = vmatpush2.msra.mxu0 0.0
        %591 = vmatprep.subr.mxu0 0.0
        %592 = vmatpush2.msra.mxu0 0.0
        %593 = vmatprep.subr.mxu0 0.0
        %594 = vmatpush2.msra.mxu0 0.0
        %595 = vmatprep.subr.mxu0 0.0
        %596 = vmatpush2.msra.mxu0 0.0
        %597 = vmatprep.subr.mxu0 0.0
        %598 = vmatpush2.msra.mxu0 0.0
        %599 = vmatprep.subr.mxu0 0.0
        %600 = vmatpush2.msra.mxu0 0.0
        %601 = vmatprep.subr.mxu0 0.0
        %602 = vmatpush2.msra.mxu0 0.0
        %603 = vmatprep.subr.mxu0 0.0
        %604 = vmatpush2.msra.mxu0 0.0
        %605 = vmatprep.subr.mxu0 0.0
        %606 = vmatpush2.msra.mxu0 0.0
        %607 = vmatprep.mubr.f32.mxu0 0.0
        %608 = vmatmul.mubr.f32.gmra.mxu0 %v532
        %v609 = vpop.f32.mrf.mxu0
        %v610 = vadd.f32 0.0, %v609
        %v611 = vpop.f32.mrf.mxu0
        %612 = vmatprep.mubr.f32.mxu0 0.0
        %613 = vmatmul.mubr.f32.gmra.mxu0 %v535
        %v614 = vpop.f32.mrf.mxu0
        %v615 = vadd.f32 0.0, %v614
        %v616 = vpop.f32.mrf.mxu0
        %617 = vmatprep.mubr.f32.mxu0 0.0
        %618 = vmatmul.mubr.f32.gmra.mxu0 %v538
        %v619 = vpop.f32.mrf.mxu0
        %v620 = vadd.f32 0.0, %v619
        %v621 = vpop.f32.mrf.mxu0
        %622 = vmatprep.mubr.f32.mxu0 0.0
        %623 = vmatmul.mubr.f32.gmra.mxu0 %v541
        %v624 = vpop.f32.mrf.mxu0
        %v625 = vadd.f32 0.0, %v624
        %v626 = vpop.f32.mrf.mxu0
        %627 = vdwg.mxu0
        %s628 = scalar_lea.vmem %s3, 32
        %v629 = vld [vmem:[%s628] sm:$0xff]
        %v630 = vld [vmem:[%s628 + $0x8] sm:$0xff]
        %v631 = vld [vmem:[%s628 + $0x10] sm:$0xff]
        %v632 = vld [vmem:[%s628 + $0x18] sm:$0xff]
        %633 = vmatprep.subr.mxu0 0.0
        %634 = vmatpush1.msra.mxu0 0.0
        %635 = vmatprep.subr.mxu0 0.0
        %636 = vmatpush1.msra.mxu0 0.0
        %637 = vmatprep.subr.mxu0 0.0
        %638 = vmatpush1.msra.mxu0 0.0
        %639 = vmatprep.subr.mxu0 0.0
        %640 = vmatpush1.msra.mxu0 0.0
        %641 = vmatprep.subr.mxu0 0.0
        %642 = vmatpush1.msra.mxu0 0.0
        %643 = vmatprep.subr.mxu0 0.0
        %644 = vmatpush1.msra.mxu0 0.0
        %645 = vmatprep.subr.mxu0 0.0
        %646 = vmatpush1.msra.mxu0 0.0
        %647 = vmatprep.subr.mxu0 0.0
        %648 = vmatpush1.msra.mxu0 0.0
        %649 = vmatprep.subr.mxu0 0.0
        %650 = vmatpush1.msra.mxu0 0.0
        %651 = vmatprep.subr.mxu0 0.0
        %652 = vmatpush1.msra.mxu0 0.0
        %653 = vmatprep.subr.mxu0 0.0
        %654 = vmatpush1.msra.mxu0 0.0
        %655 = vmatprep.subr.mxu0 0.0
        %656 = vmatpush1.msra.mxu0 0.0
        %657 = vmatprep.subr.mxu0 0.0
        %658 = vmatpush1.msra.mxu0 %v632
        %659 = vmatprep.subr.mxu0 0.0
        %660 = vmatpush1.msra.mxu0 %v631
        %661 = vmatprep.subr.mxu0 0.0
        %662 = vmatpush1.msra.mxu0 %v630
        %663 = vmatprep.subr.mxu0 0.0
        %664 = vmatpush1.msra.mxu0 %v629
        %665 = vmatprep.subr.mxu0 0.0
        %666 = vmatpush2.msra.mxu0 0.0
        %667 = vmatprep.subr.mxu0 0.0
        %668 = vmatpush2.msra.mxu0 0.0
        %669 = vmatprep.subr.mxu0 0.0
        %670 = vmatpush2.msra.mxu0 0.0
        %671 = vmatprep.subr.mxu0 0.0
        %672 = vmatpush2.msra.mxu0 0.0
        %673 = vmatprep.subr.mxu0 0.0
        %674 = vmatpush2.msra.mxu0 0.0
        %675 = vmatprep.subr.mxu0 0.0
        %676 = vmatpush2.msra.mxu0 0.0
        %677 = vmatprep.subr.mxu0 0.0
        %678 = vmatpush2.msra.mxu0 0.0
        %679 = vmatprep.subr.mxu0 0.0
        %680 = vmatpush2.msra.mxu0 0.0
        %681 = vmatprep.subr.mxu0 0.0
        %682 = vmatpush2.msra.mxu0 0.0
        %683 = vmatprep.subr.mxu0 0.0
        %684 = vmatpush2.msra.mxu0 0.0
        %685 = vmatprep.subr.mxu0 0.0
        %686 = vmatpush2.msra.mxu0 0.0
        %687 = vmatprep.subr.mxu0 0.0
        %688 = vmatpush2.msra.mxu0 0.0
        %689 = vmatprep.subr.mxu0 0.0
        %690 = vmatpush2.msra.mxu0 0.0
        %691 = vmatprep.subr.mxu0 0.0
        %692 = vmatpush2.msra.mxu0 0.0
        %693 = vmatprep.subr.mxu0 0.0
        %694 = vmatpush2.msra.mxu0 0.0
        %695 = vmatprep.subr.mxu0 0.0
        %696 = vmatpush2.msra.mxu0 0.0
        %697 = vmatprep.mubr.f32.mxu0 0.0
        %698 = vmatmul.mubr.f32.gmra.mxu0 %v532
        %v699 = vpop.f32.mrf.mxu0
        %v700 = vadd.f32 0.0, %v699
        %v701 = vpop.f32.mrf.mxu0
        %702 = vmatprep.mubr.f32.mxu0 0.0
        %703 = vmatmul.mubr.f32.gmra.mxu0 %v535
        %v704 = vpop.f32.mrf.mxu0
        %v705 = vadd.f32 0.0, %v704
        %v706 = vpop.f32.mrf.mxu0
        %707 = vmatprep.mubr.f32.mxu0 0.0
        %708 = vmatmul.mubr.f32.gmra.mxu0 %v538
        %v709 = vpop.f32.mrf.mxu0
        %v710 = vadd.f32 0.0, %v709
        %v711 = vpop.f32.mrf.mxu0
        %712 = vmatprep.mubr.f32.mxu0 0.0
        %713 = vmatmul.mubr.f32.gmra.mxu0 %v541
        %v714 = vpop.f32.mrf.mxu0
        %v715 = vadd.f32 0.0, %v714
        %v716 = vpop.f32.mrf.mxu0
        %717 = vdwg.mxu0
        %s718 = scalar_lea.vmem %s3, 64
        %v719 = vld [vmem:[%s718] sm:$0xff]
        %v720 = vld [vmem:[%s718 + $0x8] sm:$0xff]
        %v721 = vld [vmem:[%s718 + $0x10] sm:$0xff]
        %v722 = vld [vmem:[%s718 + $0x18] sm:$0xff]
        %723 = vmatprep.subr.mxu0 0.0
        %724 = vmatpush1.msra.mxu0 0.0
        %725 = vmatprep.subr.mxu0 0.0
        %726 = vmatpush1.msra.mxu0 0.0
        %727 = vmatprep.subr.mxu0 0.0
        %728 = vmatpush1.msra.mxu0 0.0
        %729 = vmatprep.subr.mxu0 0.0
        %730 = vmatpush1.msra.mxu0 0.0
        %731 = vmatprep.subr.mxu0 0.0
        %732 = vmatpush1.msra.mxu0 0.0
        %733 = vmatprep.subr.mxu0 0.0
        %734 = vmatpush1.msra.mxu0 0.0
        %735 = vmatprep.subr.mxu0 0.0
        %736 = vmatpush1.msra.mxu0 0.0
        %737 = vmatprep.subr.mxu0 0.0
        %738 = vmatpush1.msra.mxu0 0.0
        %739 = vmatprep.subr.mxu0 0.0
        %740 = vmatpush1.msra.mxu0 0.0
        %741 = vmatprep.subr.mxu0 0.0
        %742 = vmatpush1.msra.mxu0 0.0
        %743 = vmatprep.subr.mxu0 0.0
        %744 = vmatpush1.msra.mxu0 0.0
        %745 = vmatprep.subr.mxu0 0.0
        %746 = vmatpush1.msra.mxu0 0.0
        %747 = vmatprep.subr.mxu0 0.0
        %748 = vmatpush1.msra.mxu0 %v722
        %749 = vmatprep.subr.mxu0 0.0
        %750 = vmatpush1.msra.mxu0 %v721
        %751 = vmatprep.subr.mxu0 0.0
        %752 = vmatpush1.msra.mxu0 %v720
        %753 = vmatprep.subr.mxu0 0.0
        %754 = vmatpush1.msra.mxu0 %v719
        %755 = vmatprep.subr.mxu0 0.0
        %756 = vmatpush2.msra.mxu0 0.0
        %757 = vmatprep.subr.mxu0 0.0
        %758 = vmatpush2.msra.mxu0 0.0
        %759 = vmatprep.subr.mxu0 0.0
        %760 = vmatpush2.msra.mxu0 0.0
        %761 = vmatprep.subr.mxu0 0.0
        %762 = vmatpush2.msra.mxu0 0.0
        %763 = vmatprep.subr.mxu0 0.0
        %764 = vmatpush2.msra.mxu0 0.0
        %765 = vmatprep.subr.mxu0 0.0
        %766 = vmatpush2.msra.mxu0 0.0
        %767 = vmatprep.subr.mxu0 0.0
        %768 = vmatpush2.msra.mxu0 0.0
        %769 = vmatprep.subr.mxu0 0.0
        %770 = vmatpush2.msra.mxu0 0.0
        %771 = vmatprep.subr.mxu0 0.0
        %772 = vmatpush2.msra.mxu0 0.0
        %773 = vmatprep.subr.mxu0 0.0
        %774 = vmatpush2.msra.mxu0 0.0
        %775 = vmatprep.subr.mxu0 0.0
        %776 = vmatpush2.msra.mxu0 0.0
        %777 = vmatprep.subr.mxu0 0.0
        %778 = vmatpush2.msra.mxu0 0.0
        %779 = vmatprep.subr.mxu0 0.0
        %780 = vmatpush2.msra.mxu0 0.0
        %781 = vmatprep.subr.mxu0 0.0
        %782 = vmatpush2.msra.mxu0 0.0
        %783 = vmatprep.subr.mxu0 0.0
        %784 = vmatpush2.msra.mxu0 0.0
        %785 = vmatprep.subr.mxu0 0.0
        %786 = vmatpush2.msra.mxu0 0.0
        %787 = vmatprep.mubr.f32.mxu0 0.0
        %788 = vmatmul.mubr.f32.gmra.mxu0 %v532
        %v789 = vpop.f32.mrf.mxu0
        %v790 = vadd.f32 0.0, %v789
        %v791 = vpop.f32.mrf.mxu0
        %792 = vmatprep.mubr.f32.mxu0 0.0
        %793 = vmatmul.mubr.f32.gmra.mxu0 %v535
        %v794 = vpop.f32.mrf.mxu0
        %v795 = vadd.f32 0.0, %v794
        %v796 = vpop.f32.mrf.mxu0
        %797 = vmatprep.mubr.f32.mxu0 0.0
        %798 = vmatmul.mubr.f32.gmra.mxu0 %v538
        %v799 = vpop.f32.mrf.mxu0
        %v800 = vadd.f32 0.0, %v799
        %v801 = vpop.f32.mrf.mxu0
        %802 = vmatprep.mubr.f32.mxu0 0.0
        %803 = vmatmul.mubr.f32.gmra.mxu0 %v541
        %v804 = vpop.f32.mrf.mxu0
        %v805 = vadd.f32 0.0, %v804
        %v806 = vpop.f32.mrf.mxu0
        %807 = vdwg.mxu0
        %v808 = vlaneseq
        %v809 = vand.u32 %v808, 127
        %vm810 = vcmp.ge.s32.totalorder %v809, 0
        %vm811 = vcmp.lt.s32.totalorder %v809, 16
        %vm812 = vmand %vm810, %vm811
        %v813 = vsel %vm812, 1, 0
        %vm814 = vcmp.eq.s32.totalorder %v813, 1
        %v815 = vsel %vm814, %v610, 0.0
        %v816 = vsel %vm814, %v615, 0.0
        %v817 = vsel %vm814, %v620, 0.0
        %v818 = vsel %vm814, %v625, 0.0
        %v819 = vsel %vm814, %v790, 0.0
        %v820 = vsel %vm814, %v795, 0.0
        %v821 = vsel %vm814, %v800, 0.0
        %v822 = vsel %vm814, %v805, 0.0
        %v824 = vsel %vm453, %v815, 0
        %v827 = vsel %vm453, %v700, 0
        %829 = vmatprep.subr.mxu0 0.0
        %830 = vmatpush1.xpose.msra.mxu0 0.0
        %831 = vmatprep.subr.mxu0 0.0
        %832 = vmatpush1.xpose.msra.mxu0 0.0
        %833 = vmatprep.subr.mxu0 0.0
        %834 = vmatpush1.xpose.msra.mxu0 0.0
        %835 = vmatprep.subr.mxu0 0.0
        %836 = vmatpush1.xpose.msra.mxu0 0.0
        %837 = vmatprep.subr.mxu0 0.0
        %838 = vmatpush1.xpose.msra.mxu0 0.0
        %839 = vmatprep.subr.mxu0 0.0
        %840 = vmatpush1.xpose.msra.mxu0 0.0
        %841 = vmatprep.subr.mxu0 0.0
        %842 = vmatpush1.xpose.msra.mxu0 0.0
        %843 = vmatprep.subr.mxu0 0.0
        %844 = vmatpush1.xpose.msra.mxu0 0.0
        %845 = vmatprep.subr.mxu0 0.0
        %846 = vmatpush1.xpose.msra.mxu0 0.0
        %847 = vmatprep.subr.mxu0 0.0
        %848 = vmatpush1.xpose.msra.mxu0 0.0
        %849 = vmatprep.subr.mxu0 0.0
        %850 = vmatpush1.xpose.msra.mxu0 0.0
        %851 = vmatprep.subr.mxu0 0.0
        %852 = vmatpush1.xpose.msra.mxu0 0.0
        %853 = vmatprep.subr.mxu0 0.0
        %854 = vmatpush1.xpose.msra.mxu0 0.0
        %855 = vmatprep.subr.mxu0 0.0
        %856 = vmatpush1.xpose.msra.mxu0 0.0
        %857 = vmatprep.subr.mxu0 0.0
        %858 = vmatpush1.xpose.msra.mxu0 0.0
        %859 = vmatprep.subr.mxu0 0.0
        %860 = vmatpush1.xpose.msra.mxu0 %v827
        %861 = vmatprep.subr.mxu0 0.0
        %862 = vmatpush2.xpose.msra.mxu0 0.0
        %863 = vmatprep.subr.mxu0 0.0
        %864 = vmatpush2.xpose.msra.mxu0 0.0
        %865 = vmatprep.subr.mxu0 0.0
        %866 = vmatpush2.xpose.msra.mxu0 0.0
        %867 = vmatprep.subr.mxu0 0.0
        %868 = vmatpush2.xpose.msra.mxu0 0.0
        %869 = vmatprep.subr.mxu0 0.0
        %870 = vmatpush2.xpose.msra.mxu0 0.0
        %871 = vmatprep.subr.mxu0 0.0
        %872 = vmatpush2.xpose.msra.mxu0 0.0
        %873 = vmatprep.subr.mxu0 0.0
        %874 = vmatpush2.xpose.msra.mxu0 0.0
        %875 = vmatprep.subr.mxu0 0.0
        %876 = vmatpush2.xpose.msra.mxu0 0.0
        %877 = vmatprep.subr.mxu0 0.0
        %878 = vmatpush2.xpose.msra.mxu0 0.0
        %879 = vmatprep.subr.mxu0 0.0
        %880 = vmatpush2.xpose.msra.mxu0 0.0
        %881 = vmatprep.subr.mxu0 0.0
        %882 = vmatpush2.xpose.msra.mxu0 0.0
        %883 = vmatprep.subr.mxu0 0.0
        %884 = vmatpush2.xpose.msra.mxu0 0.0
        %885 = vmatprep.subr.mxu0 0.0
        %886 = vmatpush2.xpose.msra.mxu0 0.0
        %887 = vmatprep.subr.mxu0 0.0
        %888 = vmatpush2.xpose.msra.mxu0 0.0
        %889 = vmatprep.subr.mxu0 0.0
        %890 = vmatpush2.xpose.msra.mxu0 0.0
        %891 = vmatprep.subr.mxu0 0.0
        %892 = vmatpush2.xpose.msra.mxu0 0.0
        %893 = vmatprep.mubr.f32.mxu0 0.0
        %894 = vmatmul.mubr.f32.gmra.mxu0 %v824
        %v895 = vpop.f32.mrf.mxu0
        %v896 = vadd.f32 0.0, %v895
        %v897 = vpop.f32.mrf.mxu0
        %898 = vdwg.mxu0
        %v900 = vsel %vm453, %v816, 0
        %v903 = vsel %vm453, %v705, 0
        %905 = vmatprep.subr.mxu0 0.0
        %906 = vmatpush1.xpose.msra.mxu0 0.0
        %907 = vmatprep.subr.mxu0 0.0
        %908 = vmatpush1.xpose.msra.mxu0 0.0
        %909 = vmatprep.subr.mxu0 0.0
        %910 = vmatpush1.xpose.msra.mxu0 0.0
        %911 = vmatprep.subr.mxu0 0.0
        %912 = vmatpush1.xpose.msra.mxu0 0.0
        %913 = vmatprep.subr.mxu0 0.0
        %914 = vmatpush1.xpose.msra.mxu0 0.0
        %915 = vmatprep.subr.mxu0 0.0
        %916 = vmatpush1.xpose.msra.mxu0 0.0
        %917 = vmatprep.subr.mxu0 0.0
        %918 = vmatpush1.xpose.msra.mxu0 0.0
        %919 = vmatprep.subr.mxu0 0.0
        %920 = vmatpush1.xpose.msra.mxu0 0.0
        %921 = vmatprep.subr.mxu0 0.0
        %922 = vmatpush1.xpose.msra.mxu0 0.0
        %923 = vmatprep.subr.mxu0 0.0
        %924 = vmatpush1.xpose.msra.mxu0 0.0
        %925 = vmatprep.subr.mxu0 0.0
        %926 = vmatpush1.xpose.msra.mxu0 0.0
        %927 = vmatprep.subr.mxu0 0.0
        %928 = vmatpush1.xpose.msra.mxu0 0.0
        %929 = vmatprep.subr.mxu0 0.0
        %930 = vmatpush1.xpose.msra.mxu0 0.0
        %931 = vmatprep.subr.mxu0 0.0
        %932 = vmatpush1.xpose.msra.mxu0 0.0
        %933 = vmatprep.subr.mxu0 0.0
        %934 = vmatpush1.xpose.msra.mxu0 0.0
        %935 = vmatprep.subr.mxu0 0.0
        %936 = vmatpush1.xpose.msra.mxu0 %v903
        %937 = vmatprep.subr.mxu0 0.0
        %938 = vmatpush2.xpose.msra.mxu0 0.0
        %939 = vmatprep.subr.mxu0 0.0
        %940 = vmatpush2.xpose.msra.mxu0 0.0
        %941 = vmatprep.subr.mxu0 0.0
        %942 = vmatpush2.xpose.msra.mxu0 0.0
        %943 = vmatprep.subr.mxu0 0.0
        %944 = vmatpush2.xpose.msra.mxu0 0.0
        %945 = vmatprep.subr.mxu0 0.0
        %946 = vmatpush2.xpose.msra.mxu0 0.0
        %947 = vmatprep.subr.mxu0 0.0
        %948 = vmatpush2.xpose.msra.mxu0 0.0
        %949 = vmatprep.subr.mxu0 0.0
        %950 = vmatpush2.xpose.msra.mxu0 0.0
        %951 = vmatprep.subr.mxu0 0.0
        %952 = vmatpush2.xpose.msra.mxu0 0.0
        %953 = vmatprep.subr.mxu0 0.0
        %954 = vmatpush2.xpose.msra.mxu0 0.0
        %955 = vmatprep.subr.mxu0 0.0
        %956 = vmatpush2.xpose.msra.mxu0 0.0
        %957 = vmatprep.subr.mxu0 0.0
        %958 = vmatpush2.xpose.msra.mxu0 0.0
        %959 = vmatprep.subr.mxu0 0.0
        %960 = vmatpush2.xpose.msra.mxu0 0.0
        %961 = vmatprep.subr.mxu0 0.0
        %962 = vmatpush2.xpose.msra.mxu0 0.0
        %963 = vmatprep.subr.mxu0 0.0
        %964 = vmatpush2.xpose.msra.mxu0 0.0
        %965 = vmatprep.subr.mxu0 0.0
        %966 = vmatpush2.xpose.msra.mxu0 0.0
        %967 = vmatprep.subr.mxu0 0.0
        %968 = vmatpush2.xpose.msra.mxu0 0.0
        %969 = vmatprep.mubr.f32.mxu0 0.0
        %970 = vmatmul.mubr.f32.gmra.mxu0 %v900
        %v971 = vpop.f32.mrf.mxu0
        %v972 = vadd.f32 0.0, %v971
        %v973 = vpop.f32.mrf.mxu0
        %974 = vdwg.mxu0
        %v976 = vsel %vm453, %v817, 0
        %v979 = vsel %vm453, %v710, 0
        %981 = vmatprep.subr.mxu0 0.0
        %982 = vmatpush1.xpose.msra.mxu0 0.0
        %983 = vmatprep.subr.mxu0 0.0
        %984 = vmatpush1.xpose.msra.mxu0 0.0
        %985 = vmatprep.subr.mxu0 0.0
        %986 = vmatpush1.xpose.msra.mxu0 0.0
        %987 = vmatprep.subr.mxu0 0.0
        %988 = vmatpush1.xpose.msra.mxu0 0.0
        %989 = vmatprep.subr.mxu0 0.0
        %990 = vmatpush1.xpose.msra.mxu0 0.0
        %991 = vmatprep.subr.mxu0 0.0
        %992 = vmatpush1.xpose.msra.mxu0 0.0
        %993 = vmatprep.subr.mxu0 0.0
        %994 = vmatpush1.xpose.msra.mxu0 0.0
        %995 = vmatprep.subr.mxu0 0.0
        %996 = vmatpush1.xpose.msra.mxu0 0.0
        %997 = vmatprep.subr.mxu0 0.0
        %998 = vmatpush1.xpose.msra.mxu0 0.0
        %999 = vmatprep.subr.mxu0 0.0
        %1000 = vmatpush1.xpose.msra.mxu0 0.0
        %1001 = vmatprep.subr.mxu0 0.0
        %1002 = vmatpush1.xpose.msra.mxu0 0.0
        %1003 = vmatprep.subr.mxu0 0.0
        %1004 = vmatpush1.xpose.msra.mxu0 0.0
        %1005 = vmatprep.subr.mxu0 0.0
        %1006 = vmatpush1.xpose.msra.mxu0 0.0
        %1007 = vmatprep.subr.mxu0 0.0
        %1008 = vmatpush1.xpose.msra.mxu0 0.0
        %1009 = vmatprep.subr.mxu0 0.0
        %1010 = vmatpush1.xpose.msra.mxu0 0.0
        %1011 = vmatprep.subr.mxu0 0.0
        %1012 = vmatpush1.xpose.msra.mxu0 %v979
        %1013 = vmatprep.subr.mxu0 0.0
        %1014 = vmatpush2.xpose.msra.mxu0 0.0
        %1015 = vmatprep.subr.mxu0 0.0
        %1016 = vmatpush2.xpose.msra.mxu0 0.0
        %1017 = vmatprep.subr.mxu0 0.0
        %1018 = vmatpush2.xpose.msra.mxu0 0.0
        %1019 = vmatprep.subr.mxu0 0.0
        %1020 = vmatpush2.xpose.msra.mxu0 0.0
        %1021 = vmatprep.subr.mxu0 0.0
        %1022 = vmatpush2.xpose.msra.mxu0 0.0
        %1023 = vmatprep.subr.mxu0 0.0
        %1024 = vmatpush2.xpose.msra.mxu0 0.0
        %1025 = vmatprep.subr.mxu0 0.0
        %1026 = vmatpush2.xpose.msra.mxu0 0.0
        %1027 = vmatprep.subr.mxu0 0.0
        %1028 = vmatpush2.xpose.msra.mxu0 0.0
        %1029 = vmatprep.subr.mxu0 0.0
        %1030 = vmatpush2.xpose.msra.mxu0 0.0
        %1031 = vmatprep.subr.mxu0 0.0
        %1032 = vmatpush2.xpose.msra.mxu0 0.0
        %1033 = vmatprep.subr.mxu0 0.0
        %1034 = vmatpush2.xpose.msra.mxu0 0.0
        %1035 = vmatprep.subr.mxu0 0.0
        %1036 = vmatpush2.xpose.msra.mxu0 0.0
        %1037 = vmatprep.subr.mxu0 0.0
        %1038 = vmatpush2.xpose.msra.mxu0 0.0
        %1039 = vmatprep.subr.mxu0 0.0
        %1040 = vmatpush2.xpose.msra.mxu0 0.0
        %1041 = vmatprep.subr.mxu0 0.0
        %1042 = vmatpush2.xpose.msra.mxu0 0.0
        %1043 = vmatprep.subr.mxu0 0.0
        %1044 = vmatpush2.xpose.msra.mxu0 0.0
        %1045 = vmatprep.mubr.f32.mxu0 0.0
        %1046 = vmatmul.mubr.f32.gmra.mxu0 %v976
        %v1047 = vpop.f32.mrf.mxu0
        %v1048 = vadd.f32 0.0, %v1047
        %v1049 = vpop.f32.mrf.mxu0
        %1050 = vdwg.mxu0
        %v1052 = vsel %vm453, %v818, 0
        %v1055 = vsel %vm453, %v715, 0
        %1057 = vmatprep.subr.mxu0 0.0
        %1058 = vmatpush1.xpose.msra.mxu0 0.0
        %1059 = vmatprep.subr.mxu0 0.0
        %1060 = vmatpush1.xpose.msra.mxu0 0.0
        %1061 = vmatprep.subr.mxu0 0.0
        %1062 = vmatpush1.xpose.msra.mxu0 0.0
        %1063 = vmatprep.subr.mxu0 0.0
        %1064 = vmatpush1.xpose.msra.mxu0 0.0
        %1065 = vmatprep.subr.mxu0 0.0
        %1066 = vmatpush1.xpose.msra.mxu0 0.0
        %1067 = vmatprep.subr.mxu0 0.0
        %1068 = vmatpush1.xpose.msra.mxu0 0.0
        %1069 = vmatprep.subr.mxu0 0.0
        %1070 = vmatpush1.xpose.msra.mxu0 0.0
        %1071 = vmatprep.subr.mxu0 0.0
        %1072 = vmatpush1.xpose.msra.mxu0 0.0
        %1073 = vmatprep.subr.mxu0 0.0
        %1074 = vmatpush1.xpose.msra.mxu0 0.0
        %1075 = vmatprep.subr.mxu0 0.0
        %1076 = vmatpush1.xpose.msra.mxu0 0.0
        %1077 = vmatprep.subr.mxu0 0.0
        %1078 = vmatpush1.xpose.msra.mxu0 0.0
        %1079 = vmatprep.subr.mxu0 0.0
        %1080 = vmatpush1.xpose.msra.mxu0 0.0
        %1081 = vmatprep.subr.mxu0 0.0
        %1082 = vmatpush1.xpose.msra.mxu0 0.0
        %1083 = vmatprep.subr.mxu0 0.0
        %1084 = vmatpush1.xpose.msra.mxu0 0.0
        %1085 = vmatprep.subr.mxu0 0.0
        %1086 = vmatpush1.xpose.msra.mxu0 0.0
        %1087 = vmatprep.subr.mxu0 0.0
        %1088 = vmatpush1.xpose.msra.mxu0 %v1055
        %1089 = vmatprep.subr.mxu0 0.0
        %1090 = vmatpush2.xpose.msra.mxu0 0.0
        %1091 = vmatprep.subr.mxu0 0.0
        %1092 = vmatpush2.xpose.msra.mxu0 0.0
        %1093 = vmatprep.subr.mxu0 0.0
        %1094 = vmatpush2.xpose.msra.mxu0 0.0
        %1095 = vmatprep.subr.mxu0 0.0
        %1096 = vmatpush2.xpose.msra.mxu0 0.0
        %1097 = vmatprep.subr.mxu0 0.0
        %1098 = vmatpush2.xpose.msra.mxu0 0.0
        %1099 = vmatprep.subr.mxu0 0.0
        %1100 = vmatpush2.xpose.msra.mxu0 0.0
        %1101 = vmatprep.subr.mxu0 0.0
        %1102 = vmatpush2.xpose.msra.mxu0 0.0
        %1103 = vmatprep.subr.mxu0 0.0
        %1104 = vmatpush2.xpose.msra.mxu0 0.0
        %1105 = vmatprep.subr.mxu0 0.0
        %1106 = vmatpush2.xpose.msra.mxu0 0.0
        %1107 = vmatprep.subr.mxu0 0.0
        %1108 = vmatpush2.xpose.msra.mxu0 0.0
        %1109 = vmatprep.subr.mxu0 0.0
        %1110 = vmatpush2.xpose.msra.mxu0 0.0
        %1111 = vmatprep.subr.mxu0 0.0
        %1112 = vmatpush2.xpose.msra.mxu0 0.0
        %1113 = vmatprep.subr.mxu0 0.0
        %1114 = vmatpush2.xpose.msra.mxu0 0.0
        %1115 = vmatprep.subr.mxu0 0.0
        %1116 = vmatpush2.xpose.msra.mxu0 0.0
        %1117 = vmatprep.subr.mxu0 0.0
        %1118 = vmatpush2.xpose.msra.mxu0 0.0
        %1119 = vmatprep.subr.mxu0 0.0
        %1120 = vmatpush2.xpose.msra.mxu0 0.0
        %1121 = vmatprep.mubr.f32.mxu0 0.0
        %1122 = vmatmul.mubr.f32.gmra.mxu0 %v1052
        %v1123 = vpop.f32.mrf.mxu0
        %v1124 = vadd.f32 0.0, %v1123
        %v1125 = vpop.f32.mrf.mxu0
        %1126 = vdwg.mxu0
        %v1127 = vmul.f32 %v896, 0.25
        %v1128 = vmul.f32 %v972, 0.25
        %v1129 = vmul.f32 %v1048, 0.25
        %v1130 = vmul.f32 %v1124, 0.25
        %vm1131 = vcmask 64512
        %v1132 = vsel %vm1131, %v1127, -inf
        %1133 = vmax.xlane.f32.xlu0 %v1132
        %v1134 = vpop.xlane.xlu0 %1133
        %v1135 = vsel %vm1131, %v1128, -inf
        %1136 = vmax.xlane.f32.xlu0 %v1135
        %v1137 = vpop.xlane.xlu0 %1136
        %v1138 = vsel %vm1131, %v1129, -inf
        %1139 = vmax.xlane.f32.xlu0 %v1138
        %v1140 = vpop.xlane.xlu0 %1139
        %v1141 = vsel %vm1131, %v1130, -inf
        %1142 = vmax.xlane.f32.xlu0 %v1141
        %v1143 = vpop.xlane.xlu0 %1142
        %v1144 = vsub.f32 %v1127, %v1134
        %v1145 = vsub.f32 %v1128, %v1137
        %v1146 = vsub.f32 %v1129, %v1140
        %v1147 = vsub.f32 %v1130, %v1143
        %v1148 = vmul.f32 %v1144, 1.442695
        %v1149 = vpow.pop %v1148
        %v1150 = vmul.f32 %v1145, 1.442695
        %v1151 = vpow.pop %v1150
        %v1152 = vmul.f32 %v1146, 1.442695
        %v1153 = vpow.pop %v1152
        %v1154 = vmul.f32 %v1147, 1.442695
        %v1155 = vpow.pop %v1154
        %v1156 = vsel %vm1131, %v1149, 0.0
        %1157 = vadd.xlane.f32.xlu0 %v1156
        %v1158 = vpop.xlane.xlu0 %1157
        %v1159 = vsel %vm1131, %v1151, 0.0
        %1160 = vadd.xlane.f32.xlu0 %v1159
        %v1161 = vpop.xlane.xlu0 %1160
        %v1162 = vsel %vm1131, %v1153, 0.0
        %1163 = vadd.xlane.f32.xlu0 %v1162
        %v1164 = vpop.xlane.xlu0 %1163
        %v1165 = vsel %vm1131, %v1155, 0.0
        %1166 = vadd.xlane.f32.xlu0 %v1165
        %v1167 = vpop.xlane.xlu0 %1166
        %v1168 = vrcp.pop %v1158
        %v1169 = vmul.f32 %v1149, %v1168
        %v1170 = vrcp.pop %v1161
        %v1171 = vmul.f32 %v1151, %v1170
        %v1172 = vrcp.pop %v1164
        %v1173 = vmul.f32 %v1153, %v1172
        %v1174 = vrcp.pop %v1167
        %v1175 = vmul.f32 %v1155, %v1174
        %vm1176 = vcmp.ge.s32.totalorder %v809, 16
        %vm1177 = vcmp.lt.s32.totalorder %v809, 32
        %vm1178 = vmand %vm1176, %vm1177
        %v1179 = vsel %vm1178, 1, 0
        %vm1180 = vcmp.eq.s32.totalorder %v1179, 1
        %v1181 = vsel %vm1180, %v610, 0.0
        %v1182 = vsel %vm1180, %v615, 0.0
        %v1183 = vsel %vm1180, %v620, 0.0
        %v1184 = vsel %vm1180, %v625, 0.0
        %v1185 = vsel %vm1180, %v790, 0.0
        %v1186 = vsel %vm1180, %v795, 0.0
        %v1187 = vsel %vm1180, %v800, 0.0
        %v1188 = vsel %vm1180, %v805, 0.0
        %v1190 = vsel %vm453, %v1181, 0
        %1192 = vmatprep.subr.mxu0 0.0
        %1193 = vmatpush1.xpose.msra.mxu0 0.0
        %1194 = vmatprep.subr.mxu0 0.0
        %1195 = vmatpush1.xpose.msra.mxu0 0.0
        %1196 = vmatprep.subr.mxu0 0.0
        %1197 = vmatpush1.xpose.msra.mxu0 0.0
        %1198 = vmatprep.subr.mxu0 0.0
        %1199 = vmatpush1.xpose.msra.mxu0 0.0
        %1200 = vmatprep.subr.mxu0 0.0
        %1201 = vmatpush1.xpose.msra.mxu0 0.0
        %1202 = vmatprep.subr.mxu0 0.0
        %1203 = vmatpush1.xpose.msra.mxu0 0.0
        %1204 = vmatprep.subr.mxu0 0.0
        %1205 = vmatpush1.xpose.msra.mxu0 0.0
        %1206 = vmatprep.subr.mxu0 0.0
        %1207 = vmatpush1.xpose.msra.mxu0 0.0
        %1208 = vmatprep.subr.mxu0 0.0
        %1209 = vmatpush1.xpose.msra.mxu0 0.0
        %1210 = vmatprep.subr.mxu0 0.0
        %1211 = vmatpush1.xpose.msra.mxu0 0.0
        %1212 = vmatprep.subr.mxu0 0.0
        %1213 = vmatpush1.xpose.msra.mxu0 0.0
        %1214 = vmatprep.subr.mxu0 0.0
        %1215 = vmatpush1.xpose.msra.mxu0 0.0
        %1216 = vmatprep.subr.mxu0 0.0
        %1217 = vmatpush1.xpose.msra.mxu0 0.0
        %1218 = vmatprep.subr.mxu0 0.0
        %1219 = vmatpush1.xpose.msra.mxu0 0.0
        %1220 = vmatprep.subr.mxu0 0.0
        %1221 = vmatpush1.xpose.msra.mxu0 0.0
        %1222 = vmatprep.subr.mxu0 0.0
        %1223 = vmatpush1.xpose.msra.mxu0 %v827
        %1224 = vmatprep.subr.mxu0 0.0
        %1225 = vmatpush2.xpose.msra.mxu0 0.0
        %1226 = vmatprep.subr.mxu0 0.0
        %1227 = vmatpush2.xpose.msra.mxu0 0.0
        %1228 = vmatprep.subr.mxu0 0.0
        %1229 = vmatpush2.xpose.msra.mxu0 0.0
        %1230 = vmatprep.subr.mxu0 0.0
        %1231 = vmatpush2.xpose.msra.mxu0 0.0
        %1232 = vmatprep.subr.mxu0 0.0
        %1233 = vmatpush2.xpose.msra.mxu0 0.0
        %1234 = vmatprep.subr.mxu0 0.0
        %1235 = vmatpush2.xpose.msra.mxu0 0.0
        %1236 = vmatprep.subr.mxu0 0.0
        %1237 = vmatpush2.xpose.msra.mxu0 0.0
        %1238 = vmatprep.subr.mxu0 0.0
        %1239 = vmatpush2.xpose.msra.mxu0 0.0
        %1240 = vmatprep.subr.mxu0 0.0
        %1241 = vmatpush2.xpose.msra.mxu0 0.0
        %1242 = vmatprep.subr.mxu0 0.0
        %1243 = vmatpush2.xpose.msra.mxu0 0.0
        %1244 = vmatprep.subr.mxu0 0.0
        %1245 = vmatpush2.xpose.msra.mxu0 0.0
        %1246 = vmatprep.subr.mxu0 0.0
        %1247 = vmatpush2.xpose.msra.mxu0 0.0
        %1248 = vmatprep.subr.mxu0 0.0
        %1249 = vmatpush2.xpose.msra.mxu0 0.0
        %1250 = vmatprep.subr.mxu0 0.0
        %1251 = vmatpush2.xpose.msra.mxu0 0.0
        %1252 = vmatprep.subr.mxu0 0.0
        %1253 = vmatpush2.xpose.msra.mxu0 0.0
        %1254 = vmatprep.subr.mxu0 0.0
        %1255 = vmatpush2.xpose.msra.mxu0 0.0
        %1256 = vmatprep.mubr.f32.mxu0 0.0
        %1257 = vmatmul.mubr.f32.gmra.mxu0 %v1190
        %v1258 = vpop.f32.mrf.mxu0
        %v1259 = vadd.f32 0.0, %v1258
        %v1260 = vpop.f32.mrf.mxu0
        %1261 = vdwg.mxu0
        %v1263 = vsel %vm453, %v1182, 0
        %1265 = vmatprep.subr.mxu0 0.0
        %1266 = vmatpush1.xpose.msra.mxu0 0.0
        %1267 = vmatprep.subr.mxu0 0.0
        %1268 = vmatpush1.xpose.msra.mxu0 0.0
        %1269 = vmatprep.subr.mxu0 0.0
        %1270 = vmatpush1.xpose.msra.mxu0 0.0
        %1271 = vmatprep.subr.mxu0 0.0
        %1272 = vmatpush1.xpose.msra.mxu0 0.0
        %1273 = vmatprep.subr.mxu0 0.0
        %1274 = vmatpush1.xpose.msra.mxu0 0.0
        %1275 = vmatprep.subr.mxu0 0.0
        %1276 = vmatpush1.xpose.msra.mxu0 0.0
        %1277 = vmatprep.subr.mxu0 0.0
        %1278 = vmatpush1.xpose.msra.mxu0 0.0
        %1279 = vmatprep.subr.mxu0 0.0
        %1280 = vmatpush1.xpose.msra.mxu0 0.0
        %1281 = vmatprep.subr.mxu0 0.0
        %1282 = vmatpush1.xpose.msra.mxu0 0.0
        %1283 = vmatprep.subr.mxu0 0.0
        %1284 = vmatpush1.xpose.msra.mxu0 0.0
        %1285 = vmatprep.subr.mxu0 0.0
        %1286 = vmatpush1.xpose.msra.mxu0 0.0
        %1287 = vmatprep.subr.mxu0 0.0
        %1288 = vmatpush1.xpose.msra.mxu0 0.0
        %1289 = vmatprep.subr.mxu0 0.0
        %1290 = vmatpush1.xpose.msra.mxu0 0.0
        %1291 = vmatprep.subr.mxu0 0.0
        %1292 = vmatpush1.xpose.msra.mxu0 0.0
        %1293 = vmatprep.subr.mxu0 0.0
        %1294 = vmatpush1.xpose.msra.mxu0 0.0
        %1295 = vmatprep.subr.mxu0 0.0
        %1296 = vmatpush1.xpose.msra.mxu0 %v903
        %1297 = vmatprep.subr.mxu0 0.0
        %1298 = vmatpush2.xpose.msra.mxu0 0.0
        %1299 = vmatprep.subr.mxu0 0.0
        %1300 = vmatpush2.xpose.msra.mxu0 0.0
        %1301 = vmatprep.subr.mxu0 0.0
        %1302 = vmatpush2.xpose.msra.mxu0 0.0
        %1303 = vmatprep.subr.mxu0 0.0
        %1304 = vmatpush2.xpose.msra.mxu0 0.0
        %1305 = vmatprep.subr.mxu0 0.0
        %1306 = vmatpush2.xpose.msra.mxu0 0.0
        %1307 = vmatprep.subr.mxu0 0.0
        %1308 = vmatpush2.xpose.msra.mxu0 0.0
        %1309 = vmatprep.subr.mxu0 0.0
        %1310 = vmatpush2.xpose.msra.mxu0 0.0
        %1311 = vmatprep.subr.mxu0 0.0
        %1312 = vmatpush2.xpose.msra.mxu0 0.0
        %1313 = vmatprep.subr.mxu0 0.0
        %1314 = vmatpush2.xpose.msra.mxu0 0.0
        %1315 = vmatprep.subr.mxu0 0.0
        %1316 = vmatpush2.xpose.msra.mxu0 0.0
        %1317 = vmatprep.subr.mxu0 0.0
        %1318 = vmatpush2.xpose.msra.mxu0 0.0
        %1319 = vmatprep.subr.mxu0 0.0
        %1320 = vmatpush2.xpose.msra.mxu0 0.0
        %1321 = vmatprep.subr.mxu0 0.0
        %1322 = vmatpush2.xpose.msra.mxu0 0.0
        %1323 = vmatprep.subr.mxu0 0.0
        %1324 = vmatpush2.xpose.msra.mxu0 0.0
        %1325 = vmatprep.subr.mxu0 0.0
        %1326 = vmatpush2.xpose.msra.mxu0 0.0
        %1327 = vmatprep.subr.mxu0 0.0
        %1328 = vmatpush2.xpose.msra.mxu0 0.0
        %1329 = vmatprep.mubr.f32.mxu0 0.0
        %1330 = vmatmul.mubr.f32.gmra.mxu0 %v1263
        %v1331 = vpop.f32.mrf.mxu0
        %v1332 = vadd.f32 0.0, %v1331
        %v1333 = vpop.f32.mrf.mxu0
        %1334 = vdwg.mxu0
        %v1336 = vsel %vm453, %v1183, 0
        %1338 = vmatprep.subr.mxu0 0.0
        %1339 = vmatpush1.xpose.msra.mxu0 0.0
        %1340 = vmatprep.subr.mxu0 0.0
        %1341 = vmatpush1.xpose.msra.mxu0 0.0
        %1342 = vmatprep.subr.mxu0 0.0
        %1343 = vmatpush1.xpose.msra.mxu0 0.0
        %1344 = vmatprep.subr.mxu0 0.0
        %1345 = vmatpush1.xpose.msra.mxu0 0.0
        %1346 = vmatprep.subr.mxu0 0.0
        %1347 = vmatpush1.xpose.msra.mxu0 0.0
        %1348 = vmatprep.subr.mxu0 0.0
        %1349 = vmatpush1.xpose.msra.mxu0 0.0
        %1350 = vmatprep.subr.mxu0 0.0
        %1351 = vmatpush1.xpose.msra.mxu0 0.0
        %1352 = vmatprep.subr.mxu0 0.0
        %1353 = vmatpush1.xpose.msra.mxu0 0.0
        %1354 = vmatprep.subr.mxu0 0.0
        %1355 = vmatpush1.xpose.msra.mxu0 0.0
        %1356 = vmatprep.subr.mxu0 0.0
        %1357 = vmatpush1.xpose.msra.mxu0 0.0
        %1358 = vmatprep.subr.mxu0 0.0
        %1359 = vmatpush1.xpose.msra.mxu0 0.0
        %1360 = vmatprep.subr.mxu0 0.0
        %1361 = vmatpush1.xpose.msra.mxu0 0.0
        %1362 = vmatprep.subr.mxu0 0.0
        %1363 = vmatpush1.xpose.msra.mxu0 0.0
        %1364 = vmatprep.subr.mxu0 0.0
        %1365 = vmatpush1.xpose.msra.mxu0 0.0
        %1366 = vmatprep.subr.mxu0 0.0
        %1367 = vmatpush1.xpose.msra.mxu0 0.0
        %1368 = vmatprep.subr.mxu0 0.0
        %1369 = vmatpush1.xpose.msra.mxu0 %v979
        %1370 = vmatprep.subr.mxu0 0.0
        %1371 = vmatpush2.xpose.msra.mxu0 0.0
        %1372 = vmatprep.subr.mxu0 0.0
        %1373 = vmatpush2.xpose.msra.mxu0 0.0
        %1374 = vmatprep.subr.mxu0 0.0
        %1375 = vmatpush2.xpose.msra.mxu0 0.0
        %1376 = vmatprep.subr.mxu0 0.0
        %1377 = vmatpush2.xpose.msra.mxu0 0.0
        %1378 = vmatprep.subr.mxu0 0.0
        %1379 = vmatpush2.xpose.msra.mxu0 0.0
        %1380 = vmatprep.subr.mxu0 0.0
        %1381 = vmatpush2.xpose.msra.mxu0 0.0
        %1382 = vmatprep.subr.mxu0 0.0
        %1383 = vmatpush2.xpose.msra.mxu0 0.0
        %1384 = vmatprep.subr.mxu0 0.0
        %1385 = vmatpush2.xpose.msra.mxu0 0.0
        %1386 = vmatprep.subr.mxu0 0.0
        %1387 = vmatpush2.xpose.msra.mxu0 0.0
        %1388 = vmatprep.subr.mxu0 0.0
        %1389 = vmatpush2.xpose.msra.mxu0 0.0
        %1390 = vmatprep.subr.mxu0 0.0
        %1391 = vmatpush2.xpose.msra.mxu0 0.0
        %1392 = vmatprep.subr.mxu0 0.0
        %1393 = vmatpush2.xpose.msra.mxu0 0.0
        %1394 = vmatprep.subr.mxu0 0.0
        %1395 = vmatpush2.xpose.msra.mxu0 0.0
        %1396 = vmatprep.subr.mxu0 0.0
        %1397 = vmatpush2.xpose.msra.mxu0 0.0
        %1398 = vmatprep.subr.mxu0 0.0
        %1399 = vmatpush2.xpose.msra.mxu0 0.0
        %1400 = vmatprep.subr.mxu0 0.0
        %1401 = vmatpush2.xpose.msra.mxu0 0.0
        %1402 = vmatprep.mubr.f32.mxu0 0.0
        %1403 = vmatmul.mubr.f32.gmra.mxu0 %v1336
        %v1404 = vpop.f32.mrf.mxu0
        %v1405 = vadd.f32 0.0, %v1404
        %v1406 = vpop.f32.mrf.mxu0
        %1407 = vdwg.mxu0
        %v1409 = vsel %vm453, %v1184, 0
        %1411 = vmatprep.subr.mxu0 0.0
        %1412 = vmatpush1.xpose.msra.mxu0 0.0
        %1413 = vmatprep.subr.mxu0 0.0
        %1414 = vmatpush1.xpose.msra.mxu0 0.0
        %1415 = vmatprep.subr.mxu0 0.0
        %1416 = vmatpush1.xpose.msra.mxu0 0.0
        %1417 = vmatprep.subr.mxu0 0.0
        %1418 = vmatpush1.xpose.msra.mxu0 0.0
        %1419 = vmatprep.subr.mxu0 0.0
        %1420 = vmatpush1.xpose.msra.mxu0 0.0
        %1421 = vmatprep.subr.mxu0 0.0
        %1422 = vmatpush1.xpose.msra.mxu0 0.0
        %1423 = vmatprep.subr.mxu0 0.0
        %1424 = vmatpush1.xpose.msra.mxu0 0.0
        %1425 = vmatprep.subr.mxu0 0.0
        %1426 = vmatpush1.xpose.msra.mxu0 0.0
        %1427 = vmatprep.subr.mxu0 0.0
        %1428 = vmatpush1.xpose.msra.mxu0 0.0
        %1429 = vmatprep.subr.mxu0 0.0
        %1430 = vmatpush1.xpose.msra.mxu0 0.0
        %1431 = vmatprep.subr.mxu0 0.0
        %1432 = vmatpush1.xpose.msra.mxu0 0.0
        %1433 = vmatprep.subr.mxu0 0.0
        %1434 = vmatpush1.xpose.msra.mxu0 0.0
        %1435 = vmatprep.subr.mxu0 0.0
        %1436 = vmatpush1.xpose.msra.mxu0 0.0
        %1437 = vmatprep.subr.mxu0 0.0
        %1438 = vmatpush1.xpose.msra.mxu0 0.0
        %1439 = vmatprep.subr.mxu0 0.0
        %1440 = vmatpush1.xpose.msra.mxu0 0.0
        %1441 = vmatprep.subr.mxu0 0.0
        %1442 = vmatpush1.xpose.msra.mxu0 %v1055
        %1443 = vmatprep.subr.mxu0 0.0
        %1444 = vmatpush2.xpose.msra.mxu0 0.0
        %1445 = vmatprep.subr.mxu0 0.0
        %1446 = vmatpush2.xpose.msra.mxu0 0.0
        %1447 = vmatprep.subr.mxu0 0.0
        %1448 = vmatpush2.xpose.msra.mxu0 0.0
        %1449 = vmatprep.subr.mxu0 0.0
        %1450 = vmatpush2.xpose.msra.mxu0 0.0
        %1451 = vmatprep.subr.mxu0 0.0
        %1452 = vmatpush2.xpose.msra.mxu0 0.0
        %1453 = vmatprep.subr.mxu0 0.0
        %1454 = vmatpush2.xpose.msra.mxu0 0.0
        %1455 = vmatprep.subr.mxu0 0.0
        %1456 = vmatpush2.xpose.msra.mxu0 0.0
        %1457 = vmatprep.subr.mxu0 0.0
        %1458 = vmatpush2.xpose.msra.mxu0 0.0
        %1459 = vmatprep.subr.mxu0 0.0
        %1460 = vmatpush2.xpose.msra.mxu0 0.0
        %1461 = vmatprep.subr.mxu0 0.0
        %1462 = vmatpush2.xpose.msra.mxu0 0.0
        %1463 = vmatprep.subr.mxu0 0.0
        %1464 = vmatpush2.xpose.msra.mxu0 0.0
        %1465 = vmatprep.subr.mxu0 0.0
        %1466 = vmatpush2.xpose.msra.mxu0 0.0
        %1467 = vmatprep.subr.mxu0 0.0
        %1468 = vmatpush2.xpose.msra.mxu0 0.0
        %1469 = vmatprep.subr.mxu0 0.0
        %1470 = vmatpush2.xpose.msra.mxu0 0.0
        %1471 = vmatprep.subr.mxu0 0.0
        %1472 = vmatpush2.xpose.msra.mxu0 0.0
        %1473 = vmatprep.subr.mxu0 0.0
        %1474 = vmatpush2.xpose.msra.mxu0 0.0
        %1475 = vmatprep.mubr.f32.mxu0 0.0
        %1476 = vmatmul.mubr.f32.gmra.mxu0 %v1409
        %v1477 = vpop.f32.mrf.mxu0
        %v1478 = vadd.f32 0.0, %v1477
        %v1479 = vpop.f32.mrf.mxu0
        %1480 = vdwg.mxu0
        %v1481 = vmul.f32 %v1259, 0.25
        %v1482 = vmul.f32 %v1332, 0.25
        %v1483 = vmul.f32 %v1405, 0.25
        %v1484 = vmul.f32 %v1478, 0.25
        %v1485 = vsel %vm1131, %v1481, -inf
        %1486 = vmax.xlane.f32.xlu0 %v1485
        %v1487 = vpop.xlane.xlu0 %1486
        %v1488 = vsel %vm1131, %v1482, -inf
        %1489 = vmax.xlane.f32.xlu0 %v1488
        %v1490 = vpop.xlane.xlu0 %1489
        %v1491 = vsel %vm1131, %v1483, -inf
        %1492 = vmax.xlane.f32.xlu0 %v1491
        %v1493 = vpop.xlane.xlu0 %1492
        %v1494 = vsel %vm1131, %v1484, -inf
        %1495 = vmax.xlane.f32.xlu0 %v1494
        %v1496 = vpop.xlane.xlu0 %1495
        %v1497 = vsub.f32 %v1481, %v1487
        %v1498 = vsub.f32 %v1482, %v1490
        %v1499 = vsub.f32 %v1483, %v1493
        %v1500 = vsub.f32 %v1484, %v1496
        %v1501 = vmul.f32 %v1497, 1.442695
        %v1502 = vpow.pop %v1501
        %v1503 = vmul.f32 %v1498, 1.442695
        %v1504 = vpow.pop %v1503
        %v1505 = vmul.f32 %v1499, 1.442695
        %v1506 = vpow.pop %v1505
        %v1507 = vmul.f32 %v1500, 1.442695
        %v1508 = vpow.pop %v1507
        %v1509 = vsel %vm1131, %v1502, 0.0
        %1510 = vadd.xlane.f32.xlu0 %v1509
        %v1511 = vpop.xlane.xlu0 %1510
        %v1512 = vsel %vm1131, %v1504, 0.0
        %1513 = vadd.xlane.f32.xlu0 %v1512
        %v1514 = vpop.xlane.xlu0 %1513
        %v1515 = vsel %vm1131, %v1506, 0.0
        %1516 = vadd.xlane.f32.xlu0 %v1515
        %v1517 = vpop.xlane.xlu0 %1516
        %v1518 = vsel %vm1131, %v1508, 0.0
        %1519 = vadd.xlane.f32.xlu0 %v1518
        %v1520 = vpop.xlane.xlu0 %1519
        %v1521 = vrcp.pop %v1511
        %v1522 = vmul.f32 %v1502, %v1521
        %v1523 = vrcp.pop %v1514
        %v1524 = vmul.f32 %v1504, %v1523
        %v1525 = vrcp.pop %v1517
        %v1526 = vmul.f32 %v1506, %v1525
        %v1527 = vrcp.pop %v1520
        %v1528 = vmul.f32 %v1508, %v1527
        %v1530 = vsel %vm1131, %v1522, 0
        %1532 = vmatprep.subr.mxu0 0.0
        %1533 = vmatpush1.msra.mxu0 0.0
        %1534 = vmatprep.subr.mxu0 0.0
        %1535 = vmatpush1.msra.mxu0 0.0
        %1536 = vmatprep.subr.mxu0 0.0
        %1537 = vmatpush1.msra.mxu0 0.0
        %1538 = vmatprep.subr.mxu0 0.0
        %1539 = vmatpush1.msra.mxu0 0.0
        %1540 = vmatprep.subr.mxu0 0.0
        %1541 = vmatpush1.msra.mxu0 0.0
        %1542 = vmatprep.subr.mxu0 0.0
        %1543 = vmatpush1.msra.mxu0 0.0
        %1544 = vmatprep.subr.mxu0 0.0
        %1545 = vmatpush1.msra.mxu0 0.0
        %1546 = vmatprep.subr.mxu0 0.0
        %1547 = vmatpush1.msra.mxu0 0.0
        %1548 = vmatprep.subr.mxu0 0.0
        %1549 = vmatpush1.msra.mxu0 0.0
        %1550 = vmatprep.subr.mxu0 0.0
        %1551 = vmatpush1.msra.mxu0 0.0
        %1552 = vmatprep.subr.mxu0 0.0
        %1553 = vmatpush1.msra.mxu0 0.0
        %1554 = vmatprep.subr.mxu0 0.0
        %1555 = vmatpush1.msra.mxu0 0.0
        %1556 = vmatprep.subr.mxu0 0.0
        %1557 = vmatpush1.msra.mxu0 0.0
        %1558 = vmatprep.subr.mxu0 0.0
        %1559 = vmatpush1.msra.mxu0 0.0
        %1560 = vmatprep.subr.mxu0 0.0
        %1561 = vmatpush1.msra.mxu0 0.0
        %1562 = vmatprep.subr.mxu0 0.0
        %1563 = vmatpush1.msra.mxu0 %v1185
        %1564 = vmatprep.subr.mxu0 0.0
        %1565 = vmatpush2.msra.mxu0 0.0
        %1566 = vmatprep.subr.mxu0 0.0
        %1567 = vmatpush2.msra.mxu0 0.0
        %1568 = vmatprep.subr.mxu0 0.0
        %1569 = vmatpush2.msra.mxu0 0.0
        %1570 = vmatprep.subr.mxu0 0.0
        %1571 = vmatpush2.msra.mxu0 0.0
        %1572 = vmatprep.subr.mxu0 0.0
        %1573 = vmatpush2.msra.mxu0 0.0
        %1574 = vmatprep.subr.mxu0 0.0
        %1575 = vmatpush2.msra.mxu0 0.0
        %1576 = vmatprep.subr.mxu0 0.0
        %1577 = vmatpush2.msra.mxu0 0.0
        %1578 = vmatprep.subr.mxu0 0.0
        %1579 = vmatpush2.msra.mxu0 0.0
        %1580 = vmatprep.subr.mxu0 0.0
        %1581 = vmatpush2.msra.mxu0 0.0
        %1582 = vmatprep.subr.mxu0 0.0
        %1583 = vmatpush2.msra.mxu0 0.0
        %1584 = vmatprep.subr.mxu0 0.0
        %1585 = vmatpush2.msra.mxu0 0.0
        %1586 = vmatprep.subr.mxu0 0.0
        %1587 = vmatpush2.msra.mxu0 0.0
        %1588 = vmatprep.subr.mxu0 0.0
        %1589 = vmatpush2.msra.mxu0 0.0
        %1590 = vmatprep.subr.mxu0 0.0
        %1591 = vmatpush2.msra.mxu0 0.0
        %1592 = vmatprep.subr.mxu0 0.0
        %1593 = vmatpush2.msra.mxu0 0.0
        %1594 = vmatprep.subr.mxu0 0.0
        %1595 = vmatpush2.msra.mxu0 0.0
        %1596 = vmatprep.mubr.f32.mxu0 0.0
        %1597 = vmatmul.mubr.f32.gmra.mxu0 %v1530
        %v1598 = vpop.f32.mrf.mxu0
        %v1599 = vadd.f32 0.0, %v1598
        %v1600 = vpop.f32.mrf.mxu0
        %1601 = vdwg.mxu0
        %v1603 = vsel %vm1131, %v1524, 0
        %1605 = vmatprep.subr.mxu0 0.0
        %1606 = vmatpush1.msra.mxu0 0.0
        %1607 = vmatprep.subr.mxu0 0.0
        %1608 = vmatpush1.msra.mxu0 0.0
        %1609 = vmatprep.subr.mxu0 0.0
        %1610 = vmatpush1.msra.mxu0 0.0
        %1611 = vmatprep.subr.mxu0 0.0
        %1612 = vmatpush1.msra.mxu0 0.0
        %1613 = vmatprep.subr.mxu0 0.0
        %1614 = vmatpush1.msra.mxu0 0.0
        %1615 = vmatprep.subr.mxu0 0.0
        %1616 = vmatpush1.msra.mxu0 0.0
        %1617 = vmatprep.subr.mxu0 0.0
        %1618 = vmatpush1.msra.mxu0 0.0
        %1619 = vmatprep.subr.mxu0 0.0
        %1620 = vmatpush1.msra.mxu0 0.0
        %1621 = vmatprep.subr.mxu0 0.0
        %1622 = vmatpush1.msra.mxu0 0.0
        %1623 = vmatprep.subr.mxu0 0.0
        %1624 = vmatpush1.msra.mxu0 0.0
        %1625 = vmatprep.subr.mxu0 0.0
        %1626 = vmatpush1.msra.mxu0 0.0
        %1627 = vmatprep.subr.mxu0 0.0
        %1628 = vmatpush1.msra.mxu0 0.0
        %1629 = vmatprep.subr.mxu0 0.0
        %1630 = vmatpush1.msra.mxu0 0.0
        %1631 = vmatprep.subr.mxu0 0.0
        %1632 = vmatpush1.msra.mxu0 0.0
        %1633 = vmatprep.subr.mxu0 0.0
        %1634 = vmatpush1.msra.mxu0 0.0
        %1635 = vmatprep.subr.mxu0 0.0
        %1636 = vmatpush1.msra.mxu0 %v1186
        %1637 = vmatprep.subr.mxu0 0.0
        %1638 = vmatpush2.msra.mxu0 0.0
        %1639 = vmatprep.subr.mxu0 0.0
        %1640 = vmatpush2.msra.mxu0 0.0
        %1641 = vmatprep.subr.mxu0 0.0
        %1642 = vmatpush2.msra.mxu0 0.0
        %1643 = vmatprep.subr.mxu0 0.0
        %1644 = vmatpush2.msra.mxu0 0.0
        %1645 = vmatprep.subr.mxu0 0.0
        %1646 = vmatpush2.msra.mxu0 0.0
        %1647 = vmatprep.subr.mxu0 0.0
        %1648 = vmatpush2.msra.mxu0 0.0
        %1649 = vmatprep.subr.mxu0 0.0
        %1650 = vmatpush2.msra.mxu0 0.0
        %1651 = vmatprep.subr.mxu0 0.0
        %1652 = vmatpush2.msra.mxu0 0.0
        %1653 = vmatprep.subr.mxu0 0.0
        %1654 = vmatpush2.msra.mxu0 0.0
        %1655 = vmatprep.subr.mxu0 0.0
        %1656 = vmatpush2.msra.mxu0 0.0
        %1657 = vmatprep.subr.mxu0 0.0
        %1658 = vmatpush2.msra.mxu0 0.0
        %1659 = vmatprep.subr.mxu0 0.0
        %1660 = vmatpush2.msra.mxu0 0.0
        %1661 = vmatprep.subr.mxu0 0.0
        %1662 = vmatpush2.msra.mxu0 0.0
        %1663 = vmatprep.subr.mxu0 0.0
        %1664 = vmatpush2.msra.mxu0 0.0
        %1665 = vmatprep.subr.mxu0 0.0
        %1666 = vmatpush2.msra.mxu0 0.0
        %1667 = vmatprep.subr.mxu0 0.0
        %1668 = vmatpush2.msra.mxu0 0.0
        %1669 = vmatprep.mubr.f32.mxu0 0.0
        %1670 = vmatmul.mubr.f32.gmra.mxu0 %v1603
        %v1671 = vpop.f32.mrf.mxu0
        %v1672 = vadd.f32 0.0, %v1671
        %v1673 = vpop.f32.mrf.mxu0
        %1674 = vdwg.mxu0
        %v1676 = vsel %vm1131, %v1526, 0
        %1678 = vmatprep.subr.mxu0 0.0
        %1679 = vmatpush1.msra.mxu0 0.0
        %1680 = vmatprep.subr.mxu0 0.0
        %1681 = vmatpush1.msra.mxu0 0.0
        %1682 = vmatprep.subr.mxu0 0.0
        %1683 = vmatpush1.msra.mxu0 0.0
        %1684 = vmatprep.subr.mxu0 0.0
        %1685 = vmatpush1.msra.mxu0 0.0
        %1686 = vmatprep.subr.mxu0 0.0
        %1687 = vmatpush1.msra.mxu0 0.0
        %1688 = vmatprep.subr.mxu0 0.0
        %1689 = vmatpush1.msra.mxu0 0.0
        %1690 = vmatprep.subr.mxu0 0.0
        %1691 = vmatpush1.msra.mxu0 0.0
        %1692 = vmatprep.subr.mxu0 0.0
        %1693 = vmatpush1.msra.mxu0 0.0
        %1694 = vmatprep.subr.mxu0 0.0
        %1695 = vmatpush1.msra.mxu0 0.0
        %1696 = vmatprep.subr.mxu0 0.0
        %1697 = vmatpush1.msra.mxu0 0.0
        %1698 = vmatprep.subr.mxu0 0.0
        %1699 = vmatpush1.msra.mxu0 0.0
        %1700 = vmatprep.subr.mxu0 0.0
        %1701 = vmatpush1.msra.mxu0 0.0
        %1702 = vmatprep.subr.mxu0 0.0
        %1703 = vmatpush1.msra.mxu0 0.0
        %1704 = vmatprep.subr.mxu0 0.0
        %1705 = vmatpush1.msra.mxu0 0.0
        %1706 = vmatprep.subr.mxu0 0.0
        %1707 = vmatpush1.msra.mxu0 0.0
        %1708 = vmatprep.subr.mxu0 0.0
        %1709 = vmatpush1.msra.mxu0 %v1187
        %1710 = vmatprep.subr.mxu0 0.0
        %1711 = vmatpush2.msra.mxu0 0.0
        %1712 = vmatprep.subr.mxu0 0.0
        %1713 = vmatpush2.msra.mxu0 0.0
        %1714 = vmatprep.subr.mxu0 0.0
        %1715 = vmatpush2.msra.mxu0 0.0
        %1716 = vmatprep.subr.mxu0 0.0
        %1717 = vmatpush2.msra.mxu0 0.0
        %1718 = vmatprep.subr.mxu0 0.0
        %1719 = vmatpush2.msra.mxu0 0.0
        %1720 = vmatprep.subr.mxu0 0.0
        %1721 = vmatpush2.msra.mxu0 0.0
        %1722 = vmatprep.subr.mxu0 0.0
        %1723 = vmatpush2.msra.mxu0 0.0
        %1724 = vmatprep.subr.mxu0 0.0
        %1725 = vmatpush2.msra.mxu0 0.0
        %1726 = vmatprep.subr.mxu0 0.0
        %1727 = vmatpush2.msra.mxu0 0.0
        %1728 = vmatprep.subr.mxu0 0.0
        %1729 = vmatpush2.msra.mxu0 0.0
        %1730 = vmatprep.subr.mxu0 0.0
        %1731 = vmatpush2.msra.mxu0 0.0
        %1732 = vmatprep.subr.mxu0 0.0
        %1733 = vmatpush2.msra.mxu0 0.0
        %1734 = vmatprep.subr.mxu0 0.0
        %1735 = vmatpush2.msra.mxu0 0.0
        %1736 = vmatprep.subr.mxu0 0.0
        %1737 = vmatpush2.msra.mxu0 0.0
        %1738 = vmatprep.subr.mxu0 0.0
        %1739 = vmatpush2.msra.mxu0 0.0
        %1740 = vmatprep.subr.mxu0 0.0
        %1741 = vmatpush2.msra.mxu0 0.0
        %1742 = vmatprep.mubr.f32.mxu0 0.0
        %1743 = vmatmul.mubr.f32.gmra.mxu0 %v1676
        %v1744 = vpop.f32.mrf.mxu0
        %v1745 = vadd.f32 0.0, %v1744
        %v1746 = vpop.f32.mrf.mxu0
        %1747 = vdwg.mxu0
        %v1749 = vsel %vm1131, %v1528, 0
        %1751 = vmatprep.subr.mxu0 0.0
        %1752 = vmatpush1.msra.mxu0 0.0
        %1753 = vmatprep.subr.mxu0 0.0
        %1754 = vmatpush1.msra.mxu0 0.0
        %1755 = vmatprep.subr.mxu0 0.0
        %1756 = vmatpush1.msra.mxu0 0.0
        %1757 = vmatprep.subr.mxu0 0.0
        %1758 = vmatpush1.msra.mxu0 0.0
        %1759 = vmatprep.subr.mxu0 0.0
        %1760 = vmatpush1.msra.mxu0 0.0
        %1761 = vmatprep.subr.mxu0 0.0
        %1762 = vmatpush1.msra.mxu0 0.0
        %1763 = vmatprep.subr.mxu0 0.0
        %1764 = vmatpush1.msra.mxu0 0.0
        %1765 = vmatprep.subr.mxu0 0.0
        %1766 = vmatpush1.msra.mxu0 0.0
        %1767 = vmatprep.subr.mxu0 0.0
        %1768 = vmatpush1.msra.mxu0 0.0
        %1769 = vmatprep.subr.mxu0 0.0
        %1770 = vmatpush1.msra.mxu0 0.0
        %1771 = vmatprep.subr.mxu0 0.0
        %1772 = vmatpush1.msra.mxu0 0.0
        %1773 = vmatprep.subr.mxu0 0.0
        %1774 = vmatpush1.msra.mxu0 0.0
        %1775 = vmatprep.subr.mxu0 0.0
        %1776 = vmatpush1.msra.mxu0 0.0
        %1777 = vmatprep.subr.mxu0 0.0
        %1778 = vmatpush1.msra.mxu0 0.0
        %1779 = vmatprep.subr.mxu0 0.0
        %1780 = vmatpush1.msra.mxu0 0.0
        %1781 = vmatprep.subr.mxu0 0.0
        %1782 = vmatpush1.msra.mxu0 %v1188
        %1783 = vmatprep.subr.mxu0 0.0
        %1784 = vmatpush2.msra.mxu0 0.0
        %1785 = vmatprep.subr.mxu0 0.0
        %1786 = vmatpush2.msra.mxu0 0.0
        %1787 = vmatprep.subr.mxu0 0.0
        %1788 = vmatpush2.msra.mxu0 0.0
        %1789 = vmatprep.subr.mxu0 0.0
        %1790 = vmatpush2.msra.mxu0 0.0
        %1791 = vmatprep.subr.mxu0 0.0
        %1792 = vmatpush2.msra.mxu0 0.0
        %1793 = vmatprep.subr.mxu0 0.0
        %1794 = vmatpush2.msra.mxu0 0.0
        %1795 = vmatprep.subr.mxu0 0.0
        %1796 = vmatpush2.msra.mxu0 0.0
        %1797 = vmatprep.subr.mxu0 0.0
        %1798 = vmatpush2.msra.mxu0 0.0
        %1799 = vmatprep.subr.mxu0 0.0
        %1800 = vmatpush2.msra.mxu0 0.0
        %1801 = vmatprep.subr.mxu0 0.0
        %1802 = vmatpush2.msra.mxu0 0.0
        %1803 = vmatprep.subr.mxu0 0.0
        %1804 = vmatpush2.msra.mxu0 0.0
        %1805 = vmatprep.subr.mxu0 0.0
        %1806 = vmatpush2.msra.mxu0 0.0
        %1807 = vmatprep.subr.mxu0 0.0
        %1808 = vmatpush2.msra.mxu0 0.0
        %1809 = vmatprep.subr.mxu0 0.0
        %1810 = vmatpush2.msra.mxu0 0.0
        %1811 = vmatprep.subr.mxu0 0.0
        %1812 = vmatpush2.msra.mxu0 0.0
        %1813 = vmatprep.subr.mxu0 0.0
        %1814 = vmatpush2.msra.mxu0 0.0
        %1815 = vmatprep.mubr.f32.mxu0 0.0
        %1816 = vmatmul.mubr.f32.gmra.mxu0 %v1749
        %v1817 = vpop.f32.mrf.mxu0
        %v1818 = vadd.f32 0.0, %v1817
        %v1819 = vpop.f32.mrf.mxu0
        %1820 = vdwg.mxu0
        %v1822 = vsel %vm1131, %v1169, 0
        %1824 = vmatprep.subr.mxu0 0.0
        %1825 = vmatpush1.msra.mxu0 0.0
        %1826 = vmatprep.subr.mxu0 0.0
        %1827 = vmatpush1.msra.mxu0 0.0
        %1828 = vmatprep.subr.mxu0 0.0
        %1829 = vmatpush1.msra.mxu0 0.0
        %1830 = vmatprep.subr.mxu0 0.0
        %1831 = vmatpush1.msra.mxu0 0.0
        %1832 = vmatprep.subr.mxu0 0.0
        %1833 = vmatpush1.msra.mxu0 0.0
        %1834 = vmatprep.subr.mxu0 0.0
        %1835 = vmatpush1.msra.mxu0 0.0
        %1836 = vmatprep.subr.mxu0 0.0
        %1837 = vmatpush1.msra.mxu0 0.0
        %1838 = vmatprep.subr.mxu0 0.0
        %1839 = vmatpush1.msra.mxu0 0.0
        %1840 = vmatprep.subr.mxu0 0.0
        %1841 = vmatpush1.msra.mxu0 0.0
        %1842 = vmatprep.subr.mxu0 0.0
        %1843 = vmatpush1.msra.mxu0 0.0
        %1844 = vmatprep.subr.mxu0 0.0
        %1845 = vmatpush1.msra.mxu0 0.0
        %1846 = vmatprep.subr.mxu0 0.0
        %1847 = vmatpush1.msra.mxu0 0.0
        %1848 = vmatprep.subr.mxu0 0.0
        %1849 = vmatpush1.msra.mxu0 0.0
        %1850 = vmatprep.subr.mxu0 0.0
        %1851 = vmatpush1.msra.mxu0 0.0
        %1852 = vmatprep.subr.mxu0 0.0
        %1853 = vmatpush1.msra.mxu0 0.0
        %1854 = vmatprep.subr.mxu0 0.0
        %1855 = vmatpush1.msra.mxu0 %v819
        %1856 = vmatprep.subr.mxu0 0.0
        %1857 = vmatpush2.msra.mxu0 0.0
        %1858 = vmatprep.subr.mxu0 0.0
        %1859 = vmatpush2.msra.mxu0 0.0
        %1860 = vmatprep.subr.mxu0 0.0
        %1861 = vmatpush2.msra.mxu0 0.0
        %1862 = vmatprep.subr.mxu0 0.0
        %1863 = vmatpush2.msra.mxu0 0.0
        %1864 = vmatprep.subr.mxu0 0.0
        %1865 = vmatpush2.msra.mxu0 0.0
        %1866 = vmatprep.subr.mxu0 0.0
        %1867 = vmatpush2.msra.mxu0 0.0
        %1868 = vmatprep.subr.mxu0 0.0
        %1869 = vmatpush2.msra.mxu0 0.0
        %1870 = vmatprep.subr.mxu0 0.0
        %1871 = vmatpush2.msra.mxu0 0.0
        %1872 = vmatprep.subr.mxu0 0.0
        %1873 = vmatpush2.msra.mxu0 0.0
        %1874 = vmatprep.subr.mxu0 0.0
        %1875 = vmatpush2.msra.mxu0 0.0
        %1876 = vmatprep.subr.mxu0 0.0
        %1877 = vmatpush2.msra.mxu0 0.0
        %1878 = vmatprep.subr.mxu0 0.0
        %1879 = vmatpush2.msra.mxu0 0.0
        %1880 = vmatprep.subr.mxu0 0.0
        %1881 = vmatpush2.msra.mxu0 0.0
        %1882 = vmatprep.subr.mxu0 0.0
        %1883 = vmatpush2.msra.mxu0 0.0
        %1884 = vmatprep.subr.mxu0 0.0
        %1885 = vmatpush2.msra.mxu0 0.0
        %1886 = vmatprep.subr.mxu0 0.0
        %1887 = vmatpush2.msra.mxu0 0.0
        %1888 = vmatprep.mubr.f32.mxu0 0.0
        %1889 = vmatmul.mubr.f32.gmra.mxu0 %v1822
        %v1890 = vpop.f32.mrf.mxu0
        %v1891 = vadd.f32 %v1599, %v1890
        %v1892 = vpop.f32.mrf.mxu0
        %1893 = vdwg.mxu0
        %v1895 = vsel %vm1131, %v1171, 0
        %1897 = vmatprep.subr.mxu0 0.0
        %1898 = vmatpush1.msra.mxu0 0.0
        %1899 = vmatprep.subr.mxu0 0.0
        %1900 = vmatpush1.msra.mxu0 0.0
        %1901 = vmatprep.subr.mxu0 0.0
        %1902 = vmatpush1.msra.mxu0 0.0
        %1903 = vmatprep.subr.mxu0 0.0
        %1904 = vmatpush1.msra.mxu0 0.0
        %1905 = vmatprep.subr.mxu0 0.0
        %1906 = vmatpush1.msra.mxu0 0.0
        %1907 = vmatprep.subr.mxu0 0.0
        %1908 = vmatpush1.msra.mxu0 0.0
        %1909 = vmatprep.subr.mxu0 0.0
        %1910 = vmatpush1.msra.mxu0 0.0
        %1911 = vmatprep.subr.mxu0 0.0
        %1912 = vmatpush1.msra.mxu0 0.0
        %1913 = vmatprep.subr.mxu0 0.0
        %1914 = vmatpush1.msra.mxu0 0.0
        %1915 = vmatprep.subr.mxu0 0.0
        %1916 = vmatpush1.msra.mxu0 0.0
        %1917 = vmatprep.subr.mxu0 0.0
        %1918 = vmatpush1.msra.mxu0 0.0
        %1919 = vmatprep.subr.mxu0 0.0
        %1920 = vmatpush1.msra.mxu0 0.0
        %1921 = vmatprep.subr.mxu0 0.0
        %1922 = vmatpush1.msra.mxu0 0.0
        %1923 = vmatprep.subr.mxu0 0.0
        %1924 = vmatpush1.msra.mxu0 0.0
        %1925 = vmatprep.subr.mxu0 0.0
        %1926 = vmatpush1.msra.mxu0 0.0
        %1927 = vmatprep.subr.mxu0 0.0
        %1928 = vmatpush1.msra.mxu0 %v820
        %1929 = vmatprep.subr.mxu0 0.0
        %1930 = vmatpush2.msra.mxu0 0.0
        %1931 = vmatprep.subr.mxu0 0.0
        %1932 = vmatpush2.msra.mxu0 0.0
        %1933 = vmatprep.subr.mxu0 0.0
        %1934 = vmatpush2.msra.mxu0 0.0
        %1935 = vmatprep.subr.mxu0 0.0
        %1936 = vmatpush2.msra.mxu0 0.0
        %1937 = vmatprep.subr.mxu0 0.0
        %1938 = vmatpush2.msra.mxu0 0.0
        %1939 = vmatprep.subr.mxu0 0.0
        %1940 = vmatpush2.msra.mxu0 0.0
        %1941 = vmatprep.subr.mxu0 0.0
        %1942 = vmatpush2.msra.mxu0 0.0
        %1943 = vmatprep.subr.mxu0 0.0
        %1944 = vmatpush2.msra.mxu0 0.0
        %1945 = vmatprep.subr.mxu0 0.0
        %1946 = vmatpush2.msra.mxu0 0.0
        %1947 = vmatprep.subr.mxu0 0.0
        %1948 = vmatpush2.msra.mxu0 0.0
        %1949 = vmatprep.subr.mxu0 0.0
        %1950 = vmatpush2.msra.mxu0 0.0
        %1951 = vmatprep.subr.mxu0 0.0
        %1952 = vmatpush2.msra.mxu0 0.0
        %1953 = vmatprep.subr.mxu0 0.0
        %1954 = vmatpush2.msra.mxu0 0.0
        %1955 = vmatprep.subr.mxu0 0.0
        %1956 = vmatpush2.msra.mxu0 0.0
        %1957 = vmatprep.subr.mxu0 0.0
        %1958 = vmatpush2.msra.mxu0 0.0
        %1959 = vmatprep.subr.mxu0 0.0
        %1960 = vmatpush2.msra.mxu0 0.0
        %1961 = vmatprep.mubr.f32.mxu0 0.0
        %1962 = vmatmul.mubr.f32.gmra.mxu0 %v1895
        %v1963 = vpop.f32.mrf.mxu0
        %v1964 = vadd.f32 %v1672, %v1963
        %v1965 = vpop.f32.mrf.mxu0
        %1966 = vdwg.mxu0
        %v1968 = vsel %vm1131, %v1173, 0
        %1970 = vmatprep.subr.mxu0 0.0
        %1971 = vmatpush1.msra.mxu0 0.0
        %1972 = vmatprep.subr.mxu0 0.0
        %1973 = vmatpush1.msra.mxu0 0.0
        %1974 = vmatprep.subr.mxu0 0.0
        %1975 = vmatpush1.msra.mxu0 0.0
        %1976 = vmatprep.subr.mxu0 0.0
        %1977 = vmatpush1.msra.mxu0 0.0
        %1978 = vmatprep.subr.mxu0 0.0
        %1979 = vmatpush1.msra.mxu0 0.0
        %1980 = vmatprep.subr.mxu0 0.0
        %1981 = vmatpush1.msra.mxu0 0.0
        %1982 = vmatprep.subr.mxu0 0.0
        %1983 = vmatpush1.msra.mxu0 0.0
        %1984 = vmatprep.subr.mxu0 0.0
        %1985 = vmatpush1.msra.mxu0 0.0
        %1986 = vmatprep.subr.mxu0 0.0
        %1987 = vmatpush1.msra.mxu0 0.0
        %1988 = vmatprep.subr.mxu0 0.0
        %1989 = vmatpush1.msra.mxu0 0.0
        %1990 = vmatprep.subr.mxu0 0.0
        %1991 = vmatpush1.msra.mxu0 0.0
        %1992 = vmatprep.subr.mxu0 0.0
        %1993 = vmatpush1.msra.mxu0 0.0
        %1994 = vmatprep.subr.mxu0 0.0
        %1995 = vmatpush1.msra.mxu0 0.0
        %1996 = vmatprep.subr.mxu0 0.0
        %1997 = vmatpush1.msra.mxu0 0.0
        %1998 = vmatprep.subr.mxu0 0.0
        %1999 = vmatpush1.msra.mxu0 0.0
        %2000 = vmatprep.subr.mxu0 0.0
        %2001 = vmatpush1.msra.mxu0 %v821
        %2002 = vmatprep.subr.mxu0 0.0
        %2003 = vmatpush2.msra.mxu0 0.0
        %2004 = vmatprep.subr.mxu0 0.0
        %2005 = vmatpush2.msra.mxu0 0.0
        %2006 = vmatprep.subr.mxu0 0.0
        %2007 = vmatpush2.msra.mxu0 0.0
        %2008 = vmatprep.subr.mxu0 0.0
        %2009 = vmatpush2.msra.mxu0 0.0
        %2010 = vmatprep.subr.mxu0 0.0
        %2011 = vmatpush2.msra.mxu0 0.0
        %2012 = vmatprep.subr.mxu0 0.0
        %2013 = vmatpush2.msra.mxu0 0.0
        %2014 = vmatprep.subr.mxu0 0.0
        %2015 = vmatpush2.msra.mxu0 0.0
        %2016 = vmatprep.subr.mxu0 0.0
        %2017 = vmatpush2.msra.mxu0 0.0
        %2018 = vmatprep.subr.mxu0 0.0
        %2019 = vmatpush2.msra.mxu0 0.0
        %2020 = vmatprep.subr.mxu0 0.0
        %2021 = vmatpush2.msra.mxu0 0.0
        %2022 = vmatprep.subr.mxu0 0.0
        %2023 = vmatpush2.msra.mxu0 0.0
        %2024 = vmatprep.subr.mxu0 0.0
        %2025 = vmatpush2.msra.mxu0 0.0
        %2026 = vmatprep.subr.mxu0 0.0
        %2027 = vmatpush2.msra.mxu0 0.0
        %2028 = vmatprep.subr.mxu0 0.0
        %2029 = vmatpush2.msra.mxu0 0.0
        %2030 = vmatprep.subr.mxu0 0.0
        %2031 = vmatpush2.msra.mxu0 0.0
        %2032 = vmatprep.subr.mxu0 0.0
        %2033 = vmatpush2.msra.mxu0 0.0
        %2034 = vmatprep.mubr.f32.mxu0 0.0
        %2035 = vmatmul.mubr.f32.gmra.mxu0 %v1968
        %v2036 = vpop.f32.mrf.mxu0
        %v2037 = vadd.f32 %v1745, %v2036
        %v2038 = vpop.f32.mrf.mxu0
        %2039 = vdwg.mxu0
        %v2041 = vsel %vm1131, %v1175, 0
        %2043 = vmatprep.subr.mxu0 0.0
        %2044 = vmatpush1.msra.mxu0 0.0
        %2045 = vmatprep.subr.mxu0 0.0
        %2046 = vmatpush1.msra.mxu0 0.0
        %2047 = vmatprep.subr.mxu0 0.0
        %2048 = vmatpush1.msra.mxu0 0.0
        %2049 = vmatprep.subr.mxu0 0.0
        %2050 = vmatpush1.msra.mxu0 0.0
        %2051 = vmatprep.subr.mxu0 0.0
        %2052 = vmatpush1.msra.mxu0 0.0
        %2053 = vmatprep.subr.mxu0 0.0
        %2054 = vmatpush1.msra.mxu0 0.0
        %2055 = vmatprep.subr.mxu0 0.0
        %2056 = vmatpush1.msra.mxu0 0.0
        %2057 = vmatprep.subr.mxu0 0.0
        %2058 = vmatpush1.msra.mxu0 0.0
        %2059 = vmatprep.subr.mxu0 0.0
        %2060 = vmatpush1.msra.mxu0 0.0
        %2061 = vmatprep.subr.mxu0 0.0
        %2062 = vmatpush1.msra.mxu0 0.0
        %2063 = vmatprep.subr.mxu0 0.0
        %2064 = vmatpush1.msra.mxu0 0.0
        %2065 = vmatprep.subr.mxu0 0.0
        %2066 = vmatpush1.msra.mxu0 0.0
        %2067 = vmatprep.subr.mxu0 0.0
        %2068 = vmatpush1.msra.mxu0 0.0
        %2069 = vmatprep.subr.mxu0 0.0
        %2070 = vmatpush1.msra.mxu0 0.0
        %2071 = vmatprep.subr.mxu0 0.0
        %2072 = vmatpush1.msra.mxu0 0.0
        %2073 = vmatprep.subr.mxu0 0.0
        %2074 = vmatpush1.msra.mxu0 %v822
        %2075 = vmatprep.subr.mxu0 0.0
        %2076 = vmatpush2.msra.mxu0 0.0
        %2077 = vmatprep.subr.mxu0 0.0
        %2078 = vmatpush2.msra.mxu0 0.0
        %2079 = vmatprep.subr.mxu0 0.0
        %2080 = vmatpush2.msra.mxu0 0.0
        %2081 = vmatprep.subr.mxu0 0.0
        %2082 = vmatpush2.msra.mxu0 0.0
        %2083 = vmatprep.subr.mxu0 0.0
        %2084 = vmatpush2.msra.mxu0 0.0
        %2085 = vmatprep.subr.mxu0 0.0
        %2086 = vmatpush2.msra.mxu0 0.0
        %2087 = vmatprep.subr.mxu0 0.0
        %2088 = vmatpush2.msra.mxu0 0.0
        %2089 = vmatprep.subr.mxu0 0.0
        %2090 = vmatpush2.msra.mxu0 0.0
        %2091 = vmatprep.subr.mxu0 0.0
        %2092 = vmatpush2.msra.mxu0 0.0
        %2093 = vmatprep.subr.mxu0 0.0
        %2094 = vmatpush2.msra.mxu0 0.0
        %2095 = vmatprep.subr.mxu0 0.0
        %2096 = vmatpush2.msra.mxu0 0.0
        %2097 = vmatprep.subr.mxu0 0.0
        %2098 = vmatpush2.msra.mxu0 0.0
        %2099 = vmatprep.subr.mxu0 0.0
        %2100 = vmatpush2.msra.mxu0 0.0
        %2101 = vmatprep.subr.mxu0 0.0
        %2102 = vmatpush2.msra.mxu0 0.0
        %2103 = vmatprep.subr.mxu0 0.0
        %2104 = vmatpush2.msra.mxu0 0.0
        %2105 = vmatprep.subr.mxu0 0.0
        %2106 = vmatpush2.msra.mxu0 0.0
        %2107 = vmatprep.mubr.f32.mxu0 0.0
        %2108 = vmatmul.mubr.f32.gmra.mxu0 %v2041
        %v2109 = vpop.f32.mrf.mxu0
        %v2110 = vadd.f32 %v1818, %v2109
        %v2111 = vpop.f32.mrf.mxu0
        %2112 = vdwg.mxu0
        %v2113 = vld [vmem:[#allocation2] sm:$0xff]
        %v2114 = vld [vmem:[#allocation2 + $0x8] sm:$0xff]
        %v2115 = vld [vmem:[#allocation2 + $0x10] sm:$0xff]
        %v2116 = vld [vmem:[#allocation2 + $0x18] sm:$0xff]
        %v2117 = vld [vmem:[%s5] sm:$0x1]
        %v2119 = vlaneseq
        %v2120 = vshrl.u32 %v2119, 7
        %v2121 = vsub.s32 0, %v2120
        %v2122 = vrot.slane %v2117, %v2121
        %v2125 = vsel %vm453, %v1891, 0
        %v2128 = vsel %vm453, %v1964, 0
        %v2131 = vsel %vm453, %v2037, 0
        %v2134 = vsel %vm453, %v2110, 0
        %2136 = vmatprep.subr.mxu0 0.0
        %2137 = vmatpush1.msra.mxu0 0.0
        %2138 = vmatprep.subr.mxu0 0.0
        %2139 = vmatpush1.msra.mxu0 0.0
        %2140 = vmatprep.subr.mxu0 0.0
        %2141 = vmatpush1.msra.mxu0 0.0
        %2142 = vmatprep.subr.mxu0 0.0
        %2143 = vmatpush1.msra.mxu0 0.0
        %2144 = vmatprep.subr.mxu0 0.0
        %2145 = vmatpush1.msra.mxu0 0.0
        %2146 = vmatprep.subr.mxu0 0.0
        %2147 = vmatpush1.msra.mxu0 0.0
        %2148 = vmatprep.subr.mxu0 0.0
        %2149 = vmatpush1.msra.mxu0 0.0
        %2150 = vmatprep.subr.mxu0 0.0
        %2151 = vmatpush1.msra.mxu0 0.0
        %2152 = vmatprep.subr.mxu0 0.0
        %2153 = vmatpush1.msra.mxu0 0.0
        %2154 = vmatprep.subr.mxu0 0.0
        %2155 = vmatpush1.msra.mxu0 0.0
        %2156 = vmatprep.subr.mxu0 0.0
        %2157 = vmatpush1.msra.mxu0 0.0
        %2158 = vmatprep.subr.mxu0 0.0
        %2159 = vmatpush1.msra.mxu0 0.0
        %2160 = vmatprep.subr.mxu0 0.0
        %2161 = vmatpush1.msra.mxu0 %v2116
        %2162 = vmatprep.subr.mxu0 0.0
        %2163 = vmatpush1.msra.mxu0 %v2115
        %2164 = vmatprep.subr.mxu0 0.0
        %2165 = vmatpush1.msra.mxu0 %v2114
        %2166 = vmatprep.subr.mxu0 0.0
        %2167 = vmatpush1.msra.mxu0 %v2113
        %2168 = vmatprep.subr.mxu0 0.0
        %2169 = vmatpush2.msra.mxu0 0.0
        %2170 = vmatprep.subr.mxu0 0.0
        %2171 = vmatpush2.msra.mxu0 0.0
        %2172 = vmatprep.subr.mxu0 0.0
        %2173 = vmatpush2.msra.mxu0 0.0
        %2174 = vmatprep.subr.mxu0 0.0
        %2175 = vmatpush2.msra.mxu0 0.0
        %2176 = vmatprep.subr.mxu0 0.0
        %2177 = vmatpush2.msra.mxu0 0.0
        %2178 = vmatprep.subr.mxu0 0.0
        %2179 = vmatpush2.msra.mxu0 0.0
        %2180 = vmatprep.subr.mxu0 0.0
        %2181 = vmatpush2.msra.mxu0 0.0
        %2182 = vmatprep.subr.mxu0 0.0
        %2183 = vmatpush2.msra.mxu0 0.0
        %2184 = vmatprep.subr.mxu0 0.0
        %2185 = vmatpush2.msra.mxu0 0.0
        %2186 = vmatprep.subr.mxu0 0.0
        %2187 = vmatpush2.msra.mxu0 0.0
        %2188 = vmatprep.subr.mxu0 0.0
        %2189 = vmatpush2.msra.mxu0 0.0
        %2190 = vmatprep.subr.mxu0 0.0
        %2191 = vmatpush2.msra.mxu0 0.0
        %2192 = vmatprep.subr.mxu0 0.0
        %2193 = vmatpush2.msra.mxu0 0.0
        %2194 = vmatprep.subr.mxu0 0.0
        %2195 = vmatpush2.msra.mxu0 0.0
        %2196 = vmatprep.subr.mxu0 0.0
        %2197 = vmatpush2.msra.mxu0 0.0
        %2198 = vmatprep.subr.mxu0 0.0
        %2199 = vmatpush2.msra.mxu0 0.0
        %2200 = vmatprep.mubr.f32.mxu0 0.0
        %2201 = vmatmul.mubr.f32.gmra.mxu0 %v2125
        %v2202 = vpop.f32.mrf.mxu0
        %v2203 = vadd.f32 %v2122, %v2202
        %v2204 = vpop.f32.mrf.mxu0
        %2205 = vmatprep.mubr.f32.mxu0 0.0
        %2206 = vmatmul.mubr.f32.gmra.mxu0 %v2128
        %v2207 = vpop.f32.mrf.mxu0
        %v2208 = vadd.f32 %v2122, %v2207
        %v2209 = vpop.f32.mrf.mxu0
        %2210 = vmatprep.mubr.f32.mxu0 0.0
        %2211 = vmatmul.mubr.f32.gmra.mxu0 %v2131
        %v2212 = vpop.f32.mrf.mxu0
        %v2213 = vadd.f32 %v2122, %v2212
        %v2214 = vpop.f32.mrf.mxu0
        %2215 = vmatprep.mubr.f32.mxu0 0.0
        %2216 = vmatmul.mubr.f32.gmra.mxu0 %v2134
        %v2217 = vpop.f32.mrf.mxu0
        %v2218 = vadd.f32 %v2122, %v2217
        %v2219 = vpop.f32.mrf.mxu0
        %2220 = vdwg.mxu0
        %v2221 = vadd.f32 %v447, %v2203
        %v2222 = vadd.f32 %v448, %v2208
        %v2223 = vadd.f32 %v449, %v2213
        %v2224 = vadd.f32 %v450, %v2218
        %v2225 = vld [vmem:[%s6] sm:$0x1]
        %v2226 = vld [vmem:[%s7] sm:$0x1]
        %v2227 = vsel %vm453, %v2221, 0.0
        %2228 = vadd.xlane.f32.xlu0 %v2227
        %v2229 = vpop.xlane.xlu0 %2228
        %v2230 = vsel %vm453, %v2222, 0.0
        %2231 = vadd.xlane.f32.xlu0 %v2230
        %v2232 = vpop.xlane.xlu0 %2231
        %v2233 = vsel %vm453, %v2223, 0.0
        %2234 = vadd.xlane.f32.xlu0 %v2233
        %v2235 = vpop.xlane.xlu0 %2234
        %v2236 = vsel %vm453, %v2224, 0.0
        %2237 = vadd.xlane.f32.xlu0 %v2236
        %v2238 = vpop.xlane.xlu0 %2237
        %v2239 = vmul.f32 %v2229, %v466
        %v2240 = vmul.f32 %v2232, %v466
        %v2241 = vmul.f32 %v2235, %v466
        %v2242 = vmul.f32 %v2238, %v466
        %v2243 = vsub.f32 %v2221, %v2239
        %v2244 = vsub.f32 %v2222, %v2240
        %v2245 = vsub.f32 %v2223, %v2241
        %v2246 = vsub.f32 %v2224, %v2242
        %v2247 = vmul.f32 %v2243, %v2243
        %v2248 = vmul.f32 %v2244, %v2244
        %v2249 = vmul.f32 %v2245, %v2245
        %v2250 = vmul.f32 %v2246, %v2246
        %v2251 = vsel %vm453, %v2247, 0.0
        %2252 = vadd.xlane.f32.xlu0 %v2251
        %v2253 = vpop.xlane.xlu0 %2252
        %v2254 = vsel %vm453, %v2248, 0.0
        %2255 = vadd.xlane.f32.xlu0 %v2254
        %v2256 = vpop.xlane.xlu0 %2255
        %v2257 = vsel %vm453, %v2249, 0.0
        %2258 = vadd.xlane.f32.xlu0 %v2257
        %v2259 = vpop.xlane.xlu0 %2258
        %v2260 = vsel %vm453, %v2250, 0.0
        %2261 = vadd.xlane.f32.xlu0 %v2260
        %v2262 = vpop.xlane.xlu0 %2261
        %v2263 = vmul.f32 %v2253, %v466
        %v2264 = vmul.f32 %v2256, %v466
        %v2265 = vmul.f32 %v2259, %v466
        %v2266 = vmul.f32 %v2262, %v466
        %v2267 = vadd.f32 %v2263, 1e-06
        %v2268 = vadd.f32 %v2264, 1e-06
        %v2269 = vadd.f32 %v2265, 1e-06
        %v2270 = vadd.f32 %v2266, 1e-06
        %v2271 = vrsqrt.pop %v2267
        %v2272 = vrsqrt.pop %v2268
        %v2273 = vrsqrt.pop %v2269
        %v2274 = vrsqrt.pop %v2270
        %v2275 = vmul.f32 %v2243, %v2271
        %v2276 = vmul.f32 %v2244, %v2272
        %v2277 = vmul.f32 %v2245, %v2273
        %v2278 = vmul.f32 %v2246, %v2274
        %v2280 = vlaneseq
        %v2281 = vshrl.u32 %v2280, 7
        %v2282 = vsub.s32 0, %v2281
        %v2283 = vrot.slane %v2225, %v2282
        %v2285 = vmul.f32 %v2275, %v2283
        %v2286 = vmul.f32 %v2276, %v2283
        %v2287 = vmul.f32 %v2277, %v2283
        %v2288 = vmul.f32 %v2278, %v2283
        %v2290 = vlaneseq
        %v2291 = vshrl.u32 %v2290, 7
        %v2292 = vsub.s32 0, %v2291
        %v2293 = vrot.slane %v2226, %v2292
        %v2295 = vadd.f32 %v2285, %v2293
        %v2296 = vadd.f32 %v2286, %v2293
        %v2297 = vadd.f32 %v2287, %v2293
        %v2298 = vadd.f32 %v2288, %v2293
        %v2299 = vld [vmem:[#allocation4] sm:$0xff]
        %v2300 = vld [vmem:[#allocation4 + $0x8] sm:$0xff]
        %v2301 = vld [vmem:[#allocation4 + $0x10] sm:$0xff]
        %v2302 = vld [vmem:[#allocation4 + $0x18] sm:$0xff]
        %v2303 = vld [vmem:[%s9] sm:$0x1]
        %v2305 = vlaneseq
        %v2306 = vshrl.u32 %v2305, 7
        %v2307 = vsub.s32 0, %v2306
        %v2308 = vrot.slane %v2303, %v2307
        %v2311 = vsel %vm453, %v2295, 0
        %v2314 = vsel %vm453, %v2296, 0
        %v2317 = vsel %vm453, %v2297, 0
        %v2320 = vsel %vm453, %v2298, 0
        %2322 = vmatprep.subr.mxu0 0.0
        %2323 = vmatpush1.msra.mxu0 0.0
        %2324 = vmatprep.subr.mxu0 0.0
        %2325 = vmatpush1.msra.mxu0 0.0
        %2326 = vmatprep.subr.mxu0 0.0
        %2327 = vmatpush1.msra.mxu0 0.0
        %2328 = vmatprep.subr.mxu0 0.0
        %2329 = vmatpush1.msra.mxu0 0.0
        %2330 = vmatprep.subr.mxu0 0.0
        %2331 = vmatpush1.msra.mxu0 0.0
        %2332 = vmatprep.subr.mxu0 0.0
        %2333 = vmatpush1.msra.mxu0 0.0
        %2334 = vmatprep.subr.mxu0 0.0
        %2335 = vmatpush1.msra.mxu0 0.0
        %2336 = vmatprep.subr.mxu0 0.0
        %2337 = vmatpush1.msra.mxu0 0.0
        %2338 = vmatprep.subr.mxu0 0.0
        %2339 = vmatpush1.msra.mxu0 0.0
        %2340 = vmatprep.subr.mxu0 0.0
        %2341 = vmatpush1.msra.mxu0 0.0
        %2342 = vmatprep.subr.mxu0 0.0
        %2343 = vmatpush1.msra.mxu0 0.0
        %2344 = vmatprep.subr.mxu0 0.0
        %2345 = vmatpush1.msra.mxu0 0.0
        %2346 = vmatprep.subr.mxu0 0.0
        %2347 = vmatpush1.msra.mxu0 %v2302
        %2348 = vmatprep.subr.mxu0 0.0
        %2349 = vmatpush1.msra.mxu0 %v2301
        %2350 = vmatprep.subr.mxu0 0.0
        %2351 = vmatpush1.msra.mxu0 %v2300
        %2352 = vmatprep.subr.mxu0 0.0
        %2353 = vmatpush1.msra.mxu0 %v2299
        %2354 = vmatprep.subr.mxu0 0.0
        %2355 = vmatpush2.msra.mxu0 0.0
        %2356 = vmatprep.subr.mxu0 0.0
        %2357 = vmatpush2.msra.mxu0 0.0
        %2358 = vmatprep.subr.mxu0 0.0
        %2359 = vmatpush2.msra.mxu0 0.0
        %2360 = vmatprep.subr.mxu0 0.0
        %2361 = vmatpush2.msra.mxu0 0.0
        %2362 = vmatprep.subr.mxu0 0.0
        %2363 = vmatpush2.msra.mxu0 0.0
        %2364 = vmatprep.subr.mxu0 0.0
        %2365 = vmatpush2.msra.mxu0 0.0
        %2366 = vmatprep.subr.mxu0 0.0
        %2367 = vmatpush2.msra.mxu0 0.0
        %2368 = vmatprep.subr.mxu0 0.0
        %2369 = vmatpush2.msra.mxu0 0.0
        %2370 = vmatprep.subr.mxu0 0.0
        %2371 = vmatpush2.msra.mxu0 0.0
        %2372 = vmatprep.subr.mxu0 0.0
        %2373 = vmatpush2.msra.mxu0 0.0
        %2374 = vmatprep.subr.mxu0 0.0
        %2375 = vmatpush2.msra.mxu0 0.0
        %2376 = vmatprep.subr.mxu0 0.0
        %2377 = vmatpush2.msra.mxu0 0.0
        %2378 = vmatprep.subr.mxu0 0.0
        %2379 = vmatpush2.msra.mxu0 0.0
        %2380 = vmatprep.subr.mxu0 0.0
        %2381 = vmatpush2.msra.mxu0 0.0
        %2382 = vmatprep.subr.mxu0 0.0
        %2383 = vmatpush2.msra.mxu0 0.0
        %2384 = vmatprep.subr.mxu0 0.0
        %2385 = vmatpush2.msra.mxu0 0.0
        %2386 = vmatprep.mubr.f32.mxu0 0.0
        %2387 = vmatmul.mubr.f32.gmra.mxu0 %v2311
        %v2388 = vpop.f32.mrf.mxu0
        %v2389 = vadd.f32 %v2308, %v2388
        %v2390 = vpop.f32.mrf.mxu0
        %2391 = vmatprep.mubr.f32.mxu0 0.0
        %2392 = vmatmul.mubr.f32.gmra.mxu0 %v2314
        %v2393 = vpop.f32.mrf.mxu0
        %v2394 = vadd.f32 %v2308, %v2393
        %v2395 = vpop.f32.mrf.mxu0
        %2396 = vmatprep.mubr.f32.mxu0 0.0
        %2397 = vmatmul.mubr.f32.gmra.mxu0 %v2317
        %v2398 = vpop.f32.mrf.mxu0
        %v2399 = vadd.f32 %v2308, %v2398
        %v2400 = vpop.f32.mrf.mxu0
        %2401 = vmatprep.mubr.f32.mxu0 0.0
        %2402 = vmatmul.mubr.f32.gmra.mxu0 %v2320
        %v2403 = vpop.f32.mrf.mxu0
        %v2404 = vadd.f32 %v2308, %v2403
        %v2405 = vpop.f32.mrf.mxu0
        %2406 = vdwg.mxu0
        %v2407 = vmul.f32 %v2389, 0.70710677
        %v2408 = vmul.f32 %v2394, 0.70710677
        %v2409 = vmul.f32 %v2399, 0.70710677
        %v2410 = vmul.f32 %v2404, 0.70710677
        %vm2411 = vcmp.ge.f32.partialorder %v2407, 0.0
        %vm2412 = vcmp.ge.f32.partialorder %v2408, 0.0
        %vm2413 = vcmp.ge.f32.partialorder %v2409, 0.0
        %vm2414 = vcmp.ge.f32.partialorder %v2410, 0.0
        %v2415 = vsel %vm2411, 1.0, -1.0
        %v2416 = vsel %vm2412, 1.0, -1.0
        %v2417 = vsel %vm2413, 1.0, -1.0
        %v2418 = vsel %vm2414, 1.0, -1.0
        %v2419 = vand.u32 2147483647, %v2407
        %v2420 = vand.u32 2147483647, %v2408
        %v2421 = vand.u32 2147483647, %v2409
        %v2422 = vand.u32 2147483647, %v2410
        %v2423 = vmul.f32 %v2419, 0.3275911
        %v2424 = vmul.f32 %v2420, 0.3275911
        %v2425 = vmul.f32 %v2421, 0.3275911
        %v2426 = vmul.f32 %v2422, 0.3275911
        %v2427 = vadd.f32 %v2423, 1.0
        %v2428 = vadd.f32 %v2424, 1.0
        %v2429 = vadd.f32 %v2425, 1.0
        %v2430 = vadd.f32 %v2426, 1.0
        %v2431 = vrcp.pop %v2427
        %v2432 = vrcp.pop %v2428
        %v2433 = vrcp.pop %v2429
        %v2434 = vrcp.pop %v2430
        %v2435 = vmul.f32 %v2431, 1.0614054
        %v2436 = vmul.f32 %v2432, 1.0614054
        %v2437 = vmul.f32 %v2433, 1.0614054
        %v2438 = vmul.f32 %v2434, 1.0614054
        %v2439 = vadd.f32 %v2435, -1.4531521
        %v2440 = vadd.f32 %v2436, -1.4531521
        %v2441 = vadd.f32 %v2437, -1.4531521
        %v2442 = vadd.f32 %v2438, -1.4531521
        %v2443 = vmul.f32 %v2439, %v2431
        %v2444 = vmul.f32 %v2440, %v2432
        %v2445 = vmul.f32 %v2441, %v2433
        %v2446 = vmul.f32 %v2442, %v2434
        %v2447 = vadd.f32 %v2443, 1.4214138
        %v2448 = vadd.f32 %v2444, 1.4214138
        %v2449 = vadd.f32 %v2445, 1.4214138
        %v2450 = vadd.f32 %v2446, 1.4214138
        %v2451 = vmul.f32 %v2447, %v2431
        %v2452 = vmul.f32 %v2448, %v2432
        %v2453 = vmul.f32 %v2449, %v2433
        %v2454 = vmul.f32 %v2450, %v2434
        %v2455 = vadd.f32 %v2451, -0.28449672
        %v2456 = vadd.f32 %v2452, -0.28449672
        %v2457 = vadd.f32 %v2453, -0.28449672
        %v2458 = vadd.f32 %v2454, -0.28449672
        %v2459 = vmul.f32 %v2455, %v2431
        %v2460 = vmul.f32 %v2456, %v2432
        %v2461 = vmul.f32 %v2457, %v2433
        %v2462 = vmul.f32 %v2458, %v2434
        %v2463 = vadd.f32 %v2459, 0.2548296
        %v2464 = vadd.f32 %v2460, 0.2548296
        %v2465 = vadd.f32 %v2461, 0.2548296
        %v2466 = vadd.f32 %v2462, 0.2548296
        %v2467 = vmul.f32 %v2463, %v2431
        %v2468 = vmul.f32 %v2464, %v2432
        %v2469 = vmul.f32 %v2465, %v2433
        %v2470 = vmul.f32 %v2466, %v2434
        %v2471 = vsub.f32 0.0, %v2419
        %v2472 = vsub.f32 0.0, %v2420
        %v2473 = vsub.f32 0.0, %v2421
        %v2474 = vsub.f32 0.0, %v2422
        %v2475 = vmul.f32 %v2471, %v2419
        %v2476 = vmul.f32 %v2472, %v2420
        %v2477 = vmul.f32 %v2473, %v2421
        %v2478 = vmul.f32 %v2474, %v2422
        %v2479 = vmul.f32 %v2475, 1.442695
        %v2480 = vpow.pop %v2479
        %v2481 = vmul.f32 %v2476, 1.442695
        %v2482 = vpow.pop %v2481
        %v2483 = vmul.f32 %v2477, 1.442695
        %v2484 = vpow.pop %v2483
        %v2485 = vmul.f32 %v2478, 1.442695
        %v2486 = vpow.pop %v2485
        %v2487 = vmul.f32 %v2467, %v2480
        %v2488 = vmul.f32 %v2468, %v2482
        %v2489 = vmul.f32 %v2469, %v2484
        %v2490 = vmul.f32 %v2470, %v2486
        %v2491 = vsub.f32 1.0, %v2487
        %v2492 = vsub.f32 1.0, %v2488
        %v2493 = vsub.f32 1.0, %v2489
        %v2494 = vsub.f32 1.0, %v2490
        %v2495 = vmul.f32 %v2415, %v2491
        %v2496 = vmul.f32 %v2416, %v2492
        %v2497 = vmul.f32 %v2417, %v2493
        %v2498 = vmul.f32 %v2418, %v2494
        %v2499 = vmul.f32 %v2389, 0.5
        %v2500 = vmul.f32 %v2394, 0.5
        %v2501 = vmul.f32 %v2399, 0.5
        %v2502 = vmul.f32 %v2404, 0.5
        %v2503 = vadd.f32 %v2495, 1.0
        %v2504 = vadd.f32 %v2496, 1.0
        %v2505 = vadd.f32 %v2497, 1.0
        %v2506 = vadd.f32 %v2498, 1.0
        %v2507 = vmul.f32 %v2499, %v2503
        %v2508 = vmul.f32 %v2500, %v2504
        %v2509 = vmul.f32 %v2501, %v2505
        %v2510 = vmul.f32 %v2502, %v2506
        %v2511 = vld [vmem:[%s10] sm:$0xff]
        %v2512 = vld [vmem:[%s10 + $0x8] sm:$0xff]
        %v2513 = vld [vmem:[%s10 + $0x10] sm:$0xff]
        %v2514 = vld [vmem:[%s10 + $0x18] sm:$0xff]
        %v2515 = vld [vmem:[%s10 + $0x20] sm:$0xff]
        %v2516 = vld [vmem:[%s10 + $0x28] sm:$0xff]
        %v2517 = vld [vmem:[%s10 + $0x30] sm:$0xff]
        %v2518 = vld [vmem:[%s10 + $0x38] sm:$0xff]
        %v2519 = vld [vmem:[%s10 + $0x40] sm:$0xff]
        %v2520 = vld [vmem:[%s10 + $0x48] sm:$0xff]
        %v2521 = vld [vmem:[%s10 + $0x50] sm:$0xff]
        %v2522 = vld [vmem:[%s10 + $0x58] sm:$0xff]
        %v2523 = vld [vmem:[%s10 + $0x60] sm:$0xff]
        %v2524 = vld [vmem:[%s10 + $0x68] sm:$0xff]
        %v2525 = vld [vmem:[%s10 + $0x70] sm:$0xff]
        %v2526 = vld [vmem:[%s10 + $0x78] sm:$0xff]
        %v2527 = vld [vmem:[%s11] sm:$0x1]
        %v2529 = vlaneseq
        %v2530 = vshrl.u32 %v2529, 7
        %v2531 = vsub.s32 0, %v2530
        %v2532 = vrot.slane %v2527, %v2531
        %2534 = vmatprep.subr.mxu0 0.0
        %2535 = vmatpush1.msra.mxu0 %v2526
        %2536 = vmatprep.subr.mxu0 0.0
        %2537 = vmatpush1.msra.mxu0 %v2525
        %2538 = vmatprep.subr.mxu0 0.0
        %2539 = vmatpush1.msra.mxu0 %v2524
        %2540 = vmatprep.subr.mxu0 0.0
        %2541 = vmatpush1.msra.mxu0 %v2523
        %2542 = vmatprep.subr.mxu0 0.0
        %2543 = vmatpush1.msra.mxu0 %v2522
        %2544 = vmatprep.subr.mxu0 0.0
        %2545 = vmatpush1.msra.mxu0 %v2521
        %2546 = vmatprep.subr.mxu0 0.0
        %2547 = vmatpush1.msra.mxu0 %v2520
        %2548 = vmatprep.subr.mxu0 0.0
        %2549 = vmatpush1.msra.mxu0 %v2519
        %2550 = vmatprep.subr.mxu0 0.0
        %2551 = vmatpush1.msra.mxu0 %v2518
        %2552 = vmatprep.subr.mxu0 0.0
        %2553 = vmatpush1.msra.mxu0 %v2517
        %2554 = vmatprep.subr.mxu0 0.0
        %2555 = vmatpush1.msra.mxu0 %v2516
        %2556 = vmatprep.subr.mxu0 0.0
        %2557 = vmatpush1.msra.mxu0 %v2515
        %2558 = vmatprep.subr.mxu0 0.0
        %2559 = vmatpush1.msra.mxu0 %v2514
        %2560 = vmatprep.subr.mxu0 0.0
        %2561 = vmatpush1.msra.mxu0 %v2513
        %2562 = vmatprep.subr.mxu0 0.0
        %2563 = vmatpush1.msra.mxu0 %v2512
        %2564 = vmatprep.subr.mxu0 0.0
        %2565 = vmatpush1.msra.mxu0 %v2511
        %2566 = vmatprep.subr.mxu0 0.0
        %2567 = vmatpush2.msra.mxu0 0.0
        %2568 = vmatprep.subr.mxu0 0.0
        %2569 = vmatpush2.msra.mxu0 0.0
        %2570 = vmatprep.subr.mxu0 0.0
        %2571 = vmatpush2.msra.mxu0 0.0
        %2572 = vmatprep.subr.mxu0 0.0
        %2573 = vmatpush2.msra.mxu0 0.0
        %2574 = vmatprep.subr.mxu0 0.0
        %2575 = vmatpush2.msra.mxu0 0.0
        %2576 = vmatprep.subr.mxu0 0.0
        %2577 = vmatpush2.msra.mxu0 0.0
        %2578 = vmatprep.subr.mxu0 0.0
        %2579 = vmatpush2.msra.mxu0 0.0
        %2580 = vmatprep.subr.mxu0 0.0
        %2581 = vmatpush2.msra.mxu0 0.0
        %2582 = vmatprep.subr.mxu0 0.0
        %2583 = vmatpush2.msra.mxu0 0.0
        %2584 = vmatprep.subr.mxu0 0.0
        %2585 = vmatpush2.msra.mxu0 0.0
        %2586 = vmatprep.subr.mxu0 0.0
        %2587 = vmatpush2.msra.mxu0 0.0
        %2588 = vmatprep.subr.mxu0 0.0
        %2589 = vmatpush2.msra.mxu0 0.0
        %2590 = vmatprep.subr.mxu0 0.0
        %2591 = vmatpush2.msra.mxu0 0.0
        %2592 = vmatprep.subr.mxu0 0.0
        %2593 = vmatpush2.msra.mxu0 0.0
        %2594 = vmatprep.subr.mxu0 0.0
        %2595 = vmatpush2.msra.mxu0 0.0
        %2596 = vmatprep.subr.mxu0 0.0
        %2597 = vmatpush2.msra.mxu0 0.0
        %2598 = vmatprep.mubr.f32.mxu0 0.0
        %2599 = vmatmul.mubr.f32.gmra.mxu0 %v2507
        %v2600 = vpop.f32.mrf.mxu0
        %v2601 = vadd.f32 %v2532, %v2600
        %v2602 = vpop.f32.mrf.mxu0
        %2603 = vmatprep.mubr.f32.mxu0 0.0
        %2604 = vmatmul.mubr.f32.gmra.mxu0 %v2508
        %v2605 = vpop.f32.mrf.mxu0
        %v2606 = vadd.f32 %v2532, %v2605
        %v2607 = vpop.f32.mrf.mxu0
        %2608 = vmatprep.mubr.f32.mxu0 0.0
        %2609 = vmatmul.mubr.f32.gmra.mxu0 %v2509
        %v2610 = vpop.f32.mrf.mxu0
        %v2611 = vadd.f32 %v2532, %v2610
        %v2612 = vpop.f32.mrf.mxu0
        %2613 = vmatprep.mubr.f32.mxu0 0.0
        %2614 = vmatmul.mubr.f32.gmra.mxu0 %v2510
        %v2615 = vpop.f32.mrf.mxu0
        %v2616 = vadd.f32 %v2532, %v2615
        %v2617 = vpop.f32.mrf.mxu0
        %2618 = vdwg.mxu0
        %v2619 = vadd.f32 %v2221, %v2601
        %v2620 = vadd.f32 %v2222, %v2606
        %v2621 = vadd.f32 %v2223, %v2611
        %v2622 = vadd.f32 %v2224, %v2616
        %2623 = vst.msk [vmem:[%s445] sm:$0xff] %vm453, %v2619
        %2624 = vst.msk [vmem:[%s445 + $0x8] sm:$0xff] %vm453, %v2620
        %2625 = vst.msk [vmem:[%s445 + $0x10] sm:$0xff] %vm453, %v2621
        %2626 = vst.msk [vmem:[%s445 + $0x18] sm:$0xff] %vm453, %v2622
        %s2627 = smul.u32 4, %s25
        %p2628 = scmp.lt.s32.totalorder %s2627, 7
        %s2629 = scalar_select %p2628, %s2627, 7
        %s2630 = smul.addr %s2629, 8
        %s2631 = scalar_lea.vmem %s12, %s2630
        // Predicated region
        $region77: #{tnt_block_forward.2} parent=67 // pred_check
          %p2632 = pneg %p300
        $region78: #{tnt_block_forward.2} parent=67 // pred_check_branch
          %2634 = sbr.rel (%p2632) target = $region80
        $region79: #{tnt_block_forward.2} parent=67 // pred_region
          %s2635 = smul.u32 4, %s25
        $region80: #{tnt_block_forward.2} parent=67 // pred_fallthru
          _
      $region68: #{tnt_block_forward.2} parent=5 // pred_fallthru
        _
      %p2636 = scmp.le.s32.totalorder 2, %s20
      // Predicated region
      $region81: #{tnt_block_forward.2} parent=5 // pred_check
        %p2637 = pneg %p2636
      $region82: #{tnt_block_forward.2} parent=5 // pred_check_branch
        %2639 = sbr.rel (%p2637) target = $region84
      $region83: #{tnt_block_forward.2} parent=5 // pred_region
        %s2640 = ssub.s32 %s20, 2
        // Predicated region
        $region85: #{tnt_block_forward.2} parent=83 // pred_check
          %p2641 = pneg %p306
        $region86: #{tnt_block_forward.2} parent=83 // pred_check_branch
          %2643 = sbr.rel (%p2641) target = $region88
        $region87: #{tnt_block_forward.2} parent=83 // pred_region
          %s2644 = smul.u32 4, %s26
          %p2645 = scmp.lt.s32.totalorder %s2644, 7
          %s2646 = scalar_select %p2645, %s2644, 7
          %s2647 = smul.addr %s2646, 8
          %s2648 = scalar_lea.vmem %s12, %s2647
        $region88: #{tnt_block_forward.2} parent=83 // pred_fallthru
          _
      $region84: #{tnt_block_forward.2} parent=5 // pred_fallthru
        _
    $region6: #{tnt_block_forward.2} parent=1 // loop_footer
      %s24 = sadd.s32 1, %s20
    $region7: #{tnt_block_forward.2} parent=1 // loop_footer_branch
      %19 = sbr.rel target = $region3
    $region8: #{tnt_block_forward.2} parent=1 // loop_exit
      _
    %2649 = vsyncpa [#allocation3], 1
    %s2650 = scalar_lea.sflag [#allocation3], 1
    %2651 = vsyncpa %s2650, 1
    %2652 = vsyncpa [#allocation5], 1

// kernel: tnt_block_forward.3
$region0: #{tnt_block_forward.3}
  #allocation0 [shape = 'u32[]', space=smem, size = 0x4, offset = 0x4, fixed_abs, tag = 'smem constant byte address 0x4 - core index']
  #allocation1 [shape = 'u32[144,128]{1,0:T(1,128)}', space=vmem, size = 0x12000, scoped, tag = 'internal scratch']
  %s0 = inlined_call_operand.vmem [shape: f32[2,5,64], index: 0, kind: input, shape index: {}]
  %s1 = inlined_call_operand.vmem [shape: f32[2,4,256], index: 1, kind: input, shape index: {}]
  %s2 = inlined_call_operand.vmem [shape: f32[1,256], index: 2, kind: input, shape index: {}]
  %s3 = inlined_call_operand.vmem [shape: f32[1,256], index: 3, kind: input, shape index: {}]
  %s4 = inlined_call_operand.vmem [shape: f32[256,64], index: 4, kind: input, shape index: {}]
  %s5 = inlined_call_operand.vmem [shape: f32[1,64], index: 5, kind: input, shape index: {}]
  %s6 = inlined_call_operand.vmem [shape: f32[1,64], index: 6, kind: input, shape index: {}]
  %s7 = inlined_call_operand.vmem [shape: f32[1,64], index: 7, kind: input, shape index: {}]
  %s8 = inlined_call_operand.vmem [shape: f32[1,64], index: 8, kind: input, shape index: {}]
  %s9 = inlined_call_operand.vmem [shape: f32[3,64,64], index: 9, kind: input, shape index: {}]
  %s10 = inlined_call_operand.vmem [shape: f32[64,64], index: 10, kind: input, shape index: {}]
  %s11 = inlined_call_operand.vmem [shape: f32[1,64], index: 11, kind: input, shape index: {}]
  %s12 = inlined_call_operand.vmem [shape: f32[1,64], index: 12, kind: input, shape index: {}]
  %s13 = inlined_call_operand.vmem [shape: f32[1,64], index: 13, kind: input, shape index: {}]
  %s14 = inlined_call_operand.vmem [shape: f32[64,256], index: 14, kind: input, shape index: {}]
  %s15 = inlined_call_operand.vmem [shape: f32[1,256], index: 15, kind: input, shape index: {}]
  %s16 = inlined_call_operand.vmem [shape: f32[256,64], index: 16, kind: input, shape index: {}]
  %s17 = inlined_call_operand.vmem [shape: f32[1,64], index: 17, kind: input, shape index: {}]
  %s18 = inlined_call_operand.vmem [shape: f32[2,5,64], index: 18, kind: output, shape index: {}]
  %s19 = sld [smem:[#allocation0]]
  $region105: #{tnt_block_forward.3} parent=0
    _
  %s21 = ssub.s32 1, %s19
  %s22 = scalar_select 0, %s21, %s19
  loop: start=0, step=1, limit=4
  $region2: #{tnt_block_forward.3} parent=0 // loop_pre_header
    _
  $region3: #{tnt_block_forward.3} parent=0 // loop_header
    %s24 = sphi 0, %s28
    %p25 = scmp.ge.s32.totalorder %s24, 4
    %s34 = sphi 0, %s36
    %s37 = sphi 0, %s34
    %s38 = sphi 0, %s37
    %s54 = sphi 0, %s38
    %s60 = sphi 0, %s62
    %s63 = sphi 0, %s60
    %s64 = sphi 0, %s63
    %s80 = sphi 0, %s64
    %s84 = sphi 0, %s84
    %s86 = sphi 0, %s84
    %s87 = sphi 0, %s86
    %s101 = sphi 0, %s87
    %s105 = sphi 0, %s105
    %s107 = sphi 0, %s105
    %s108 = sphi 0, %s107
    %s122 = sphi 0, %s108
    %s126 = sphi 0, %s126
    %s128 = sphi 0, %s126
    %s129 = sphi 0, %s128
    %s143 = sphi 0, %s129
    %s147 = sphi 0, %s147
    %s149 = sphi 0, %s147
    %s150 = sphi 0, %s149
    %s164 = sphi 0, %s150
    %s168 = sphi 0, %s168
    %s170 = sphi 0, %s168
    %s171 = sphi 0, %s170
    %s185 = sphi 0, %s171
    %s189 = sphi 0, %s189
    %s191 = sphi 0, %s189
    %s192 = sphi 0, %s191
    %s206 = sphi 0, %s192
    %s210 = sphi 0, %s210
    %s212 = sphi 0, %s210
    %s213 = sphi 0, %s212
    %s227 = sphi 0, %s213
    %s231 = sphi 0, %s231
    %s233 = sphi 0, %s231
    %s234 = sphi 0, %s233
    %s248 = sphi 0, %s234
    %s252 = sphi 0, %s252
    %s254 = sphi 0, %s252
    %s255 = sphi 0, %s254
    %s269 = sphi 0, %s255
    %s273 = sphi 0, %s273
    %s275 = sphi 0, %s273
    %s276 = sphi 0, %s275
    %s290 = sphi 0, %s276
    %s294 = sphi 0, %s294
    %s296 = sphi 0, %s294
    %s297 = sphi 0, %s296
    %s311 = sphi 0, %s297
    %s315 = sphi 0, %s315
    %s317 = sphi 0, %s315
    %s318 = sphi 0, %s317
    %s332 = sphi 0, %s318
    %s336 = sphi 0, %s336
    %s338 = sphi 0, %s336
    %s339 = sphi 0, %s338
    %s353 = sphi 0, %s339
    %s357 = sphi 0, %s357
    %s359 = sphi 0, %s357
    %s360 = sphi 0, %s359
    %s374 = sphi 0, %s360
    %s378 = sphi 0, %s378
    %s380 = sphi 0, %s378
    %s381 = sphi 0, %s380
    %s395 = sphi 0, %s381
    %s399 = sphi 0, %s399
    %s401 = sphi 0, %s399
    %s402 = sphi 0, %s401
    %s416 = sphi 0, %s402
    %s422 = sphi 0, %s424
    %s425 = sphi 0, %s422
    %s426 = sphi 0, %s425
    %s442 = sphi 0, %s426
  $region4: #{tnt_block_forward.3} parent=0 // loop_header_branch
    %27 = sbr.rel (%p25) target = $region8
  $region5: #{tnt_block_forward.3} parent=0 // loop_body
    %s29 = ssub.s32 %s24, 1
    %s30 = ssub.s32 %s24, 2
    %s31 = sadd.s32 %s24, 1
    %s32 = ssub.s32 %s24, %s31
    %p33 = scmp.eq.s32.totalorder %s32, 0
    %s35 = sadd.s32 %s34, 1
    %s36 = scalar_select %p33, %s34, %s35
    %p39 = pneg %p33
    %p40 = scmp.eq.s32.totalorder %s24, 1
    %p41 = por %p39, %p40
    %p42 = scmp.ne.s32.totalorder %s34, %s37
    %p43 = scmp.eq.s32.totalorder %s24, 0
    %p44 = por %p42, %p43
    %p45 = scmp.ne.s32.totalorder %s34, %s37
    %p46 = scmp.eq.s32.totalorder %s29, 1
    %p47 = por %p45, %p46
    %p48 = scmp.ne.s32.totalorder %s37, %s38
    %p49 = scmp.eq.s32.totalorder %s29, 0
    %p50 = por %p48, %p49
    %p51 = scmp.ne.s32.totalorder %s37, %s38
    %p52 = scmp.eq.s32.totalorder %s30, 1
    %p53 = por %p51, %p52
    %p55 = scmp.ne.s32.totalorder %s38, %s54
    %p56 = scmp.eq.s32.totalorder %s30, 0
    %p57 = por %p55, %p56
    %s58 = ssub.s32 %s24, %s31
    %p59 = scmp.eq.s32.totalorder %s58, 0
    %s61 = sadd.s32 %s60, 1
    %s62 = scalar_select %p59, %s60, %s61
    %p65 = pneg %p59
    %p66 = scmp.eq.s32.totalorder %s24, 1
    %p67 = por %p65, %p66
    %p68 = scmp.ne.s32.totalorder %s60, %s63
    %p69 = scmp.eq.s32.totalorder %s24, 0
    %p70 = por %p68, %p69
    %p71 = scmp.ne.s32.totalorder %s60, %s63
    %p72 = scmp.eq.s32.totalorder %s29, 1
    %p73 = por %p71, %p72
    %p74 = scmp.ne.s32.totalorder %s63, %s64
    %p75 = scmp.eq.s32.totalorder %s29, 0
    %p76 = por %p74, %p75
    %p77 = scmp.ne.s32.totalorder %s63, %s64
    %p78 = scmp.eq.s32.totalorder %s30, 1
    %p79 = por %p77, %p78
    %p81 = scmp.ne.s32.totalorder %s64, %s80
    %p82 = scmp.eq.s32.totalorder %s30, 0
    %p83 = por %p81, %p82
    %s85 = sadd.s32 %s84, 1
    %p88 = scmp.eq.s32.totalorder %s24, 1
    %p89 = scmp.ne.s32.totalorder %s84, %s86
    %p90 = scmp.eq.s32.totalorder %s24, 0
    %p91 = por %p89, %p90
    %p92 = scmp.ne.s32.totalorder %s84, %s86
    %p93 = scmp.eq.s32.totalorder %s29, 1
    %p94 = por %p92, %p93
    %p95 = scmp.ne.s32.totalorder %s86, %s87
    %p96 = scmp.eq.s32.totalorder %s29, 0
    %p97 = por %p95, %p96
    %p98 = scmp.ne.s32.totalorder %s86, %s87
    %p99 = scmp.eq.s32.totalorder %s30, 1
    %p100 = por %p98, %p99
    %p102 = scmp.ne.s32.totalorder %s87, %s101
    %p103 = scmp.eq.s32.totalorder %s30, 0
    %p104 = por %p102, %p103
    %s106 = sadd.s32 %s105, 1
    %p109 = scmp.eq.s32.totalorder %s24, 1
    %p110 = scmp.ne.s32.totalorder %s105, %s107
    %p111 = scmp.eq.s32.totalorder %s24, 0
    %p112 = por %p110, %p111
    %p113 = scmp.ne.s32.totalorder %s105, %s107
    %p114 = scmp.eq.s32.totalorder %s29, 1
    %p115 = por %p113, %p114
    %p116 = scmp.ne.s32.totalorder %s107, %s108
    %p117 = scmp.eq.s32.totalorder %s29, 0
    %p118 = por %p116, %p117
    %p119 = scmp.ne.s32.totalorder %s107, %s108
    %p120 = scmp.eq.s32.totalorder %s30, 1
    %p121 = por %p119, %p120
    %p123 = scmp.ne.s32.totalorder %s108, %s122
    %p124 = scmp.eq.s32.totalorder %s30, 0
    %p125 = por %p123, %p124
    %s127 = sadd.s32 %s126, 1
    %p130 = scmp.eq.s32.totalorder %s24, 1
    %p131 = scmp.ne.s32.totalorder %s126, %s128
    %p132 = scmp.eq.s32.totalorder %s24, 0
    %p133 = por %p131, %p132
    %p134 = scmp.ne.s32.totalorder %s126, %s128
    %p135 = scmp.eq.s32.totalorder %s29, 1
    %p136 = por %p134, %p135
    %p137 = scmp.ne.s32.totalorder %s128, %s129
    %p138 = scmp.eq.s32.totalorder %s29, 0
    %p139 = por %p137, %p138
    %p140 = scmp.ne.s32.totalorder %s128, %s129
    %p141 = scmp.eq.s32.totalorder %s30, 1
    %p142 = por %p140, %p141
    %p144 = scmp.ne.s32.totalorder %s129, %s143
    %p145 = scmp.eq.s32.totalorder %s30, 0
    %p146 = por %p144, %p145
    %s148 = sadd.s32 %s147, 1
    %p151 = scmp.eq.s32.totalorder %s24, 1
    %p152 = scmp.ne.s32.totalorder %s147, %s149
    %p153 = scmp.eq.s32.totalorder %s24, 0
    %p154 = por %p152, %p153
    %p155 = scmp.ne.s32.totalorder %s147, %s149
    %p156 = scmp.eq.s32.totalorder %s29, 1
    %p157 = por %p155, %p156
    %p158 = scmp.ne.s32.totalorder %s149, %s150
    %p159 = scmp.eq.s32.totalorder %s29, 0
    %p160 = por %p158, %p159
    %p161 = scmp.ne.s32.totalorder %s149, %s150
    %p162 = scmp.eq.s32.totalorder %s30, 1
    %p163 = por %p161, %p162
    %p165 = scmp.ne.s32.totalorder %s150, %s164
    %p166 = scmp.eq.s32.totalorder %s30, 0
    %p167 = por %p165, %p166
    %s169 = sadd.s32 %s168, 1
    %p172 = scmp.eq.s32.totalorder %s24, 1
    %p173 = scmp.ne.s32.totalorder %s168, %s170
    %p174 = scmp.eq.s32.totalorder %s24, 0
    %p175 = por %p173, %p174
    %p176 = scmp.ne.s32.totalorder %s168, %s170
    %p177 = scmp.eq.s32.totalorder %s29, 1
    %p178 = por %p176, %p177
    %p179 = scmp.ne.s32.totalorder %s170, %s171
    %p180 = scmp.eq.s32.totalorder %s29, 0
    %p181 = por %p179, %p180
    %p182 = scmp.ne.s32.totalorder %s170, %s171
    %p183 = scmp.eq.s32.totalorder %s30, 1
    %p184 = por %p182, %p183
    %p186 = scmp.ne.s32.totalorder %s171, %s185
    %p187 = scmp.eq.s32.totalorder %s30, 0
    %p188 = por %p186, %p187
    %s190 = sadd.s32 %s189, 1
    %p193 = scmp.eq.s32.totalorder %s24, 1
    %p194 = scmp.ne.s32.totalorder %s189, %s191
    %p195 = scmp.eq.s32.totalorder %s24, 0
    %p196 = por %p194, %p195
    %p197 = scmp.ne.s32.totalorder %s189, %s191
    %p198 = scmp.eq.s32.totalorder %s29, 1
    %p199 = por %p197, %p198
    %p200 = scmp.ne.s32.totalorder %s191, %s192
    %p201 = scmp.eq.s32.totalorder %s29, 0
    %p202 = por %p200, %p201
    %p203 = scmp.ne.s32.totalorder %s191, %s192
    %p204 = scmp.eq.s32.totalorder %s30, 1
    %p205 = por %p203, %p204
    %p207 = scmp.ne.s32.totalorder %s192, %s206
    %p208 = scmp.eq.s32.totalorder %s30, 0
    %p209 = por %p207, %p208
    %s211 = sadd.s32 %s210, 1
    %p214 = scmp.eq.s32.totalorder %s24, 1
    %p215 = scmp.ne.s32.totalorder %s210, %s212
    %p216 = scmp.eq.s32.totalorder %s24, 0
    %p217 = por %p215, %p216
    %p218 = scmp.ne.s32.totalorder %s210, %s212
    %p219 = scmp.eq.s32.totalorder %s29, 1
    %p220 = por %p218, %p219
    %p221 = scmp.ne.s32.totalorder %s212, %s213
    %p222 = scmp.eq.s32.totalorder %s29, 0
    %p223 = por %p221, %p222
    %p224 = scmp.ne.s32.totalorder %s212, %s213
    %p225 = scmp.eq.s32.totalorder %s30, 1
    %p226 = por %p224, %p225
    %p228 = scmp.ne.s32.totalorder %s213, %s227
    %p229 = scmp.eq.s32.totalorder %s30, 0
    %p230 = por %p228, %p229
    %s232 = sadd.s32 %s231, 1
    %p235 = scmp.eq.s32.totalorder %s24, 1
    %p236 = scmp.ne.s32.totalorder %s231, %s233
    %p237 = scmp.eq.s32.totalorder %s24, 0
    %p238 = por %p236, %p237
    %p239 = scmp.ne.s32.totalorder %s231, %s233
    %p240 = scmp.eq.s32.totalorder %s29, 1
    %p241 = por %p239, %p240
    %p242 = scmp.ne.s32.totalorder %s233, %s234
    %p243 = scmp.eq.s32.totalorder %s29, 0
    %p244 = por %p242, %p243
    %p245 = scmp.ne.s32.totalorder %s233, %s234
    %p246 = scmp.eq.s32.totalorder %s30, 1
    %p247 = por %p245, %p246
    %p249 = scmp.ne.s32.totalorder %s234, %s248
    %p250 = scmp.eq.s32.totalorder %s30, 0
    %p251 = por %p249, %p250
    %s253 = sadd.s32 %s252, 1
    %p256 = scmp.eq.s32.totalorder %s24, 1
    %p257 = scmp.ne.s32.totalorder %s252, %s254
    %p258 = scmp.eq.s32.totalorder %s24, 0
    %p259 = por %p257, %p258
    %p260 = scmp.ne.s32.totalorder %s252, %s254
    %p261 = scmp.eq.s32.totalorder %s29, 1
    %p262 = por %p260, %p261
    %p263 = scmp.ne.s32.totalorder %s254, %s255
    %p264 = scmp.eq.s32.totalorder %s29, 0
    %p265 = por %p263, %p264
    %p266 = scmp.ne.s32.totalorder %s254, %s255
    %p267 = scmp.eq.s32.totalorder %s30, 1
    %p268 = por %p266, %p267
    %p270 = scmp.ne.s32.totalorder %s255, %s269
    %p271 = scmp.eq.s32.totalorder %s30, 0
    %p272 = por %p270, %p271
    %s274 = sadd.s32 %s273, 1
    %p277 = scmp.eq.s32.totalorder %s24, 1
    %p278 = scmp.ne.s32.totalorder %s273, %s275
    %p279 = scmp.eq.s32.totalorder %s24, 0
    %p280 = por %p278, %p279
    %p281 = scmp.ne.s32.totalorder %s273, %s275
    %p282 = scmp.eq.s32.totalorder %s29, 1
    %p283 = por %p281, %p282
    %p284 = scmp.ne.s32.totalorder %s275, %s276
    %p285 = scmp.eq.s32.totalorder %s29, 0
    %p286 = por %p284, %p285
    %p287 = scmp.ne.s32.totalorder %s275, %s276
    %p288 = scmp.eq.s32.totalorder %s30, 1
    %p289 = por %p287, %p288
    %p291 = scmp.ne.s32.totalorder %s276, %s290
    %p292 = scmp.eq.s32.totalorder %s30, 0
    %p293 = por %p291, %p292
    %s295 = sadd.s32 %s294, 1
    %p298 = scmp.eq.s32.totalorder %s24, 1
    %p299 = scmp.ne.s32.totalorder %s294, %s296
    %p300 = scmp.eq.s32.totalorder %s24, 0
    %p301 = por %p299, %p300
    %p302 = scmp.ne.s32.totalorder %s294, %s296
    %p303 = scmp.eq.s32.totalorder %s29, 1
    %p304 = por %p302, %p303
    %p305 = scmp.ne.s32.totalorder %s296, %s297
    %p306 = scmp.eq.s32.totalorder %s29, 0
    %p307 = por %p305, %p306
    %p308 = scmp.ne.s32.totalorder %s296, %s297
    %p309 = scmp.eq.s32.totalorder %s30, 1
    %p310 = por %p308, %p309
    %p312 = scmp.ne.s32.totalorder %s297, %s311
    %p313 = scmp.eq.s32.totalorder %s30, 0
    %p314 = por %p312, %p313
    %s316 = sadd.s32 %s315, 1
    %p319 = scmp.eq.s32.totalorder %s24, 1
    %p320 = scmp.ne.s32.totalorder %s315, %s317
    %p321 = scmp.eq.s32.totalorder %s24, 0
    %p322 = por %p320, %p321
    %p323 = scmp.ne.s32.totalorder %s315, %s317
    %p324 = scmp.eq.s32.totalorder %s29, 1
    %p325 = por %p323, %p324
    %p326 = scmp.ne.s32.totalorder %s317, %s318
    %p327 = scmp.eq.s32.totalorder %s29, 0
    %p328 = por %p326, %p327
    %p329 = scmp.ne.s32.totalorder %s317, %s318
    %p330 = scmp.eq.s32.totalorder %s30, 1
    %p331 = por %p329, %p330
    %p333 = scmp.ne.s32.totalorder %s318, %s332
    %p334 = scmp.eq.s32.totalorder %s30, 0
    %p335 = por %p333, %p334
    %s337 = sadd.s32 %s336, 1
    %p340 = scmp.eq.s32.totalorder %s24, 1
    %p341 = scmp.ne.s32.totalorder %s336, %s338
    %p342 = scmp.eq.s32.totalorder %s24, 0
    %p343 = por %p341, %p342
    %p344 = scmp.ne.s32.totalorder %s336, %s338
    %p345 = scmp.eq.s32.totalorder %s29, 1
    %p346 = por %p344, %p345
    %p347 = scmp.ne.s32.totalorder %s338, %s339
    %p348 = scmp.eq.s32.totalorder %s29, 0
    %p349 = por %p347, %p348
    %p350 = scmp.ne.s32.totalorder %s338, %s339
    %p351 = scmp.eq.s32.totalorder %s30, 1
    %p352 = por %p350, %p351
    %p354 = scmp.ne.s32.totalorder %s339, %s353
    %p355 = scmp.eq.s32.totalorder %s30, 0
    %p356 = por %p354, %p355
    %s358 = sadd.s32 %s357, 1
    %p361 = scmp.eq.s32.totalorder %s24, 1
    %p362 = scmp.ne.s32.totalorder %s357, %s359
    %p363 = scmp.eq.s32.totalorder %s24, 0
    %p364 = por %p362, %p363
    %p365 = scmp.ne.s32.totalorder %s357, %s359
    %p366 = scmp.eq.s32.totalorder %s29, 1
    %p367 = por %p365, %p366
    %p368 = scmp.ne.s32.totalorder %s359, %s360
    %p369 = scmp.eq.s32.totalorder %s29, 0
    %p370 = por %p368, %p369
    %p371 = scmp.ne.s32.totalorder %s359, %s360
    %p372 = scmp.eq.s32.totalorder %s30, 1
    %p373 = por %p371, %p372
    %p375 = scmp.ne.s32.totalorder %s360, %s374
    %p376 = scmp.eq.s32.totalorder %s30, 0
    %p377 = por %p375, %p376
    %s379 = sadd.s32 %s378, 1
    %p382 = scmp.eq.s32.totalorder %s24, 1
    %p383 = scmp.ne.s32.totalorder %s378, %s380
    %p384 = scmp.eq.s32.totalorder %s24, 0
    %p385 = por %p383, %p384
    %p386 = scmp.ne.s32.totalorder %s378, %s380
    %p387 = scmp.eq.s32.totalorder %s29, 1
    %p388 = por %p386, %p387
    %p389 = scmp.ne.s32.totalorder %s380, %s381
    %p390 = scmp.eq.s32.totalorder %s29, 0
    %p391 = por %p389, %p390
    %p392 = scmp.ne.s32.totalorder %s380, %s381
    %p393 = scmp.eq.s32.totalorder %s30, 1
    %p394 = por %p392, %p393
    %p396 = scmp.ne.s32.totalorder %s381, %s395
    %p397 = scmp.eq.s32.totalorder %s30, 0
    %p398 = por %p396, %p397
    %s400 = sadd.s32 %s399, 1
    %p403 = scmp.eq.s32.totalorder %s24, 1
    %p404 = scmp.ne.s32.totalorder %s399, %s401
    %p405 = scmp.eq.s32.totalorder %s24, 0
    %p406 = por %p404, %p405
    %p407 = scmp.ne.s32.totalorder %s399, %s401
    %p408 = scmp.eq.s32.totalorder %s29, 1
    %p409 = por %p407, %p408
    %p410 = scmp.ne.s32.totalorder %s401, %s402
    %p411 = scmp.eq.s32.totalorder %s29, 0
    %p412 = por %p410, %p411
    %p413 = scmp.ne.s32.totalorder %s401, %s402
    %p414 = scmp.eq.s32.totalorder %s30, 1
    %p415 = por %p413, %p414
    %p417 = scmp.ne.s32.totalorder %s402, %s416
    %p418 = scmp.eq.s32.totalorder %s30, 0
    %p419 = por %p417, %p418
    %s420 = ssub.s32 %s24, %s31
    %p421 = scmp.eq.s32.totalorder %s420, 0
    %s423 = sadd.s32 %s422, 1
    %s424 = scalar_select %p421, %s422, %s423
    %p427 = pneg %p421
    %p428 = scmp.eq.s32.totalorder %s24, 1
    %p429 = por %p427, %p428
    %p430 = scmp.ne.s32.totalorder %s422, %s425
    %p431 = scmp.eq.s32.totalorder %s24, 0
    %p432 = por %p430, %p431
    %p433 = scmp.ne.s32.totalorder %s422, %s425
    %p434 = scmp.eq.s32.totalorder %s29, 1
    %p435 = por %p433, %p434
    %p436 = scmp.ne.s32.totalorder %s425, %s426
    %p437 = scmp.eq.s32.totalorder %s29, 0
    %p438 = por %p436, %p437
    %p439 = scmp.ne.s32.totalorder %s425, %s426
    %p440 = scmp.eq.s32.totalorder %s30, 1
    %p441 = por %p439, %p440
    %p443 = scmp.ne.s32.totalorder %s426, %s442
    %p444 = scmp.eq.s32.totalorder %s30, 0
    %p445 = por %p443, %p444
    %p446 = scmp.le.s32.totalorder 1, %s24
    %p447 = scmp.lt.s32.totalorder %s24, 3
    %p448 = pnand %p446, %p447
    %p449 = pneg %p448
    // Predicated region
    $region9: #{tnt_block_forward.3} parent=5 // pred_check
      _
    $region10: #{tnt_block_forward.3} parent=5 // pred_check_branch
      %451 = sbr.rel (%p448) target = $region12
    $region11: #{tnt_block_forward.3} parent=5 // pred_region
      %s452 = ssub.s32 %s24, 1
      // Predicated region
      $region13: #{tnt_block_forward.3} parent=11 // pred_check
        %p453 = pneg %p97
      $region14: #{tnt_block_forward.3} parent=11 // pred_check_branch
        %455 = sbr.rel (%p453) target = $region16
      $region15: #{tnt_block_forward.3} parent=11 // pred_region
        _
      $region16: #{tnt_block_forward.3} parent=11 // pred_fallthru
        _
      // Predicated region
      $region17: #{tnt_block_forward.3} parent=11 // pred_check
        %p456 = pneg %p118
      $region18: #{tnt_block_forward.3} parent=11 // pred_check_branch
        %458 = sbr.rel (%p456) target = $region20
      $region19: #{tnt_block_forward.3} parent=11 // pred_region
        _
      $region20: #{tnt_block_forward.3} parent=11 // pred_fallthru
        _
      // Predicated region
      $region21: #{tnt_block_forward.3} parent=11 // pred_check
        %p459 = pneg %p139
      $region22: #{tnt_block_forward.3} parent=11 // pred_check_branch
        %461 = sbr.rel (%p459) target = $region24
      $region23: #{tnt_block_forward.3} parent=11 // pred_region
        _
      $region24: #{tnt_block_forward.3} parent=11 // pred_fallthru
        _
      // Predicated region
      $region25: #{tnt_block_forward.3} parent=11 // pred_check
        %p462 = pneg %p160
      $region26: #{tnt_block_forward.3} parent=11 // pred_check_branch
        %464 = sbr.rel (%p462) target = $region28
      $region27: #{tnt_block_forward.3} parent=11 // pred_region
        _
      $region28: #{tnt_block_forward.3} parent=11 // pred_fallthru
        _
      // Predicated region
      $region29: #{tnt_block_forward.3} parent=11 // pred_check
        %p465 = pneg %p181
      $region30: #{tnt_block_forward.3} parent=11 // pred_check_branch
        %467 = sbr.rel (%p465) target = $region32
      $region31: #{tnt_block_forward.3} parent=11 // pred_region
        _
      $region32: #{tnt_block_forward.3} parent=11 // pred_fallthru
        _
      // Predicated region
      $region33: #{tnt_block_forward.3} parent=11 // pred_check
        %p468 = pneg %p202
      $region34: #{tnt_block_forward.3} parent=11 // pred_check_branch
        %470 = sbr.rel (%p468) target = $region36
      $region35: #{tnt_block_forward.3} parent=11 // pred_region
        _
      $region36: #{tnt_block_forward.3} parent=11 // pred_fallthru
        _
      // Predicated region
      $region37: #{tnt_block_forward.3} parent=11 // pred_check
        %p471 = pneg %p223
      $region38: #{tnt_block_forward.3} parent=11 // pred_check_branch
        %473 = sbr.rel (%p471) target = $region40
      $region39: #{tnt_block_forward.3} parent=11 // pred_region
        _
      $region40: #{tnt_block_forward.3} parent=11 // pred_fallthru
        _
      // Predicated region
      $region41: #{tnt_block_forward.3} parent=11 // pred_check
        %p474 = pneg %p244
      $region42: #{tnt_block_forward.3} parent=11 // pred_check_branch
        %476 = sbr.rel (%p474) target = $region44
      $region43: #{tnt_block_forward.3} parent=11 // pred_region
        _
      $region44: #{tnt_block_forward.3} parent=11 // pred_fallthru
        _
      // Predicated region
      $region45: #{tnt_block_forward.3} parent=11 // pred_check
        %p477 = pneg %p265
      $region46: #{tnt_block_forward.3} parent=11 // pred_check_branch
        %479 = sbr.rel (%p477) target = $region48
      $region47: #{tnt_block_forward.3} parent=11 // pred_region
        _
      $region48: #{tnt_block_forward.3} parent=11 // pred_fallthru
        _
      // Predicated region
      $region49: #{tnt_block_forward.3} parent=11 // pred_check
        %p480 = pneg %p286
      $region50: #{tnt_block_forward.3} parent=11 // pred_check_branch
        %482 = sbr.rel (%p480) target = $region52
      $region51: #{tnt_block_forward.3} parent=11 // pred_region
        _
      $region52: #{tnt_block_forward.3} parent=11 // pred_fallthru
        _
      // Predicated region
      $region53: #{tnt_block_forward.3} parent=11 // pred_check
        %p483 = pneg %p307
      $region54: #{tnt_block_forward.3} parent=11 // pred_check_branch
        %485 = sbr.rel (%p483) target = $region56
      $region55: #{tnt_block_forward.3} parent=11 // pred_region
        _
      $region56: #{tnt_block_forward.3} parent=11 // pred_fallthru
        _
      // Predicated region
      $region57: #{tnt_block_forward.3} parent=11 // pred_check
        %p486 = pneg %p328
      $region58: #{tnt_block_forward.3} parent=11 // pred_check_branch
        %488 = sbr.rel (%p486) target = $region60
      $region59: #{tnt_block_forward.3} parent=11 // pred_region
        _
      $region60: #{tnt_block_forward.3} parent=11 // pred_fallthru
        _
      // Predicated region
      $region61: #{tnt_block_forward.3} parent=11 // pred_check
        %p489 = pneg %p349
      $region62: #{tnt_block_forward.3} parent=11 // pred_check_branch
        %491 = sbr.rel (%p489) target = $region64
      $region63: #{tnt_block_forward.3} parent=11 // pred_region
        _
      $region64: #{tnt_block_forward.3} parent=11 // pred_fallthru
        _
      // Predicated region
      $region65: #{tnt_block_forward.3} parent=11 // pred_check
        %p492 = pneg %p370
      $region66: #{tnt_block_forward.3} parent=11 // pred_check_branch
        %494 = sbr.rel (%p492) target = $region68
      $region67: #{tnt_block_forward.3} parent=11 // pred_region
        _
      $region68: #{tnt_block_forward.3} parent=11 // pred_fallthru
        _
      // Predicated region
      $region69: #{tnt_block_forward.3} parent=11 // pred_check
        %p495 = pneg %p391
      $region70: #{tnt_block_forward.3} parent=11 // pred_check_branch
        %497 = sbr.rel (%p495) target = $region72
      $region71: #{tnt_block_forward.3} parent=11 // pred_region
        _
      $region72: #{tnt_block_forward.3} parent=11 // pred_fallthru
        _
      // Predicated region
      $region73: #{tnt_block_forward.3} parent=11 // pred_check
        %p498 = pneg %p412
      $region74: #{tnt_block_forward.3} parent=11 // pred_check_branch
        %500 = sbr.rel (%p498) target = $region76
      $region75: #{tnt_block_forward.3} parent=11 // pred_region
        _
      $region76: #{tnt_block_forward.3} parent=11 // pred_fallthru
        _
    $region12: #{tnt_block_forward.3} parent=5 // pred_fallthru
      _
    %p501 = scmp.lt.s32.totalorder %s24, 2
    // Predicated region
    $region77: #{tnt_block_forward.3} parent=5 // pred_check
      %p502 = pneg %p501
    $region78: #{tnt_block_forward.3} parent=5 // pred_check_branch
      %504 = sbr.rel (%p502) target = $region80
    $region79: #{tnt_block_forward.3} parent=5 // pred_region
      // Predicated region
      $region81: #{tnt_block_forward.3} parent=79 // pred_check
        %p505 = pneg %p44
      $region82: #{tnt_block_forward.3} parent=79 // pred_check_branch
        %507 = sbr.rel (%p505) target = $region84
      $region83: #{tnt_block_forward.3} parent=79 // pred_region
        %p508 = scmp.lt.s32.totalorder %s24, 1
        %s509 = scalar_select %p508, %s24, 1
        %s510 = smul.addr %s509, 8
        %s511 = scalar_lea.vmem %s0, %s510
      $region84: #{tnt_block_forward.3} parent=79 // pred_fallthru
        _
      // Predicated region
      $region85: #{tnt_block_forward.3} parent=79 // pred_check
        %p512 = pneg %p70
      $region86: #{tnt_block_forward.3} parent=79 // pred_check_branch
        %514 = sbr.rel (%p512) target = $region88
      $region87: #{tnt_block_forward.3} parent=79 // pred_region
        %p515 = scmp.lt.s32.totalorder %s24, 1
        %s516 = scalar_select %p515, %s24, 1
        %s517 = smul.addr %s516, 2
        %s518 = smul.addr %s517, 4
        %s519 = scalar_lea.vmem %s1, %s518
      $region88: #{tnt_block_forward.3} parent=79 // pred_fallthru
        _
    $region80: #{tnt_block_forward.3} parent=5 // pred_fallthru
      _
    %p520 = scmp.le.s32.totalorder 1, %s24
    %p521 = scmp.lt.s32.totalorder %s24, 3
    %p522 = pnand %p520, %p521
    %p523 = pneg %p522
    // Predicated region
    $region89: #{tnt_block_forward.3} parent=5 // pred_check
      _
    $region90: #{tnt_block_forward.3} parent=5 // pred_check_branch
      %525 = sbr.rel (%p522) target = $region92
    $region91: #{tnt_block_forward.3} parent=5 // pred_region
      %s526 = ssub.s32 %s24, 1
      %p527 = scmp.lt.s32.totalorder %s29, 1
      %s528 = scalar_select %p527, %s29, 1
      %s529 = smul.addr %s528, 8
      %s530 = scalar_lea.vmem %s0, %s529
      %p531 = pneg %p50
      %p532 = pneg %p47
      %p533 = scmp.lt.s32.totalorder %s29, 1
      %s534 = scalar_select %p533, %s29, 1
      %s535 = smul.addr %s534, 2
      %s536 = smul.addr %s535, 4
      %s537 = scalar_lea.vmem %s1, %s536
      %p538 = pneg %p76
      %p539 = pneg %p73
      %p540 = pneg %p97
      %p541 = pneg %p94
      %p542 = pneg %p118
      %p543 = pneg %p115
      %p544 = pneg %p139
      %p545 = pneg %p136
      %p546 = pneg %p160
      %p547 = pneg %p157
      %p548 = pneg %p181
      %p549 = pneg %p178
      %p550 = pneg %p202
      %p551 = pneg %p199
      %p552 = pneg %p223
      %p553 = pneg %p220
      %p554 = pneg %p244
      %p555 = pneg %p241
      %p556 = pneg %p265
      %p557 = pneg %p262
      %p558 = pneg %p286
      %p559 = pneg %p283
      %p560 = pneg %p307
      %p561 = pneg %p304
      %p562 = pneg %p328
      %p563 = pneg %p325
      %p564 = pneg %p349
      %p565 = pneg %p346
      %p566 = pneg %p370
      %p567 = pneg %p367
      %p568 = pneg %p391
      %p569 = pneg %p388
      %p570 = pneg %p412
      %p571 = pneg %p409
      %p572 = pneg %p438
      %p573 = pneg %p435
      %p574 = scmp.lt.s32.totalorder %s29, 1
      %s575 = scalar_select %p574, %s29, 1
      %s576 = smul.addr %s575, 8
      %s577 = scalar_lea.vmem %s18, %s576
      %p578 = scmp.lt.s32.totalorder %s29, 1
      %s579 = scalar_select %p578, %s29, 1
      %s580 = smul.addr %s579, 8
      %s581 = scalar_lea.vmem %s0, %s580
      %p582 = scmp.lt.s32.totalorder %s29, 1
      %s583 = scalar_select %p582, %s29, 1
      %s584 = smul.addr %s583, 2
      %s585 = smul.addr %s584, 4
      %s586 = scalar_lea.vmem %s1, %s585
      %p587 = scmp.lt.s32.totalorder %s29, 1
      %s588 = scalar_select %p587, %s29, 1
      %s589 = smul.addr %s588, 8
      %s590 = scalar_lea.vmem %s18, %s589
      %v591 = vld [vmem:[%s581] sm:$0x1f]
      %v592 = vld [vmem:[%s586] sm:$0xff]
      %v593 = vld [vmem:[%s2] sm:$0x3]
      %v594 = vld [vmem:[%s3] sm:$0x3]
      %v596 = vcombine.high %v592, %v592
      %vm598 = vcmask 1043456
      %v599 = vsel %vm598, %v592, 0.0
      %v600 = vsel %vm598, %v596, 0.0
      %v601 = vadd.f32 %v599, %v600
      %602 = vadd.xlane.f32.xlu0 %v601
      %v603 = vpop.xlane.xlu0 %602
      %v604 = vrcp.pop 256.0
      %v605 = vmul.f32 %v603, %v604
      %v608 = vunpack.c.l.s4 839922192
      %v609 = vunpack.c.0.s8 %v608
      %v610 = vlaneseq
      %v611 = vshrl.u32 %v610, 7
      %v612 = vsub.s32 %v609, %v611
      %v613 = vrot.slane %v605, %v612
      %v615 = vsub.f32 %v592, %v613
      %v616 = vmul.f32 %v615, %v615
      %v618 = vcombine.high %v616, %v616
      %v620 = vsel %vm598, %v616, 0.0
      %v621 = vsel %vm598, %v618, 0.0
      %v622 = vadd.f32 %v620, %v621
      %623 = vadd.xlane.f32.xlu0 %v622
      %v624 = vpop.xlane.xlu0 %623
      %v625 = vmul.f32 %v624, %v604
      %v626 = vadd.f32 %v625, 1e-06
      %v627 = vrsqrt.pop %v626
      %v630 = vunpack.c.l.s4 839922192
      %v631 = vunpack.c.0.s8 %v630
      %v632 = vlaneseq
      %v633 = vshrl.u32 %v632, 7
      %v634 = vsub.s32 %v631, %v633
      %v635 = vrot.slane %v627, %v634
      %v637 = vmul.f32 %v615, %v635
      %v639 = vlaneseq
      %v640 = vshrl.u32 %v639, 7
      %v641 = vsub.s32 0, %v640
      %v642 = vrot.slane %v593, %v641
      %v643 = vlaneseq
      %v644 = vshrl.u32 %v643, 7
      %v645 = vsub.s32 1, %v644
      %v646 = vrot.slane %v593, %v645
      %v647 = vcombine.low %v642, %v646
      %v649 = vmul.f32 %v637, %v647
      %v651 = vlaneseq
      %v652 = vshrl.u32 %v651, 7
      %v653 = vsub.s32 0, %v652
      %v654 = vrot.slane %v594, %v653
      %v655 = vlaneseq
      %v656 = vshrl.u32 %v655, 7
      %v657 = vsub.s32 1, %v656
      %v658 = vrot.slane %v594, %v657
      %v659 = vcombine.low %v654, %v658
      %v661 = vadd.f32 %v649, %v659
      %v662 = vld [vmem:[%s4] sm:$0xff]
      %v663 = vld [vmem:[%s4 + $0x8] sm:$0xff]
      %v664 = vld [vmem:[%s4 + $0x10] sm:$0xff]
      %v665 = vld [vmem:[%s4 + $0x18] sm:$0xff]
      %v666 = vld [vmem:[%s4 + $0x20] sm:$0xff]
      %v667 = vld [vmem:[%s4 + $0x28] sm:$0xff]
      %v668 = vld [vmem:[%s4 + $0x30] sm:$0xff]
      %v669 = vld [vmem:[%s4 + $0x38] sm:$0xff]
      %v670 = vld [vmem:[%s4 + $0x40] sm:$0xff]
      %v671 = vld [vmem:[%s4 + $0x48] sm:$0xff]
      %v672 = vld [vmem:[%s4 + $0x50] sm:$0xff]
      %v673 = vld [vmem:[%s4 + $0x58] sm:$0xff]
      %v674 = vld [vmem:[%s4 + $0x60] sm:$0xff]
      %v675 = vld [vmem:[%s4 + $0x68] sm:$0xff]
      %v676 = vld [vmem:[%s4 + $0x70] sm:$0xff]
      %v677 = vld [vmem:[%s4 + $0x78] sm:$0xff]
      %v678 = vld [vmem:[%s4 + $0x80] sm:$0xff]
      %v679 = vld [vmem:[%s4 + $0x88] sm:$0xff]
      %v680 = vld [vmem:[%s4 + $0x90] sm:$0xff]
      %v681 = vld [vmem:[%s4 + $0x98] sm:$0xff]
      %v682 = vld [vmem:[%s4 + $0xa0] sm:$0xff]
      %v683 = vld [vmem:[%s4 + $0xa8] sm:$0xff]
      %v684 = vld [vmem:[%s4 + $0xb0] sm:$0xff]
      %v685 = vld [vmem:[%s4 + $0xb8] sm:$0xff]
      %v686 = vld [vmem:[%s4 + $0xc0] sm:$0xff]
      %v687 = vld [vmem:[%s4 + $0xc8] sm:$0xff]
      %v688 = vld [vmem:[%s4 + $0xd0] sm:$0xff]
      %v689 = vld [vmem:[%s4 + $0xd8] sm:$0xff]
      %v690 = vld [vmem:[%s4 + $0xe0] sm:$0xff]
      %v691 = vld [vmem:[%s4 + $0xe8] sm:$0xff]
      %v692 = vld [vmem:[%s4 + $0xf0] sm:$0xff]
      %v693 = vld [vmem:[%s4 + $0xf8] sm:$0xff]
      %v695 = vcombine.high %v661, %v661
      %697 = vmatprep.subr.mxu0 0.0
      %698 = vmatpush1.msra.mxu0 %v677
      %699 = vmatprep.subr.mxu0 0.0
      %700 = vmatpush1.msra.mxu0 %v676
      %701 = vmatprep.subr.mxu0 0.0
      %702 = vmatpush1.msra.mxu0 %v675
      %703 = vmatprep.subr.mxu0 0.0
      %704 = vmatpush1.msra.mxu0 %v674
      %705 = vmatprep.subr.mxu0 0.0
      %706 = vmatpush1.msra.mxu0 %v673
      %707 = vmatprep.subr.mxu0 0.0
      %708 = vmatpush1.msra.mxu0 %v672
      %709 = vmatprep.subr.mxu0 0.0
      %710 = vmatpush1.msra.mxu0 %v671
      %711 = vmatprep.subr.mxu0 0.0
      %712 = vmatpush1.msra.mxu0 %v670
      %713 = vmatprep.subr.mxu0 0.0
      %714 = vmatpush1.msra.mxu0 %v669
      %715 = vmatprep.subr.mxu0 0.0
      %716 = vmatpush1.msra.mxu0 %v668
      %717 = vmatprep.subr.mxu0 0.0
      %718 = vmatpush1.msra.mxu0 %v667
      %719 = vmatprep.subr.mxu0 0.0
      %720 = vmatpush1.msra.mxu0 %v666
      %721 = vmatprep.subr.mxu0 0.0
      %722 = vmatpush1.msra.mxu0 %v665
      %723 = vmatprep.subr.mxu0 0.0
      %724 = vmatpush1.msra.mxu0 %v664
      %725 = vmatprep.subr.mxu0 0.0
      %726 = vmatpush1.msra.mxu0 %v663
      %727 = vmatprep.subr.mxu0 0.0
      %728 = vmatpush1.msra.mxu0 %v662
      %729 = vmatprep.subr.mxu0 0.0
      %730 = vmatpush2.msra.mxu0 %v693
      %731 = vmatprep.subr.mxu0 0.0
      %732 = vmatpush2.msra.mxu0 %v692
      %733 = vmatprep.subr.mxu0 0.0
      %734 = vmatpush2.msra.mxu0 %v691
      %735 = vmatprep.subr.mxu0 0.0
      %736 = vmatpush2.msra.mxu0 %v690
      %737 = vmatprep.subr.mxu0 0.0
      %738 = vmatpush2.msra.mxu0 %v689
      %739 = vmatprep.subr.mxu0 0.0
      %740 = vmatpush2.msra.mxu0 %v688
      %741 = vmatprep.subr.mxu0 0.0
      %742 = vmatpush2.msra.mxu0 %v687
      %743 = vmatprep.subr.mxu0 0.0
      %744 = vmatpush2.msra.mxu0 %v686
      %745 = vmatprep.subr.mxu0 0.0
      %746 = vmatpush2.msra.mxu0 %v685
      %747 = vmatprep.subr.mxu0 0.0
      %748 = vmatpush2.msra.mxu0 %v684
      %749 = vmatprep.subr.mxu0 0.0
      %750 = vmatpush2.msra.mxu0 %v683
      %751 = vmatprep.subr.mxu0 0.0
      %752 = vmatpush2.msra.mxu0 %v682
      %753 = vmatprep.subr.mxu0 0.0
      %754 = vmatpush2.msra.mxu0 %v681
      %755 = vmatprep.subr.mxu0 0.0
      %756 = vmatpush2.msra.mxu0 %v680
      %757 = vmatprep.subr.mxu0 0.0
      %758 = vmatpush2.msra.mxu0 %v679
      %759 = vmatprep.subr.mxu0 0.0
      %760 = vmatpush2.msra.mxu0 %v678
      %761 = vmatprep.mubr.f32.mxu0 %v695
      %762 = vmatmul.mubr.f32.gmra.mxu0 %v661
      %v763 = vpop.f32.mrf.mxu0
      %v764 = vadd.f32 0.0, %v763
      %v765 = vpop.f32.mrf.mxu0
      %766 = vdwg.mxu0
      %v767 = vld [vmem:[%s5] sm:$0x1]
      %v768 = vld [vmem:[%s6] sm:$0x1]
      %vm769 = vcmask 519168
      %v770 = vsel %vm769, %v764, 0.0
      %771 = vadd.xlane.f32.xlu0 %v770
      %v772 = vpop.xlane.xlu0 %771
      %v773 = vrcp.pop 64.0
      %v774 = vmul.f32 %v772, %v773
      %v775 = vsub.f32 %v764, %v774
      %v776 = vmul.f32 %v775, %v775
      %v777 = vsel %vm769, %v776, 0.0
      %778 = vadd.xlane.f32.xlu0 %v777
      %v779 = vpop.xlane.xlu0 %778
      %v780 = vmul.f32 %v779, %v773
      %v781 = vadd.f32 %v780, 1e-06
      %v782 = vrsqrt.pop %v781
      %v783 = vmul.f32 %v775, %v782
      %v785 = vlaneseq
      %v786 = vshrl.u32 %v785, 7
      %v787 = vsub.s32 0, %v786
      %v788 = vrot.slane %v767, %v787
      %v790 = vmul.f32 %v783, %v788
      %v792 = vlaneseq
      %v793 = vshrl.u32 %v792, 7
      %v794 = vsub.s32 0, %v793
      %v795 = vrot.slane %v768, %v794
      %v797 = vadd.f32 %v790, %v795
      %v799 = vrot.slane %v797, 7
      %v801 = vadd.f32 %v591, %v799
      %vm802 = vcmask 1040384
      %v803 = vsel %vm802, %v591, %v801
      %v804 = vld [vmem:[%s7] sm:$0x1]
      %v805 = vld [vmem:[%s8] sm:$0x1]
      %vm806 = vcmask 520192
      %v807 = vsel %vm806, %v803, 0.0
      %808 = vadd.xlane.f32.xlu0 %v807
      %v809 = vpop.xlane.xlu0 %808
      %v810 = vmul.f32 %v809, %v773
      %v811 = vsub.f32 %v803, %v810
      %v812 = vmul.f32 %v811, %v811
      %v813 = vsel %vm806, %v812, 0.0
      %814 = vadd.xlane.f32.xlu0 %v813
      %v815 = vpop.xlane.xlu0 %814
      %v816 = vmul.f32 %v815, %v773
      %v817 = vadd.f32 %v816, 1e-06
      %v818 = vrsqrt.pop %v817
      %v819 = vmul.f32 %v811, %v818
      %v821 = vlaneseq
      %v822 = vshrl.u32 %v821, 7
      %v823 = vsub.s32 0, %v822
      %v824 = vrot.slane %v804, %v823
      %v826 = vmul.f32 %v819, %v824
      %v828 = vlaneseq
      %v829 = vshrl.u32 %v828, 7
      %v830 = vsub.s32 0, %v829
      %v831 = vrot.slane %v805, %v830
      %v833 = vadd.f32 %v826, %v831
      %v834 = vld [vmem:[%s9] sm:$0xff]
      %v835 = vld [vmem:[%s9 + $0x8] sm:$0xff]
      %v836 = vld [vmem:[%s9 + $0x10] sm:$0xff]
      %v837 = vld [vmem:[%s9 + $0x18] sm:$0xff]
      %v838 = vld [vmem:[%s9 + $0x20] sm:$0xff]
      %v839 = vld [vmem:[%s9 + $0x28] sm:$0xff]
      %v840 = vld [vmem:[%s9 + $0x30] sm:$0xff]
      %v841 = vld [vmem:[%s9 + $0x38] sm:$0xff]
      %vm842 = vcmask 523264
      %v844 = vsel %vm842, %v833, 0
      %846 = vmatprep.subr.mxu0 0.0
      %847 = vmatpush1.msra.mxu0 0.0
      %848 = vmatprep.subr.mxu0 0.0
      %849 = vmatpush1.msra.mxu0 0.0
      %850 = vmatprep.subr.mxu0 0.0
      %851 = vmatpush1.msra.mxu0 0.0
      %852 = vmatprep.subr.mxu0 0.0
      %853 = vmatpush1.msra.mxu0 0.0
      %854 = vmatprep.subr.mxu0 0.0
      %855 = vmatpush1.msra.mxu0 0.0
      %856 = vmatprep.subr.mxu0 0.0
      %857 = vmatpush1.msra.mxu0 0.0
      %858 = vmatprep.subr.mxu0 0.0
      %859 = vmatpush1.msra.mxu0 0.0
      %860 = vmatprep.subr.mxu0 0.0
      %861 = vmatpush1.msra.mxu0 0.0
      %862 = vmatprep.subr.mxu0 0.0
      %863 = vmatpush1.msra.mxu0 %v841
      %864 = vmatprep.subr.mxu0 0.0
      %865 = vmatpush1.msra.mxu0 %v840
      %866 = vmatprep.subr.mxu0 0.0
      %867 = vmatpush1.msra.mxu0 %v839
      %868 = vmatprep.subr.mxu0 0.0
      %869 = vmatpush1.msra.mxu0 %v838
      %870 = vmatprep.subr.mxu0 0.0
      %871 = vmatpush1.msra.mxu0 %v837
      %872 = vmatprep.subr.mxu0 0.0
      %873 = vmatpush1.msra.mxu0 %v836
      %874 = vmatprep.subr.mxu0 0.0
      %875 = vmatpush1.msra.mxu0 %v835
      %876 = vmatprep.subr.mxu0 0.0
      %877 = vmatpush1.msra.mxu0 %v834
      %878 = vmatprep.subr.mxu0 0.0
      %879 = vmatpush2.msra.mxu0 0.0
      %880 = vmatprep.subr.mxu0 0.0
      %881 = vmatpush2.msra.mxu0 0.0
      %882 = vmatprep.subr.mxu0 0.0
      %883 = vmatpush2.msra.mxu0 0.0
      %884 = vmatprep.subr.mxu0 0.0
      %885 = vmatpush2.msra.mxu0 0.0
      %886 = vmatprep.subr.mxu0 0.0
      %887 = vmatpush2.msra.mxu0 0.0
      %888 = vmatprep.subr.mxu0 0.0
      %889 = vmatpush2.msra.mxu0 0.0
      %890 = vmatprep.subr.mxu0 0.0
      %891 = vmatpush2.msra.mxu0 0.0
      %892 = vmatprep.subr.mxu0 0.0
      %893 = vmatpush2.msra.mxu0 0.0
      %894 = vmatprep.subr.mxu0 0.0
      %895 = vmatpush2.msra.mxu0 0.0
      %896 = vmatprep.subr.mxu0 0.0
      %897 = vmatpush2.msra.mxu0 0.0
      %898 = vmatprep.subr.mxu0 0.0
      %899 = vmatpush2.msra.mxu0 0.0
      %900 = vmatprep.subr.mxu0 0.0
      %901 = vmatpush2.msra.mxu0 0.0
      %902 = vmatprep.subr.mxu0 0.0
      %903 = vmatpush2.msra.mxu0 0.0
      %904 = vmatprep.subr.mxu0 0.0
      %905 = vmatpush2.msra.mxu0 0.0
      %906 = vmatprep.subr.mxu0 0.0
      %907 = vmatpush2.msra.mxu0 0.0
      %908 = vmatprep.subr.mxu0 0.0
      %909 = vmatpush2.msra.mxu0 0.0
      %910 = vmatprep.mubr.f32.mxu0 0.0
      %911 = vmatmul.mubr.f32.gmra.mxu0 %v844
      %v912 = vpop.f32.mrf.mxu0
      %v913 = vadd.f32 0.0, %v912
      %v914 = vpop.f32.mrf.mxu0
      %915 = vdwg.mxu0
      %s916 = scalar_lea.vmem %s9, 64
      %v917 = vld [vmem:[%s916] sm:$0xff]
      %v918 = vld [vmem:[%s916 + $0x8] sm:$0xff]
      %v919 = vld [vmem:[%s916 + $0x10] sm:$0xff]
      %v920 = vld [vmem:[%s916 + $0x18] sm:$0xff]
      %v921 = vld [vmem:[%s916 + $0x20] sm:$0xff]
      %v922 = vld [vmem:[%s916 + $0x28] sm:$0xff]
      %v923 = vld [vmem:[%s916 + $0x30] sm:$0xff]
      %v924 = vld [vmem:[%s916 + $0x38] sm:$0xff]
      %925 = vmatprep.subr.mxu0 0.0
      %926 = vmatpush1.msra.mxu0 0.0
      %927 = vmatprep.subr.mxu0 0.0
      %928 = vmatpush1.msra.mxu0 0.0
      %929 = vmatprep.subr.mxu0 0.0
      %930 = vmatpush1.msra.mxu0 0.0
      %931 = vmatprep.subr.mxu0 0.0
      %932 = vmatpush1.msra.mxu0 0.0
      %933 = vmatprep.subr.mxu0 0.0
      %934 = vmatpush1.msra.mxu0 0.0
      %935 = vmatprep.subr.mxu0 0.0
      %936 = vmatpush1.msra.mxu0 0.0
      %937 = vmatprep.subr.mxu0 0.0
      %938 = vmatpush1.msra.mxu0 0.0
      %939 = vmatprep.subr.mxu0 0.0
      %940 = vmatpush1.msra.mxu0 0.0
      %941 = vmatprep.subr.mxu0 0.0
      %942 = vmatpush1.msra.mxu0 %v924
      %943 = vmatprep.subr.mxu0 0.0
      %944 = vmatpush1.msra.mxu0 %v923
      %945 = vmatprep.subr.mxu0 0.0
      %946 = vmatpush1.msra.mxu0 %v922
      %947 = vmatprep.subr.mxu0 0.0
      %948 = vmatpush1.msra.mxu0 %v921
      %949 = vmatprep.subr.mxu0 0.0
      %950 = vmatpush1.msra.mxu0 %v920
      %951 = vmatprep.subr.mxu0 0.0
      %952 = vmatpush1.msra.mxu0 %v919
      %953 = vmatprep.subr.mxu0 0.0
      %954 = vmatpush1.msra.mxu0 %v918
      %955 = vmatprep.subr.mxu0 0.0
      %956 = vmatpush1.msra.mxu0 %v917
      %957 = vmatprep.subr.mxu0 0.0
      %958 = vmatpush2.msra.mxu0 0.0
      %959 = vmatprep.subr.mxu0 0.0
      %960 = vmatpush2.msra.mxu0 0.0
      %961 = vmatprep.subr.mxu0 0.0
      %962 = vmatpush2.msra.mxu0 0.0
      %963 = vmatprep.subr.mxu0 0.0
      %964 = vmatpush2.msra.mxu0 0.0
      %965 = vmatprep.subr.mxu0 0.0
      %966 = vmatpush2.msra.mxu0 0.0
      %967 = vmatprep.subr.mxu0 0.0
      %968 = vmatpush2.msra.mxu0 0.0
      %969 = vmatprep.subr.mxu0 0.0
      %970 = vmatpush2.msra.mxu0 0.0
      %971 = vmatprep.subr.mxu0 0.0
      %972 = vmatpush2.msra.mxu0 0.0
      %973 = vmatprep.subr.mxu0 0.0
      %974 = vmatpush2.msra.mxu0 0.0
      %975 = vmatprep.subr.mxu0 0.0
      %976 = vmatpush2.msra.mxu0 0.0
      %977 = vmatprep.subr.mxu0 0.0
      %978 = vmatpush2.msra.mxu0 0.0
      %979 = vmatprep.subr.mxu0 0.0
      %980 = vmatpush2.msra.mxu0 0.0
      %981 = vmatprep.subr.mxu0 0.0
      %982 = vmatpush2.msra.mxu0 0.0
      %983 = vmatprep.subr.mxu0 0.0
      %984 = vmatpush2.msra.mxu0 0.0
      %985 = vmatprep.subr.mxu0 0.0
      %986 = vmatpush2.msra.mxu0 0.0
      %987 = vmatprep.subr.mxu0 0.0
      %988 = vmatpush2.msra.mxu0 0.0
      %989 = vmatprep.mubr.f32.mxu0 0.0
      %990 = vmatmul.mubr.f32.gmra.mxu0 %v844
      %v991 = vpop.f32.mrf.mxu0
      %v992 = vadd.f32 0.0, %v991
      %v993 = vpop.f32.mrf.mxu0
      %994 = vdwg.mxu0
      %s995 = scalar_lea.vmem %s9, 128
      %v996 = vld [vmem:[%s995] sm:$0xff]
      %v997 = vld [vmem:[%s995 + $0x8] sm:$0xff]
      %v998 = vld [vmem:[%s995 + $0x10] sm:$0xff]
      %v999 = vld [vmem:[%s995 + $0x18] sm:$0xff]
      %v1000 = vld [vmem:[%s995 + $0x20] sm:$0xff]
      %v1001 = vld [vmem:[%s995 + $0x28] sm:$0xff]
      %v1002 = vld [vmem:[%s995 + $0x30] sm:$0xff]
      %v1003 = vld [vmem:[%s995 + $0x38] sm:$0xff]
      %1004 = vmatprep.subr.mxu0 0.0
      %1005 = vmatpush1.msra.mxu0 0.0
      %1006 = vmatprep.subr.mxu0 0.0
      %1007 = vmatpush1.msra.mxu0 0.0
      %1008 = vmatprep.subr.mxu0 0.0
      %1009 = vmatpush1.msra.mxu0 0.0
      %1010 = vmatprep.subr.mxu0 0.0
      %1011 = vmatpush1.msra.mxu0 0.0
      %1012 = vmatprep.subr.mxu0 0.0
      %1013 = vmatpush1.msra.mxu0 0.0
      %1014 = vmatprep.subr.mxu0 0.0
      %1015 = vmatpush1.msra.mxu0 0.0
      %1016 = vmatprep.subr.mxu0 0.0
      %1017 = vmatpush1.msra.mxu0 0.0
      %1018 = vmatprep.subr.mxu0 0.0
      %1019 = vmatpush1.msra.mxu0 0.0
      %1020 = vmatprep.subr.mxu0 0.0
      %1021 = vmatpush1.msra.mxu0 %v1003
      %1022 = vmatprep.subr.mxu0 0.0
      %1023 = vmatpush1.msra.mxu0 %v1002
      %1024 = vmatprep.subr.mxu0 0.0
      %1025 = vmatpush1.msra.mxu0 %v1001
      %1026 = vmatprep.subr.mxu0 0.0
      %1027 = vmatpush1.msra.mxu0 %v1000
      %1028 = vmatprep.subr.mxu0 0.0
      %1029 = vmatpush1.msra.mxu0 %v999
      %1030 = vmatprep.subr.mxu0 0.0
      %1031 = vmatpush1.msra.mxu0 %v998
      %1032 = vmatprep.subr.mxu0 0.0
      %1033 = vmatpush1.msra.mxu0 %v997
      %1034 = vmatprep.subr.mxu0 0.0
      %1035 = vmatpush1.msra.mxu0 %v996
      %1036 = vmatprep.subr.mxu0 0.0
      %1037 = vmatpush2.msra.mxu0 0.0
      %1038 = vmatprep.subr.mxu0 0.0
      %1039 = vmatpush2.msra.mxu0 0.0
      %1040 = vmatprep.subr.mxu0 0.0
      %1041 = vmatpush2.msra.mxu0 0.0
      %1042 = vmatprep.subr.mxu0 0.0
      %1043 = vmatpush2.msra.mxu0 0.0
      %1044 = vmatprep.subr.mxu0 0.0
      %1045 = vmatpush2.msra.mxu0 0.0
      %1046 = vmatprep.subr.mxu0 0.0
      %1047 = vmatpush2.msra.mxu0 0.0
      %1048 = vmatprep.subr.mxu0 0.0
      %1049 = vmatpush2.msra.mxu0 0.0
      %1050 = vmatprep.subr.mxu0 0.0
      %1051 = vmatpush2.msra.mxu0 0.0
      %1052 = vmatprep.subr.mxu0 0.0
      %1053 = vmatpush2.msra.mxu0 0.0
      %1054 = vmatprep.subr.mxu0 0.0
      %1055 = vmatpush2.msra.mxu0 0.0
      %1056 = vmatprep.subr.mxu0 0.0
      %1057 = vmatpush2.msra.mxu0 0.0
      %1058 = vmatprep.subr.mxu0 0.0
      %1059 = vmatpush2.msra.mxu0 0.0
      %1060 = vmatprep.subr.mxu0 0.0
      %1061 = vmatpush2.msra.mxu0 0.0
      %1062 = vmatprep.subr.mxu0 0.0
      %1063 = vmatpush2.msra.mxu0 0.0
      %1064 = vmatprep.subr.mxu0 0.0
      %1065 = vmatpush2.msra.mxu0 0.0
      %1066 = vmatprep.subr.mxu0 0.0
      %1067 = vmatpush2.msra.mxu0 0.0
      %1068 = vmatprep.mubr.f32.mxu0 0.0
      %1069 = vmatmul.mubr.f32.gmra.mxu0 %v844
      %v1070 = vpop.f32.mrf.mxu0
      %v1071 = vadd.f32 0.0, %v1070
      %v1072 = vpop.f32.mrf.mxu0
      %1073 = vdwg.mxu0
      %v1074 = vlaneseq
      %v1075 = vand.u32 %v1074, 127
      %vm1076 = vcmp.ge.s32.totalorder %v1075, 0
      %vm1077 = vcmp.lt.s32.totalorder %v1075, 16
      %vm1078 = vmand %vm1076, %vm1077
      %v1079 = vsel %vm1078, 1, 0
      %vm1080 = vcmp.eq.s32.totalorder %v1079, 1
      %v1081 = vsel %vm1080, %v913, 0.0
      %v1082 = vsel %vm1080, %v1071, 0.0
      %v1084 = vsel %vm842, %v1081, 0
      %v1087 = vsel %vm842, %v992, 0
      %1089 = vmatprep.subr.mxu0 0.0
      %1090 = vmatpush1.xpose.msra.mxu0 0.0
      %1091 = vmatprep.subr.mxu0 0.0
      %1092 = vmatpush1.xpose.msra.mxu0 0.0
      %1093 = vmatprep.subr.mxu0 0.0
      %1094 = vmatpush1.xpose.msra.mxu0 0.0
      %1095 = vmatprep.subr.mxu0 0.0
      %1096 = vmatpush1.xpose.msra.mxu0 0.0
      %1097 = vmatprep.subr.mxu0 0.0
      %1098 = vmatpush1.xpose.msra.mxu0 0.0
      %1099 = vmatprep.subr.mxu0 0.0
      %1100 = vmatpush1.xpose.msra.mxu0 0.0
      %1101 = vmatprep.subr.mxu0 0.0
      %1102 = vmatpush1.xpose.msra.mxu0 0.0
      %1103 = vmatprep.subr.mxu0 0.0
      %1104 = vmatpush1.xpose.msra.mxu0 0.0
      %1105 = vmatprep.subr.mxu0 0.0
      %1106 = vmatpush1.xpose.msra.mxu0 0.0
      %1107 = vmatprep.subr.mxu0 0.0
      %1108 = vmatpush1.xpose.msra.mxu0 0.0
      %1109 = vmatprep.subr.mxu0 0.0
      %1110 = vmatpush1.xpose.msra.mxu0 0.0
      %1111 = vmatprep.subr.mxu0 0.0
      %1112 = vmatpush1.xpose.msra.mxu0 0.0
      %1113 = vmatprep.subr.mxu0 0.0
      %1114 = vmatpush1.xpose.msra.mxu0 0.0
      %1115 = vmatprep.subr.mxu0 0.0
      %1116 = vmatpush1.xpose.msra.mxu0 0.0
      %1117 = vmatprep.subr.mxu0 0.0
      %1118 = vmatpush1.xpose.msra.mxu0 0.0
      %1119 = vmatprep.subr.mxu0 0.0
      %1120 = vmatpush1.xpose.msra.mxu0 %v1087
      %1121 = vmatprep.subr.mxu0 0.0
      %1122 = vmatpush2.xpose.msra.mxu0 0.0
      %1123 = vmatprep.subr.mxu0 0.0
      %1124 = vmatpush2.xpose.msra.mxu0 0.0
      %1125 = vmatprep.subr.mxu0 0.0
      %1126 = vmatpush2.xpose.msra.mxu0 0.0
      %1127 = vmatprep.subr.mxu0 0.0
      %1128 = vmatpush2.xpose.msra.mxu0 0.0
      %1129 = vmatprep.subr.mxu0 0.0
      %1130 = vmatpush2.xpose.msra.mxu0 0.0
      %1131 = vmatprep.subr.mxu0 0.0
      %1132 = vmatpush2.xpose.msra.mxu0 0.0
      %1133 = vmatprep.subr.mxu0 0.0
      %1134 = vmatpush2.xpose.msra.mxu0 0.0
      %1135 = vmatprep.subr.mxu0 0.0
      %1136 = vmatpush2.xpose.msra.mxu0 0.0
      %1137 = vmatprep.subr.mxu0 0.0
      %1138 = vmatpush2.xpose.msra.mxu0 0.0
      %1139 = vmatprep.subr.mxu0 0.0
      %1140 = vmatpush2.xpose.msra.mxu0 0.0
      %1141 = vmatprep.subr.mxu0 0.0
      %1142 = vmatpush2.xpose.msra.mxu0 0.0
      %1143 = vmatprep.subr.mxu0 0.0
      %1144 = vmatpush2.xpose.msra.mxu0 0.0
      %1145 = vmatprep.subr.mxu0 0.0
      %1146 = vmatpush2.xpose.msra.mxu0 0.0
      %1147 = vmatprep.subr.mxu0 0.0
      %1148 = vmatpush2.xpose.msra.mxu0 0.0
      %1149 = vmatprep.subr.mxu0 0.0
      %1150 = vmatpush2.xpose.msra.mxu0 0.0
      %1151 = vmatprep.subr.mxu0 0.0
      %1152 = vmatpush2.xpose.msra.mxu0 0.0
      %1153 = vmatprep.mubr.f32.mxu0 0.0
      %1154 = vmatmul.mubr.f32.gmra.mxu0 %v1084
      %v1155 = vpop.f32.mrf.mxu0
      %v1156 = vadd.f32 0.0, %v1155
      %v1157 = vpop.f32.mrf.mxu0
      %1158 = vdwg.mxu0
      %v1159 = vmul.f32 %v1156, 0.25
      %vm1160 = vcmask 36864
      %v1161 = vsel %vm1160, %v1159, -inf
      %1162 = vmax.xlane.f32.xlu0 %v1161
      %v1163 = vpop.xlane.xlu0 %1162
      %v1164 = vsub.f32 %v1159, %v1163
      %v1165 = vmul.f32 %v1164, 1.442695
      %v1166 = vpow.pop %v1165
      %v1167 = vsel %vm1160, %v1166, 0.0
      %1168 = vadd.xlane.f32.xlu0 %v1167
      %v1169 = vpop.xlane.xlu0 %1168
      %v1170 = vrcp.pop %v1169
      %v1171 = vmul.f32 %v1166, %v1170
      %vm1172 = vcmp.ge.s32.totalorder %v1075, 16
      %vm1173 = vcmp.lt.s32.totalorder %v1075, 32
      %vm1174 = vmand %vm1172, %vm1173
      %v1175 = vsel %vm1174, 1, 0
      %vm1176 = vcmp.eq.s32.totalorder %v1175, 1
      %v1177 = vsel %vm1176, %v913, 0.0
      %v1178 = vsel %vm1176, %v1071, 0.0
      %v1180 = vsel %vm842, %v1177, 0
      %1182 = vmatprep.subr.mxu0 0.0
      %1183 = vmatpush1.xpose.msra.mxu0 0.0
      %1184 = vmatprep.subr.mxu0 0.0
      %1185 = vmatpush1.xpose.msra.mxu0 0.0
      %1186 = vmatprep.subr.mxu0 0.0
      %1187 = vmatpush1.xpose.msra.mxu0 0.0
      %1188 = vmatprep.subr.mxu0 0.0
      %1189 = vmatpush1.xpose.msra.mxu0 0.0
      %1190 = vmatprep.subr.mxu0 0.0
      %1191 = vmatpush1.xpose.msra.mxu0 0.0
      %1192 = vmatprep.subr.mxu0 0.0
      %1193 = vmatpush1.xpose.msra.mxu0 0.0
      %1194 = vmatprep.subr.mxu0 0.0
      %1195 = vmatpush1.xpose.msra.mxu0 0.0
      %1196 = vmatprep.subr.mxu0 0.0
      %1197 = vmatpush1.xpose.msra.mxu0 0.0
      %1198 = vmatprep.subr.mxu0 0.0
      %1199 = vmatpush1.xpose.msra.mxu0 0.0
      %1200 = vmatprep.subr.mxu0 0.0
      %1201 = vmatpush1.xpose.msra.mxu0 0.0
      %1202 = vmatprep.subr.mxu0 0.0
      %1203 = vmatpush1.xpose.msra.mxu0 0.0
      %1204 = vmatprep.subr.mxu0 0.0
      %1205 = vmatpush1.xpose.msra.mxu0 0.0
      %1206 = vmatprep.subr.mxu0 0.0
      %1207 = vmatpush1.xpose.msra.mxu0 0.0
      %1208 = vmatprep.subr.mxu0 0.0
      %1209 = vmatpush1.xpose.msra.mxu0 0.0
      %1210 = vmatprep.subr.mxu0 0.0
      %1211 = vmatpush1.xpose.msra.mxu0 0.0
      %1212 = vmatprep.subr.mxu0 0.0
      %1213 = vmatpush1.xpose.msra.mxu0 %v1087
      %1214 = vmatprep.subr.mxu0 0.0
      %1215 = vmatpush2.xpose.msra.mxu0 0.0
      %1216 = vmatprep.subr.mxu0 0.0
      %1217 = vmatpush2.xpose.msra.mxu0 0.0
      %1218 = vmatprep.subr.mxu0 0.0
      %1219 = vmatpush2.xpose.msra.mxu0 0.0
      %1220 = vmatprep.subr.mxu0 0.0
      %1221 = vmatpush2.xpose.msra.mxu0 0.0
      %1222 = vmatprep.subr.mxu0 0.0
      %1223 = vmatpush2.xpose.msra.mxu0 0.0
      %1224 = vmatprep.subr.mxu0 0.0
      %1225 = vmatpush2.xpose.msra.mxu0 0.0
      %1226 = vmatprep.subr.mxu0 0.0
      %1227 = vmatpush2.xpose.msra.mxu0 0.0
      %1228 = vmatprep.subr.mxu0 0.0
      %1229 = vmatpush2.xpose.msra.mxu0 0.0
      %1230 = vmatprep.subr.mxu0 0.0
      %1231 = vmatpush2.xpose.msra.mxu0 0.0
      %1232 = vmatprep.subr.mxu0 0.0
      %1233 = vmatpush2.xpose.msra.mxu0 0.0
      %1234 = vmatprep.subr.mxu0 0.0
      %1235 = vmatpush2.xpose.msra.mxu0 0.0
      %1236 = vmatprep.subr.mxu0 0.0
      %1237 = vmatpush2.xpose.msra.mxu0 0.0
      %1238 = vmatprep.subr.mxu0 0.0
      %1239 = vmatpush2.xpose.msra.mxu0 0.0
      %1240 = vmatprep.subr.mxu0 0.0
      %1241 = vmatpush2.xpose.msra.mxu0 0.0
      %1242 = vmatprep.subr.mxu0 0.0
      %1243 = vmatpush2.xpose.msra.mxu0 0.0
      %1244 = vmatprep.subr.mxu0 0.0
      %1245 = vmatpush2.xpose.msra.mxu0 0.0
      %1246 = vmatprep.mubr.f32.mxu0 0.0
      %1247 = vmatmul.mubr.f32.gmra.mxu0 %v1180
      %v1248 = vpop.f32.mrf.mxu0
      %v1249 = vadd.f32 0.0, %v1248
      %v1250 = vpop.f32.mrf.mxu0
      %1251 = vdwg.mxu0
      %v1252 = vmul.f32 %v1249, 0.25
      %v1253 = vsel %vm1160, %v1252, -inf
      %1254 = vmax.xlane.f32.xlu0 %v1253
      %v1255 = vpop.xlane.xlu0 %1254
      %v1256 = vsub.f32 %v1252, %v1255
      %v1257 = vmul.f32 %v1256, 1.442695
      %v1258 = vpow.pop %v1257
      %v1259 = vsel %vm1160, %v1258, 0.0
      %1260 = vadd.xlane.f32.xlu0 %v1259
      %v1261 = vpop.xlane.xlu0 %1260
      %v1262 = vrcp.pop %v1261
      %v1263 = vmul.f32 %v1258, %v1262
      %vm1264 = vcmask 39936
      %v1266 = vsel %vm1264, %v1263, 0
      %vm1268 = vcmask 1044480
      %v1270 = vsel %vm1268, %v1178, 0
      %1272 = vmatprep.subr.mxu0 0.0
      %1273 = vmatpush1.msra.mxu0 0.0
      %1274 = vmatprep.subr.mxu0 0.0
      %1275 = vmatpush1.msra.mxu0 0.0
      %1276 = vmatprep.subr.mxu0 0.0
      %1277 = vmatpush1.msra.mxu0 0.0
      %1278 = vmatprep.subr.mxu0 0.0
      %1279 = vmatpush1.msra.mxu0 0.0
      %1280 = vmatprep.subr.mxu0 0.0
      %1281 = vmatpush1.msra.mxu0 0.0
      %1282 = vmatprep.subr.mxu0 0.0
      %1283 = vmatpush1.msra.mxu0 0.0
      %1284 = vmatprep.subr.mxu0 0.0
      %1285 = vmatpush1.msra.mxu0 0.0
      %1286 = vmatprep.subr.mxu0 0.0
      %1287 = vmatpush1.msra.mxu0 0.0
      %1288 = vmatprep.subr.mxu0 0.0
      %1289 = vmatpush1.msra.mxu0 0.0
      %1290 = vmatprep.subr.mxu0 0.0
      %1291 = vmatpush1.msra.mxu0 0.0
      %1292 = vmatprep.subr.mxu0 0.0
      %1293 = vmatpush1.msra.mxu0 0.0
      %1294 = vmatprep.subr.mxu0 0.0
      %1295 = vmatpush1.msra.mxu0 0.0
      %1296 = vmatprep.subr.mxu0 0.0
      %1297 = vmatpush1.msra.mxu0 0.0
      %1298 = vmatprep.subr.mxu0 0.0
      %1299 = vmatpush1.msra.mxu0 0.0
      %1300 = vmatprep.subr.mxu0 0.0
      %1301 = vmatpush1.msra.mxu0 0.0
      %1302 = vmatprep.subr.mxu0 0.0
      %1303 = vmatpush1.msra.mxu0 %v1270
      %1304 = vmatprep.subr.mxu0 0.0
      %1305 = vmatpush2.msra.mxu0 0.0
      %1306 = vmatprep.subr.mxu0 0.0
      %1307 = vmatpush2.msra.mxu0 0.0
      %1308 = vmatprep.subr.mxu0 0.0
      %1309 = vmatpush2.msra.mxu0 0.0
      %1310 = vmatprep.subr.mxu0 0.0
      %1311 = vmatpush2.msra.mxu0 0.0
      %1312 = vmatprep.subr.mxu0 0.0
      %1313 = vmatpush2.msra.mxu0 0.0
      %1314 = vmatprep.subr.mxu0 0.0
      %1315 = vmatpush2.msra.mxu0 0.0
      %1316 = vmatprep.subr.mxu0 0.0
      %1317 = vmatpush2.msra.mxu0 0.0
      %1318 = vmatprep.subr.mxu0 0.0
      %1319 = vmatpush2.msra.mxu0 0.0
      %1320 = vmatprep.subr.mxu0 0.0
      %1321 = vmatpush2.msra.mxu0 0.0
      %1322 = vmatprep.subr.mxu0 0.0
      %1323 = vmatpush2.msra.mxu0 0.0
      %1324 = vmatprep.subr.mxu0 0.0
      %1325 = vmatpush2.msra.mxu0 0.0
      %1326 = vmatprep.subr.mxu0 0.0
      %1327 = vmatpush2.msra.mxu0 0.0
      %1328 = vmatprep.subr.mxu0 0.0
      %1329 = vmatpush2.msra.mxu0 0.0
      %1330 = vmatprep.subr.mxu0 0.0
      %1331 = vmatpush2.msra.mxu0 0.0
      %1332 = vmatprep.subr.mxu0 0.0
      %1333 = vmatpush2.msra.mxu0 0.0
      %1334 = vmatprep.subr.mxu0 0.0
      %1335 = vmatpush2.msra.mxu0 0.0
      %1336 = vmatprep.mubr.f32.mxu0 0.0
      %1337 = vmatmul.mubr.f32.gmra.mxu0 %v1266
      %v1338 = vpop.f32.mrf.mxu0
      %v1339 = vadd.f32 0.0, %v1338
      %v1340 = vpop.f32.mrf.mxu0
      %1341 = vdwg.mxu0
      %v1343 = vsel %vm1264, %v1171, 0
      %v1346 = vsel %vm1268, %v1082, 0
      %1348 = vmatprep.subr.mxu0 0.0
      %1349 = vmatpush1.msra.mxu0 0.0
      %1350 = vmatprep.subr.mxu0 0.0
      %1351 = vmatpush1.msra.mxu0 0.0
      %1352 = vmatprep.subr.mxu0 0.0
      %1353 = vmatpush1.msra.mxu0 0.0
      %1354 = vmatprep.subr.mxu0 0.0
      %1355 = vmatpush1.msra.mxu0 0.0
      %1356 = vmatprep.subr.mxu0 0.0
      %1357 = vmatpush1.msra.mxu0 0.0
      %1358 = vmatprep.subr.mxu0 0.0
      %1359 = vmatpush1.msra.mxu0 0.0
      %1360 = vmatprep.subr.mxu0 0.0
      %1361 = vmatpush1.msra.mxu0 0.0
      %1362 = vmatprep.subr.mxu0 0.0
      %1363 = vmatpush1.msra.mxu0 0.0
      %1364 = vmatprep.subr.mxu0 0.0
      %1365 = vmatpush1.msra.mxu0 0.0
      %1366 = vmatprep.subr.mxu0 0.0
      %1367 = vmatpush1.msra.mxu0 0.0
      %1368 = vmatprep.subr.mxu0 0.0
      %1369 = vmatpush1.msra.mxu0 0.0
      %1370 = vmatprep.subr.mxu0 0.0
      %1371 = vmatpush1.msra.mxu0 0.0
      %1372 = vmatprep.subr.mxu0 0.0
      %1373 = vmatpush1.msra.mxu0 0.0
      %1374 = vmatprep.subr.mxu0 0.0
      %1375 = vmatpush1.msra.mxu0 0.0
      %1376 = vmatprep.subr.mxu0 0.0
      %1377 = vmatpush1.msra.mxu0 0.0
      %1378 = vmatprep.subr.mxu0 0.0
      %1379 = vmatpush1.msra.mxu0 %v1346
      %1380 = vmatprep.subr.mxu0 0.0
      %1381 = vmatpush2.msra.mxu0 0.0
      %1382 = vmatprep.subr.mxu0 0.0
      %1383 = vmatpush2.msra.mxu0 0.0
      %1384 = vmatprep.subr.mxu0 0.0
      %1385 = vmatpush2.msra.mxu0 0.0
      %1386 = vmatprep.subr.mxu0 0.0
      %1387 = vmatpush2.msra.mxu0 0.0
      %1388 = vmatprep.subr.mxu0 0.0
      %1389 = vmatpush2.msra.mxu0 0.0
      %1390 = vmatprep.subr.mxu0 0.0
      %1391 = vmatpush2.msra.mxu0 0.0
      %1392 = vmatprep.subr.mxu0 0.0
      %1393 = vmatpush2.msra.mxu0 0.0
      %1394 = vmatprep.subr.mxu0 0.0
      %1395 = vmatpush2.msra.mxu0 0.0
      %1396 = vmatprep.subr.mxu0 0.0
      %1397 = vmatpush2.msra.mxu0 0.0
      %1398 = vmatprep.subr.mxu0 0.0
      %1399 = vmatpush2.msra.mxu0 0.0
      %1400 = vmatprep.subr.mxu0 0.0
      %1401 = vmatpush2.msra.mxu0 0.0
      %1402 = vmatprep.subr.mxu0 0.0
      %1403 = vmatpush2.msra.mxu0 0.0
      %1404 = vmatprep.subr.mxu0 0.0
      %1405 = vmatpush2.msra.mxu0 0.0
      %1406 = vmatprep.subr.mxu0 0.0
      %1407 = vmatpush2.msra.mxu0 0.0
      %1408 = vmatprep.subr.mxu0 0.0
      %1409 = vmatpush2.msra.mxu0 0.0
      %1410 = vmatprep.subr.mxu0 0.0
      %1411 = vmatpush2.msra.mxu0 0.0
      %1412 = vmatprep.mubr.f32.mxu0 0.0
      %1413 = vmatmul.mubr.f32.gmra.mxu0 %v1343
      %v1414 = vpop.f32.mrf.mxu0
      %v1415 = vadd.f32 %v1339, %v1414
      %v1416 = vpop.f32.mrf.mxu0
      %1417 = vdwg.mxu0
      %vm1418 = vcmp.ge.s32.totalorder %v1075, 32
      %vm1419 = vcmp.lt.s32.totalorder %v1075, 48
      %vm1420 = vmand %vm1418, %vm1419
      %v1421 = vsel %vm1420, 1, 0
      %vm1422 = vcmp.eq.s32.totalorder %v1421, 1
      %v1423 = vsel %vm1422, %v913, 0.0
      %v1424 = vsel %vm1422, %v1071, 0.0
      %v1426 = vsel %vm842, %v1423, 0
      %1428 = vmatprep.subr.mxu0 0.0
      %1429 = vmatpush1.xpose.msra.mxu0 0.0
      %1430 = vmatprep.subr.mxu0 0.0
      %1431 = vmatpush1.xpose.msra.mxu0 0.0
      %1432 = vmatprep.subr.mxu0 0.0
      %1433 = vmatpush1.xpose.msra.mxu0 0.0
      %1434 = vmatprep.subr.mxu0 0.0
      %1435 = vmatpush1.xpose.msra.mxu0 0.0
      %1436 = vmatprep.subr.mxu0 0.0
      %1437 = vmatpush1.xpose.msra.mxu0 0.0
      %1438 = vmatprep.subr.mxu0 0.0
      %1439 = vmatpush1.xpose.msra.mxu0 0.0
      %1440 = vmatprep.subr.mxu0 0.0
      %1441 = vmatpush1.xpose.msra.mxu0 0.0
      %1442 = vmatprep.subr.mxu0 0.0
      %1443 = vmatpush1.xpose.msra.mxu0 0.0
      %1444 = vmatprep.subr.mxu0 0.0
      %1445 = vmatpush1.xpose.msra.mxu0 0.0
      %1446 = vmatprep.subr.mxu0 0.0
      %1447 = vmatpush1.xpose.msra.mxu0 0.0
      %1448 = vmatprep.subr.mxu0 0.0
      %1449 = vmatpush1.xpose.msra.mxu0 0.0
      %1450 = vmatprep.subr.mxu0 0.0
      %1451 = vmatpush1.xpose.msra.mxu0 0.0
      %1452 = vmatprep.subr.mxu0 0.0
      %1453 = vmatpush1.xpose.msra.mxu0 0.0
      %1454 = vmatprep.subr.mxu0 0.0
      %1455 = vmatpush1.xpose.msra.mxu0 0.0
      %1456 = vmatprep.subr.mxu0 0.0
      %1457 = vmatpush1.xpose.msra.mxu0 0.0
      %1458 = vmatprep.subr.mxu0 0.0
      %1459 = vmatpush1.xpose.msra.mxu0 %v1087
      %1460 = vmatprep.subr.mxu0 0.0
      %1461 = vmatpush2.xpose.msra.mxu0 0.0
      %1462 = vmatprep.subr.mxu0 0.0
      %1463 = vmatpush2.xpose.msra.mxu0 0.0
      %1464 = vmatprep.subr.mxu0 0.0
      %1465 = vmatpush2.xpose.msra.mxu0 0.0
      %1466 = vmatprep.subr.mxu0 0.0
      %1467 = vmatpush2.xpose.msra.mxu0 0.0
      %1468 = vmatprep.subr.mxu0 0.0
      %1469 = vmatpush2.xpose.msra.mxu0 0.0
      %1470 = vmatprep.subr.mxu0 0.0
      %1471 = vmatpush2.xpose.msra.mxu0 0.0
      %1472 = vmatprep.subr.mxu0 0.0
      %1473 = vmatpush2.xpose.msra.mxu0 0.0
      %1474 = vmatprep.subr.mxu0 0.0
      %1475 = vmatpush2.xpose.msra.mxu0 0.0
      %1476 = vmatprep.subr.mxu0 0.0
      %1477 = vmatpush2.xpose.msra.mxu0 0.0
      %1478 = vmatprep.subr.mxu0 0.0
      %1479 = vmatpush2.xpose.msra.mxu0 0.0
      %1480 = vmatprep.subr.mxu0 0.0
      %1481 = vmatpush2.xpose.msra.mxu0 0.0
      %1482 = vmatprep.subr.mxu0 0.0
      %1483 = vmatpush2.xpose.msra.mxu0 0.0
      %1484 = vmatprep.subr.mxu0 0.0
      %1485 = vmatpush2.xpose.msra.mxu0 0.0
      %1486 = vmatprep.subr.mxu0 0.0
      %1487 = vmatpush2.xpose.msra.mxu0 0.0
      %1488 = vmatprep.subr.mxu0 0.0
      %1489 = vmatpush2.xpose.msra.mxu0 0.0
      %1490 = vmatprep.subr.mxu0 0.0
      %1491 = vmatpush2.xpose.msra.mxu0 0.0
      %1492 = vmatprep.mubr.f32.mxu0 0.0
      %1493 = vmatmul.mubr.f32.gmra.mxu0 %v1426
      %v1494 = vpop.f32.mrf.mxu0
      %v1495 = vadd.f32 0.0, %v1494
      %v1496 = vpop.f32.mrf.mxu0
      %1497 = vdwg.mxu0
      %v1498 = vmul.f32 %v1495, 0.25
      %v1499 = vsel %vm1160, %v1498, -inf
      %1500 = vmax.xlane.f32.xlu0 %v1499
      %v1501 = vpop.xlane.xlu0 %1500
      %v1502 = vsub.f32 %v1498, %v1501
      %v1503 = vmul.f32 %v1502, 1.442695
      %v1504 = vpow.pop %v1503
      %v1505 = vsel %vm1160, %v1504, 0.0
      %1506 = vadd.xlane.f32.xlu0 %v1505
      %v1507 = vpop.xlane.xlu0 %1506
      %v1508 = vrcp.pop %v1507
      %v1509 = vmul.f32 %v1504, %v1508
      %v1511 = vsel %vm1264, %v1509, 0
      %v1514 = vsel %vm1268, %v1424, 0
      %1516 = vmatprep.subr.mxu0 0.0
      %1517 = vmatpush1.msra.mxu0 0.0
      %1518 = vmatprep.subr.mxu0 0.0
      %1519 = vmatpush1.msra.mxu0 0.0
      %1520 = vmatprep.subr.mxu0 0.0
      %1521 = vmatpush1.msra.mxu0 0.0
      %1522 = vmatprep.subr.mxu0 0.0
      %1523 = vmatpush1.msra.mxu0 0.0
      %1524 = vmatprep.subr.mxu0 0.0
      %1525 = vmatpush1.msra.mxu0 0.0
      %1526 = vmatprep.subr.mxu0 0.0
      %1527 = vmatpush1.msra.mxu0 0.0
      %1528 = vmatprep.subr.mxu0 0.0
      %1529 = vmatpush1.msra.mxu0 0.0
      %1530 = vmatprep.subr.mxu0 0.0
      %1531 = vmatpush1.msra.mxu0 0.0
      %1532 = vmatprep.subr.mxu0 0.0
      %1533 = vmatpush1.msra.mxu0 0.0
      %1534 = vmatprep.subr.mxu0 0.0
      %1535 = vmatpush1.msra.mxu0 0.0
      %1536 = vmatprep.subr.mxu0 0.0
      %1537 = vmatpush1.msra.mxu0 0.0
      %1538 = vmatprep.subr.mxu0 0.0
      %1539 = vmatpush1.msra.mxu0 0.0
      %1540 = vmatprep.subr.mxu0 0.0
      %1541 = vmatpush1.msra.mxu0 0.0
      %1542 = vmatprep.subr.mxu0 0.0
      %1543 = vmatpush1.msra.mxu0 0.0
      %1544 = vmatprep.subr.mxu0 0.0
      %1545 = vmatpush1.msra.mxu0 0.0
      %1546 = vmatprep.subr.mxu0 0.0
      %1547 = vmatpush1.msra.mxu0 %v1514
      %1548 = vmatprep.subr.mxu0 0.0
      %1549 = vmatpush2.msra.mxu0 0.0
      %1550 = vmatprep.subr.mxu0 0.0
      %1551 = vmatpush2.msra.mxu0 0.0
      %1552 = vmatprep.subr.mxu0 0.0
      %1553 = vmatpush2.msra.mxu0 0.0
      %1554 = vmatprep.subr.mxu0 0.0
      %1555 = vmatpush2.msra.mxu0 0.0
      %1556 = vmatprep.subr.mxu0 0.0
      %1557 = vmatpush2.msra.mxu0 0.0
      %1558 = vmatprep.subr.mxu0 0.0
      %1559 = vmatpush2.msra.mxu0 0.0
      %1560 = vmatprep.subr.mxu0 0.0
      %1561 = vmatpush2.msra.mxu0 0.0
      %1562 = vmatprep.subr.mxu0 0.0
      %1563 = vmatpush2.msra.mxu0 0.0
      %1564 = vmatprep.subr.mxu0 0.0
      %1565 = vmatpush2.msra.mxu0 0.0
      %1566 = vmatprep.subr.mxu0 0.0
      %1567 = vmatpush2.msra.mxu0 0.0
      %1568 = vmatprep.subr.mxu0 0.0
      %1569 = vmatpush2.msra.mxu0 0.0
      %1570 = vmatprep.subr.mxu0 0.0
      %1571 = vmatpush2.msra.mxu0 0.0
      %1572 = vmatprep.subr.mxu0 0.0
      %1573 = vmatpush2.msra.mxu0 0.0
      %1574 = vmatprep.subr.mxu0 0.0
      %1575 = vmatpush2.msra.mxu0 0.0
      %1576 = vmatprep.subr.mxu0 0.0
      %1577 = vmatpush2.msra.mxu0 0.0
      %1578 = vmatprep.subr.mxu0 0.0
      %1579 = vmatpush2.msra.mxu0 0.0
      %1580 = vmatprep.mubr.f32.mxu0 0.0
      %1581 = vmatmul.mubr.f32.gmra.mxu0 %v1511
      %v1582 = vpop.f32.mrf.mxu0
      %v1583 = vadd.f32 0.0, %v1582
      %v1584 = vpop.f32.mrf.mxu0
      %1585 = vdwg.mxu0
      %v1586 = vadd.f32 %v1415, %v1583
      %vm1587 = vcmp.ge.s32.totalorder %v1075, 48
      %vm1588 = vcmp.lt.s32.totalorder %v1075, 64
      %vm1589 = vmand %vm1587, %vm1588
      %v1590 = vsel %vm1589, 1, 0
      %vm1591 = vcmp.eq.s32.totalorder %v1590, 1
      %v1592 = vsel %vm1591, %v913, 0.0
      %v1593 = vsel %vm1591, %v1071, 0.0
      %v1595 = vsel %vm842, %v1592, 0
      %1597 = vmatprep.subr.mxu0 0.0
      %1598 = vmatpush1.xpose.msra.mxu0 0.0
      %1599 = vmatprep.subr.mxu0 0.0
      %1600 = vmatpush1.xpose.msra.mxu0 0.0
      %1601 = vmatprep.subr.mxu0 0.0
      %1602 = vmatpush1.xpose.msra.mxu0 0.0
      %1603 = vmatprep.subr.mxu0 0.0
      %1604 = vmatpush1.xpose.msra.mxu0 0.0
      %1605 = vmatprep.subr.mxu0 0.0
      %1606 = vmatpush1.xpose.msra.mxu0 0.0
      %1607 = vmatprep.subr.mxu0 0.0
      %1608 = vmatpush1.xpose.msra.mxu0 0.0
      %1609 = vmatprep.subr.mxu0 0.0
      %1610 = vmatpush1.xpose.msra.mxu0 0.0
      %1611 = vmatprep.subr.mxu0 0.0
      %1612 = vmatpush1.xpose.msra.mxu0 0.0
      %1613 = vmatprep.subr.mxu0 0.0
      %1614 = vmatpush1.xpose.msra.mxu0 0.0
      %1615 = vmatprep.subr.mxu0 0.0
      %1616 = vmatpush1.xpose.msra.mxu0 0.0
      %1617 = vmatprep.subr.mxu0 0.0
      %1618 = vmatpush1.xpose.msra.mxu0 0.0
      %1619 = vmatprep.subr.mxu0 0.0
      %1620 = vmatpush1.xpose.msra.mxu0 0.0
      %1621 = vmatprep.subr.mxu0 0.0
      %1622 = vmatpush1.xpose.msra.mxu0 0.0
      %1623 = vmatprep.subr.mxu0 0.0
      %1624 = vmatpush1.xpose.msra.mxu0 0.0
      %1625 = vmatprep.subr.mxu0 0.0
      %1626 = vmatpush1.xpose.msra.mxu0 0.0
      %1627 = vmatprep.subr.mxu0 0.0
      %1628 = vmatpush1.xpose.msra.mxu0 %v1087
      %1629 = vmatprep.subr.mxu0 0.0
      %1630 = vmatpush2.xpose.msra.mxu0 0.0
      %1631 = vmatprep.subr.mxu0 0.0
      %1632 = vmatpush2.xpose.msra.mxu0 0.0
      %1633 = vmatprep.subr.mxu0 0.0
      %1634 = vmatpush2.xpose.msra.mxu0 0.0
      %1635 = vmatprep.subr.mxu0 0.0
      %1636 = vmatpush2.xpose.msra.mxu0 0.0
      %1637 = vmatprep.subr.mxu0 0.0
      %1638 = vmatpush2.xpose.msra.mxu0 0.0
      %1639 = vmatprep.subr.mxu0 0.0
      %1640 = vmatpush2.xpose.msra.mxu0 0.0
      %1641 = vmatprep.subr.mxu0 0.0
      %1642 = vmatpush2.xpose.msra.mxu0 0.0
      %1643 = vmatprep.subr.mxu0 0.0
      %1644 = vmatpush2.xpose.msra.mxu0 0.0
      %1645 = vmatprep.subr.mxu0 0.0
      %1646 = vmatpush2.xpose.msra.mxu0 0.0
      %1647 = vmatprep.subr.mxu0 0.0
      %1648 = vmatpush2.xpose.msra.mxu0 0.0
      %1649 = vmatprep.subr.mxu0 0.0
      %1650 = vmatpush2.xpose.msra.mxu0 0.0
      %1651 = vmatprep.subr.mxu0 0.0
      %1652 = vmatpush2.xpose.msra.mxu0 0.0
      %1653 = vmatprep.subr.mxu0 0.0
      %1654 = vmatpush2.xpose.msra.mxu0 0.0
      %1655 = vmatprep.subr.mxu0 0.0
      %1656 = vmatpush2.xpose.msra.mxu0 0.0
      %1657 = vmatprep.subr.mxu0 0.0
      %1658 = vmatpush2.xpose.msra.mxu0 0.0
      %1659 = vmatprep.subr.mxu0 0.0
      %1660 = vmatpush2.xpose.msra.mxu0 0.0
      %1661 = vmatprep.mubr.f32.mxu0 0.0
      %1662 = vmatmul.mubr.f32.gmra.mxu0 %v1595
      %v1663 = vpop.f32.mrf.mxu0
      %v1664 = vadd.f32 0.0, %v1663
      %v1665 = vpop.f32.mrf.mxu0
      %1666 = vdwg.mxu0
      %v1667 = vmul.f32 %v1664, 0.25
      %v1668 = vsel %vm1160, %v1667, -inf
      %1669 = vmax.xlane.f32.xlu0 %v1668
      %v1670 = vpop.xlane.xlu0 %1669
      %v1671 = vsub.f32 %v1667, %v1670
      %v1672 = vmul.f32 %v1671, 1.442695
      %v1673 = vpow.pop %v1672
      %v1674 = vsel %vm1160, %v1673, 0.0
      %1675 = vadd.xlane.f32.xlu0 %v1674
      %v1676 = vpop.xlane.xlu0 %1675
      %v1677 = vrcp.pop %v1676
      %v1678 = vmul.f32 %v1673, %v1677
      %v1680 = vsel %vm1264, %v1678, 0
      %v1683 = vsel %vm1268, %v1593, 0
      %1685 = vmatprep.subr.mxu0 0.0
      %1686 = vmatpush1.msra.mxu0 0.0
      %1687 = vmatprep.subr.mxu0 0.0
      %1688 = vmatpush1.msra.mxu0 0.0
      %1689 = vmatprep.subr.mxu0 0.0
      %1690 = vmatpush1.msra.mxu0 0.0
      %1691 = vmatprep.subr.mxu0 0.0
      %1692 = vmatpush1.msra.mxu0 0.0
      %1693 = vmatprep.subr.mxu0 0.0
      %1694 = vmatpush1.msra.mxu0 0.0
      %1695 = vmatprep.subr.mxu0 0.0
      %1696 = vmatpush1.msra.mxu0 0.0
      %1697 = vmatprep.subr.mxu0 0.0
      %1698 = vmatpush1.msra.mxu0 0.0
      %1699 = vmatprep.subr.mxu0 0.0
      %1700 = vmatpush1.msra.mxu0 0.0
      %1701 = vmatprep.subr.mxu0 0.0
      %1702 = vmatpush1.msra.mxu0 0.0
      %1703 = vmatprep.subr.mxu0 0.0
      %1704 = vmatpush1.msra.mxu0 0.0
      %1705 = vmatprep.subr.mxu0 0.0
      %1706 = vmatpush1.msra.mxu0 0.0
      %1707 = vmatprep.subr.mxu0 0.0
      %1708 = vmatpush1.msra.mxu0 0.0
      %1709 = vmatprep.subr.mxu0 0.0
      %1710 = vmatpush1.msra.mxu0 0.0
      %1711 = vmatprep.subr.mxu0 0.0
      %1712 = vmatpush1.msra.mxu0 0.0
      %1713 = vmatprep.subr.mxu0 0.0
      %1714 = vmatpush1.msra.mxu0 0.0
      %1715 = vmatprep.subr.mxu0 0.0
      %1716 = vmatpush1.msra.mxu0 %v1683
      %1717 = vmatprep.subr.mxu0 0.0
      %1718 = vmatpush2.msra.mxu0 0.0
      %1719 = vmatprep.subr.mxu0 0.0
      %1720 = vmatpush2.msra.mxu0 0.0
      %1721 = vmatprep.subr.mxu0 0.0
      %1722 = vmatpush2.msra.mxu0 0.0
      %1723 = vmatprep.subr.mxu0 0.0
      %1724 = vmatpush2.msra.mxu0 0.0
      %1725 = vmatprep.subr.mxu0 0.0
      %1726 = vmatpush2.msra.mxu0 0.0
      %1727 = vmatprep.subr.mxu0 0.0
      %1728 = vmatpush2.msra.mxu0 0.0
      %1729 = vmatprep.subr.mxu0 0.0
      %1730 = vmatpush2.msra.mxu0 0.0
      %1731 = vmatprep.subr.mxu0 0.0
      %1732 = vmatpush2.msra.mxu0 0.0
      %1733 = vmatprep.subr.mxu0 0.0
      %1734 = vmatpush2.msra.mxu0 0.0
      %1735 = vmatprep.subr.mxu0 0.0
      %1736 = vmatpush2.msra.mxu0 0.0
      %1737 = vmatprep.subr.mxu0 0.0
      %1738 = vmatpush2.msra.mxu0 0.0
      %1739 = vmatprep.subr.mxu0 0.0
      %1740 = vmatpush2.msra.mxu0 0.0
      %1741 = vmatprep.subr.mxu0 0.0
      %1742 = vmatpush2.msra.mxu0 0.0
      %1743 = vmatprep.subr.mxu0 0.0
      %1744 = vmatpush2.msra.mxu0 0.0
      %1745 = vmatprep.subr.mxu0 0.0
      %1746 = vmatpush2.msra.mxu0 0.0
      %1747 = vmatprep.subr.mxu0 0.0
      %1748 = vmatpush2.msra.mxu0 0.0
      %1749 = vmatprep.mubr.f32.mxu0 0.0
      %1750 = vmatmul.mubr.f32.gmra.mxu0 %v1680
      %v1751 = vpop.f32.mrf.mxu0
      %v1752 = vadd.f32 0.0, %v1751
      %v1753 = vpop.f32.mrf.mxu0
      %1754 = vdwg.mxu0
      %v1755 = vadd.f32 %v1586, %v1752
      %v1756 = vld [vmem:[%s10] sm:$0xff]
      %v1757 = vld [vmem:[%s10 + $0x8] sm:$0xff]
      %v1758 = vld [vmem:[%s10 + $0x10] sm:$0xff]
      %v1759 = vld [vmem:[%s10 + $0x18] sm:$0xff]
      %v1760 = vld [vmem:[%s10 + $0x20] sm:$0xff]
      %v1761 = vld [vmem:[%s10 + $0x28] sm:$0xff]
      %v1762 = vld [vmem:[%s10 + $0x30] sm:$0xff]
      %v1763 = vld [vmem:[%s10 + $0x38] sm:$0xff]
      %v1764 = vld [vmem:[%s11] sm:$0x1]
      %v1766 = vlaneseq
      %v1767 = vshrl.u32 %v1766, 7
      %v1768 = vsub.s32 0, %v1767
      %v1769 = vrot.slane %v1764, %v1768
      %v1772 = vsel %vm842, %v1755, 0
      %1774 = vmatprep.subr.mxu0 0.0
      %1775 = vmatpush1.msra.mxu0 0.0
      %1776 = vmatprep.subr.mxu0 0.0
      %1777 = vmatpush1.msra.mxu0 0.0
      %1778 = vmatprep.subr.mxu0 0.0
      %1779 = vmatpush1.msra.mxu0 0.0
      %1780 = vmatprep.subr.mxu0 0.0
      %1781 = vmatpush1.msra.mxu0 0.0
      %1782 = vmatprep.subr.mxu0 0.0
      %1783 = vmatpush1.msra.mxu0 0.0
      %1784 = vmatprep.subr.mxu0 0.0
      %1785 = vmatpush1.msra.mxu0 0.0
      %1786 = vmatprep.subr.mxu0 0.0
      %1787 = vmatpush1.msra.mxu0 0.0
      %1788 = vmatprep.subr.mxu0 0.0
      %1789 = vmatpush1.msra.mxu0 0.0
      %1790 = vmatprep.subr.mxu0 0.0
      %1791 = vmatpush1.msra.mxu0 %v1763
      %1792 = vmatprep.subr.mxu0 0.0
      %1793 = vmatpush1.msra.mxu0 %v1762
      %1794 = vmatprep.subr.mxu0 0.0
      %1795 = vmatpush1.msra.mxu0 %v1761
      %1796 = vmatprep.subr.mxu0 0.0
      %1797 = vmatpush1.msra.mxu0 %v1760
      %1798 = vmatprep.subr.mxu0 0.0
      %1799 = vmatpush1.msra.mxu0 %v1759
      %1800 = vmatprep.subr.mxu0 0.0
      %1801 = vmatpush1.msra.mxu0 %v1758
      %1802 = vmatprep.subr.mxu0 0.0
      %1803 = vmatpush1.msra.mxu0 %v1757
      %1804 = vmatprep.subr.mxu0 0.0
      %1805 = vmatpush1.msra.mxu0 %v1756
      %1806 = vmatprep.subr.mxu0 0.0
      %1807 = vmatpush2.msra.mxu0 0.0
      %1808 = vmatprep.subr.mxu0 0.0
      %1809 = vmatpush2.msra.mxu0 0.0
      %1810 = vmatprep.subr.mxu0 0.0
      %1811 = vmatpush2.msra.mxu0 0.0
      %1812 = vmatprep.subr.mxu0 0.0
      %1813 = vmatpush2.msra.mxu0 0.0
      %1814 = vmatprep.subr.mxu0 0.0
      %1815 = vmatpush2.msra.mxu0 0.0
      %1816 = vmatprep.subr.mxu0 0.0
      %1817 = vmatpush2.msra.mxu0 0.0
      %1818 = vmatprep.subr.mxu0 0.0
      %1819 = vmatpush2.msra.mxu0 0.0
      %1820 = vmatprep.subr.mxu0 0.0
      %1821 = vmatpush2.msra.mxu0 0.0
      %1822 = vmatprep.subr.mxu0 0.0
      %1823 = vmatpush2.msra.mxu0 0.0
      %1824 = vmatprep.subr.mxu0 0.0
      %1825 = vmatpush2.msra.mxu0 0.0
      %1826 = vmatprep.subr.mxu0 0.0
      %1827 = vmatpush2.msra.mxu0 0.0
      %1828 = vmatprep.subr.mxu0 0.0
      %1829 = vmatpush2.msra.mxu0 0.0
      %1830 = vmatprep.subr.mxu0 0.0
      %1831 = vmatpush2.msra.mxu0 0.0
      %1832 = vmatprep.subr.mxu0 0.0
      %1833 = vmatpush2.msra.mxu0 0.0
      %1834 = vmatprep.subr.mxu0 0.0
      %1835 = vmatpush2.msra.mxu0 0.0
      %1836 = vmatprep.subr.mxu0 0.0
      %1837 = vmatpush2.msra.mxu0 0.0
      %1838 = vmatprep.mubr.f32.mxu0 0.0
      %1839 = vmatmul.mubr.f32.gmra.mxu0 %v1772
      %v1840 = vpop.f32.mrf.mxu0
      %v1841 = vadd.f32 %v1769, %v1840
      %v1842 = vpop.f32.mrf.mxu0
      %1843 = vdwg.mxu0
      %v1844 = vadd.f32 %v803, %v1841
      %v1845 = vld [vmem:[%s12] sm:$0x1]
      %v1846 = vld [vmem:[%s13] sm:$0x1]
      %v1847 = vsel %vm806, %v1844, 0.0
      %1848 = vadd.xlane.f32.xlu0 %v1847
      %v1849 = vpop.xlane.xlu0 %1848
      %v1850 = vmul.f32 %v1849, %v773
      %v1851 = vsub.f32 %v1844, %v1850
      %v1852 = vmul.f32 %v1851, %v1851
      %v1853 = vsel %vm806, %v1852, 0.0
      %1854 = vadd.xlane.f32.xlu0 %v1853
      %v1855 = vpop.xlane.xlu0 %1854
      %v1856 = vmul.f32 %v1855, %v773
      %v1857 = vadd.f32 %v1856, 1e-06
      %v1858 = vrsqrt.pop %v1857
      %v1859 = vmul.f32 %v1851, %v1858
      %v1861 = vlaneseq
      %v1862 = vshrl.u32 %v1861, 7
      %v1863 = vsub.s32 0, %v1862
      %v1864 = vrot.slane %v1845, %v1863
      %v1866 = vmul.f32 %v1859, %v1864
      %v1868 = vlaneseq
      %v1869 = vshrl.u32 %v1868, 7
      %v1870 = vsub.s32 0, %v1869
      %v1871 = vrot.slane %v1846, %v1870
      %v1873 = vadd.f32 %v1866, %v1871
      %v1874 = vld [vmem:[%s14] sm:$0xff]
      %v1875 = vld [vmem:[%s14 + $0x8] sm:$0xff]
      %v1876 = vld [vmem:[%s14 + $0x10] sm:$0xff]
      %v1877 = vld [vmem:[%s14 + $0x18] sm:$0xff]
      %v1878 = vld [vmem:[%s14 + $0x20] sm:$0xff]
      %v1879 = vld [vmem:[%s14 + $0x28] sm:$0xff]
      %v1880 = vld [vmem:[%s14 + $0x30] sm:$0xff]
      %v1881 = vld [vmem:[%s14 + $0x38] sm:$0xff]
      %v1882 = vld [vmem:[%s14 + $0x40] sm:$0xff]
      %v1883 = vld [vmem:[%s14 + $0x48] sm:$0xff]
      %v1884 = vld [vmem:[%s14 + $0x50] sm:$0xff]
      %v1885 = vld [vmem:[%s14 + $0x58] sm:$0xff]
      %v1886 = vld [vmem:[%s14 + $0x60] sm:$0xff]
      %v1887 = vld [vmem:[%s14 + $0x68] sm:$0xff]
      %v1888 = vld [vmem:[%s14 + $0x70] sm:$0xff]
      %v1889 = vld [vmem:[%s14 + $0x78] sm:$0xff]
      %v1890 = vld [vmem:[%s15] sm:$0x3]
      %v1892 = vlaneseq
      %v1893 = vshrl.u32 %v1892, 7
      %v1894 = vsub.s32 0, %v1893
      %v1895 = vrot.slane %v1890, %v1894
      %v1896 = vlaneseq
      %v1897 = vshrl.u32 %v1896, 7
      %v1898 = vsub.s32 1, %v1897
      %v1899 = vrot.slane %v1890, %v1898
      %v1903 = vsel %vm842, %v1873, 0
      %1905 = vmatprep.subr.mxu0 0.0
      %1906 = vmatpush1.msra.mxu0 0.0
      %1907 = vmatprep.subr.mxu0 0.0
      %1908 = vmatpush1.msra.mxu0 0.0
      %1909 = vmatprep.subr.mxu0 0.0
      %1910 = vmatpush1.msra.mxu0 0.0
      %1911 = vmatprep.subr.mxu0 0.0
      %1912 = vmatpush1.msra.mxu0 0.0
      %1913 = vmatprep.subr.mxu0 0.0
      %1914 = vmatpush1.msra.mxu0 0.0
      %1915 = vmatprep.subr.mxu0 0.0
      %1916 = vmatpush1.msra.mxu0 0.0
      %1917 = vmatprep.subr.mxu0 0.0
      %1918 = vmatpush1.msra.mxu0 0.0
      %1919 = vmatprep.subr.mxu0 0.0
      %1920 = vmatpush1.msra.mxu0 0.0
      %1921 = vmatprep.subr.mxu0 %v1889
      %1922 = vmatpush1.msra.mxu0 %v1888
      %1923 = vmatprep.subr.mxu0 %v1887
      %1924 = vmatpush1.msra.mxu0 %v1886
      %1925 = vmatprep.subr.mxu0 %v1885
      %1926 = vmatpush1.msra.mxu0 %v1884
      %1927 = vmatprep.subr.mxu0 %v1883
      %1928 = vmatpush1.msra.mxu0 %v1882
      %1929 = vmatprep.subr.mxu0 %v1881
      %1930 = vmatpush1.msra.mxu0 %v1880
      %1931 = vmatprep.subr.mxu0 %v1879
      %1932 = vmatpush1.msra.mxu0 %v1878
      %1933 = vmatprep.subr.mxu0 %v1877
      %1934 = vmatpush1.msra.mxu0 %v1876
      %1935 = vmatprep.subr.mxu0 %v1875
      %1936 = vmatpush1.msra.mxu0 %v1874
      %1937 = vmatprep.subr.mxu0 0.0
      %1938 = vmatpush2.msra.mxu0 0.0
      %1939 = vmatprep.subr.mxu0 0.0
      %1940 = vmatpush2.msra.mxu0 0.0
      %1941 = vmatprep.subr.mxu0 0.0
      %1942 = vmatpush2.msra.mxu0 0.0
      %1943 = vmatprep.subr.mxu0 0.0
      %1944 = vmatpush2.msra.mxu0 0.0
      %1945 = vmatprep.subr.mxu0 0.0
      %1946 = vmatpush2.msra.mxu0 0.0
      %1947 = vmatprep.subr.mxu0 0.0
      %1948 = vmatpush2.msra.mxu0 0.0
      %1949 = vmatprep.subr.mxu0 0.0
      %1950 = vmatpush2.msra.mxu0 0.0
      %1951 = vmatprep.subr.mxu0 0.0
      %1952 = vmatpush2.msra.mxu0 0.0
      %1953 = vmatprep.subr.mxu0 0.0
      %1954 = vmatpush2.msra.mxu0 0.0
      %1955 = vmatprep.subr.mxu0 0.0
      %1956 = vmatpush2.msra.mxu0 0.0
      %1957 = vmatprep.subr.mxu0 0.0
      %1958 = vmatpush2.msra.mxu0 0.0
      %1959 = vmatprep.subr.mxu0 0.0
      %1960 = vmatpush2.msra.mxu0 0.0
      %1961 = vmatprep.subr.mxu0 0.0
      %1962 = vmatpush2.msra.mxu0 0.0
      %1963 = vmatprep.subr.mxu0 0.0
      %1964 = vmatpush2.msra.mxu0 0.0
      %1965 = vmatprep.subr.mxu0 0.0
      %1966 = vmatpush2.msra.mxu0 0.0
      %1967 = vmatprep.subr.mxu0 0.0
      %1968 = vmatpush2.msra.mxu0 0.0
      %1969 = vmatprep.mubr.f32.mxu0 0.0
      %1970 = vmatmul.mubr.f32.gmra.mxu0 %v1903
      %v1971 = vpop.f32.mrf.mxu0
      %v1972 = vadd.f32 %v1895, %v1971
      %v1973 = vpop.f32.mrf.mxu0
      %v1974 = vadd.f32 %v1899, %v1973
      %1975 = vdwg.mxu0
      %v1976 = vmul.f32 %v1972, 0.70710677
      %v1977 = vmul.f32 %v1974, 0.70710677
      %vm1978 = vcmp.ge.f32.partialorder %v1976, 0.0
      %vm1979 = vcmp.ge.f32.partialorder %v1977, 0.0
      %v1980 = vsel %vm1978, 1.0, -1.0
      %v1981 = vsel %vm1979, 1.0, -1.0
      %v1982 = vand.u32 2147483647, %v1976
      %v1983 = vand.u32 2147483647, %v1977
      %v1984 = vmul.f32 %v1982, 0.3275911
      %v1985 = vmul.f32 %v1983, 0.3275911
      %v1986 = vadd.f32 %v1984, 1.0
      %v1987 = vadd.f32 %v1985, 1.0
      %v1988 = vrcp.pop %v1986
      %v1989 = vrcp.pop %v1987
      %v1990 = vmul.f32 %v1988, 1.0614054
      %v1991 = vmul.f32 %v1989, 1.0614054
      %v1992 = vadd.f32 %v1990, -1.4531521
      %v1993 = vadd.f32 %v1991, -1.4531521
      %v1994 = vmul.f32 %v1992, %v1988
      %v1995 = vmul.f32 %v1993, %v1989
      %v1996 = vadd.f32 %v1994, 1.4214138
      %v1997 = vadd.f32 %v1995, 1.4214138
      %v1998 = vmul.f32 %v1996, %v1988
      %v1999 = vmul.f32 %v1997, %v1989
      %v2000 = vadd.f32 %v1998, -0.28449672
      %v2001 = vadd.f32 %v1999, -0.28449672
      %v2002 = vmul.f32 %v2000, %v1988
      %v2003 = vmul.f32 %v2001, %v1989
      %v2004 = vadd.f32 %v2002, 0.2548296
      %v2005 = vadd.f32 %v2003, 0.2548296
      %v2006 = vmul.f32 %v2004, %v1988
      %v2007 = vmul.f32 %v2005, %v1989
      %v2008 = vsub.f32 0.0, %v1982
      %v2009 = vsub.f32 0.0, %v1983
      %v2010 = vmul.f32 %v2008, %v1982
      %v2011 = vmul.f32 %v2009, %v1983
      %v2012 = vmul.f32 %v2010, 1.442695
      %v2013 = vpow.pop %v2012
      %v2014 = vmul.f32 %v2011, 1.442695
      %v2015 = vpow.pop %v2014
      %v2016 = vmul.f32 %v2006, %v2013
      %v2017 = vmul.f32 %v2007, %v2015
      %v2018 = vsub.f32 1.0, %v2016
      %v2019 = vsub.f32 1.0, %v2017
      %v2020 = vmul.f32 %v1980, %v2018
      %v2021 = vmul.f32 %v1981, %v2019
      %v2022 = vmul.f32 %v1972, 0.5
      %v2023 = vmul.f32 %v1974, 0.5
      %v2024 = vadd.f32 %v2020, 1.0
      %v2025 = vadd.f32 %v2021, 1.0
      %v2026 = vmul.f32 %v2022, %v2024
      %v2027 = vmul.f32 %v2023, %v2025
      %v2028 = vld [vmem:[%s16] sm:$0xff]
      %v2029 = vld [vmem:[%s16 + $0x8] sm:$0xff]
      %v2030 = vld [vmem:[%s16 + $0x10] sm:$0xff]
      %v2031 = vld [vmem:[%s16 + $0x18] sm:$0xff]
      %v2032 = vld [vmem:[%s16 + $0x20] sm:$0xff]
      %v2033 = vld [vmem:[%s16 + $0x28] sm:$0xff]
      %v2034 = vld [vmem:[%s16 + $0x30] sm:$0xff]
      %v2035 = vld [vmem:[%s16 + $0x38] sm:$0xff]
      %v2036 = vld [vmem:[%s16 + $0x40] sm:$0xff]
      %v2037 = vld [vmem:[%s16 + $0x48] sm:$0xff]
      %v2038 = vld [vmem:[%s16 + $0x50] sm:$0xff]
      %v2039 = vld [vmem:[%s16 + $0x58] sm:$0xff]
      %v2040 = vld [vmem:[%s16 + $0x60] sm:$0xff]
      %v2041 = vld [vmem:[%s16 + $0x68] sm:$0xff]
      %v2042 = vld [vmem:[%s16 + $0x70] sm:$0xff]
      %v2043 = vld [vmem:[%s16 + $0x78] sm:$0xff]
      %v2044 = vld [vmem:[%s16 + $0x80] sm:$0xff]
      %v2045 = vld [vmem:[%s16 + $0x88] sm:$0xff]
      %v2046 = vld [vmem:[%s16 + $0x90] sm:$0xff]
      %v2047 = vld [vmem:[%s16 + $0x98] sm:$0xff]
      %v2048 = vld [vmem:[%s16 + $0xa0] sm:$0xff]
      %v2049 = vld [vmem:[%s16 + $0xa8] sm:$0xff]
      %v2050 = vld [vmem:[%s16 + $0xb0] sm:$0xff]
      %v2051 = vld [vmem:[%s16 + $0xb8] sm:$0xff]
      %v2052 = vld [vmem:[%s16 + $0xc0] sm:$0xff]
      %v2053 = vld [vmem:[%s16 + $0xc8] sm:$0xff]
      %v2054 = vld [vmem:[%s16 + $0xd0] sm:$0xff]
      %v2055 = vld [vmem:[%s16 + $0xd8] sm:$0xff]
      %v2056 = vld [vmem:[%s16 + $0xe0] sm:$0xff]
      %v2057 = vld [vmem:[%s16 + $0xe8] sm:$0xff]
      %v2058 = vld [vmem:[%s16 + $0xf0] sm:$0xff]
      %v2059 = vld [vmem:[%s16 + $0xf8] sm:$0xff]
      %v2060 = vld [vmem:[%s17] sm:$0x1]
      %v2062 = vlaneseq
      %v2063 = vshrl.u32 %v2062, 7
      %v2064 = vsub.s32 0, %v2063
      %v2065 = vrot.slane %v2060, %v2064
      %2067 = vmatprep.subr.mxu0 0.0
      %2068 = vmatpush1.msra.mxu0 %v2043
      %2069 = vmatprep.subr.mxu0 0.0
      %2070 = vmatpush1.msra.mxu0 %v2042
      %2071 = vmatprep.subr.mxu0 0.0
      %2072 = vmatpush1.msra.mxu0 %v2041
      %2073 = vmatprep.subr.mxu0 0.0
      %2074 = vmatpush1.msra.mxu0 %v2040
      %2075 = vmatprep.subr.mxu0 0.0
      %2076 = vmatpush1.msra.mxu0 %v2039
      %2077 = vmatprep.subr.mxu0 0.0
      %2078 = vmatpush1.msra.mxu0 %v2038
      %2079 = vmatprep.subr.mxu0 0.0
      %2080 = vmatpush1.msra.mxu0 %v2037
      %2081 = vmatprep.subr.mxu0 0.0
      %2082 = vmatpush1.msra.mxu0 %v2036
      %2083 = vmatprep.subr.mxu0 0.0
      %2084 = vmatpush1.msra.mxu0 %v2035
      %2085 = vmatprep.subr.mxu0 0.0
      %2086 = vmatpush1.msra.mxu0 %v2034
      %2087 = vmatprep.subr.mxu0 0.0
      %2088 = vmatpush1.msra.mxu0 %v2033
      %2089 = vmatprep.subr.mxu0 0.0
      %2090 = vmatpush1.msra.mxu0 %v2032
      %2091 = vmatprep.subr.mxu0 0.0
      %2092 = vmatpush1.msra.mxu0 %v2031
      %2093 = vmatprep.subr.mxu0 0.0
      %2094 = vmatpush1.msra.mxu0 %v2030
      %2095 = vmatprep.subr.mxu0 0.0
      %2096 = vmatpush1.msra.mxu0 %v2029
      %2097 = vmatprep.subr.mxu0 0.0
      %2098 = vmatpush1.msra.mxu0 %v2028
      %2099 = vmatprep.subr.mxu0 0.0
      %2100 = vmatpush2.msra.mxu0 %v2059
      %2101 = vmatprep.subr.mxu0 0.0
      %2102 = vmatpush2.msra.mxu0 %v2058
      %2103 = vmatprep.subr.mxu0 0.0
      %2104 = vmatpush2.msra.mxu0 %v2057
      %2105 = vmatprep.subr.mxu0 0.0
      %2106 = vmatpush2.msra.mxu0 %v2056
      %2107 = vmatprep.subr.mxu0 0.0
      %2108 = vmatpush2.msra.mxu0 %v2055
      %2109 = vmatprep.subr.mxu0 0.0
      %2110 = vmatpush2.msra.mxu0 %v2054
      %2111 = vmatprep.subr.mxu0 0.0
      %2112 = vmatpush2.msra.mxu0 %v2053
      %2113 = vmatprep.subr.mxu0 0.0
      %2114 = vmatpush2.msra.mxu0 %v2052
      %2115 = vmatprep.subr.mxu0 0.0
      %2116 = vmatpush2.msra.mxu0 %v2051
      %2117 = vmatprep.subr.mxu0 0.0
      %2118 = vmatpush2.msra.mxu0 %v2050
      %2119 = vmatprep.subr.mxu0 0.0
      %2120 = vmatpush2.msra.mxu0 %v2049
      %2121 = vmatprep.subr.mxu0 0.0
      %2122 = vmatpush2.msra.mxu0 %v2048
      %2123 = vmatprep.subr.mxu0 0.0
      %2124 = vmatpush2.msra.mxu0 %v2047
      %2125 = vmatprep.subr.mxu0 0.0
      %2126 = vmatpush2.msra.mxu0 %v2046
      %2127 = vmatprep.subr.mxu0 0.0
      %2128 = vmatpush2.msra.mxu0 %v2045
      %2129 = vmatprep.subr.mxu0 0.0
      %2130 = vmatpush2.msra.mxu0 %v2044
      %2131 = vmatprep.mubr.f32.mxu0 %v2027
      %2132 = vmatmul.mubr.f32.gmra.mxu0 %v2026
      %v2133 = vpop.f32.mrf.mxu0
      %v2134 = vadd.f32 %v2065, %v2133
      %v2135 = vpop.f32.mrf.mxu0
      %2136 = vdwg.mxu0
      %v2137 = vadd.f32 %v1844, %v2134
      %2138 = vst.msk [vmem:[%s590] sm:$0x1f] %vm806, %v2137
      %p2139 = scmp.lt.s32.totalorder %s29, 1
      %s2140 = scalar_select %p2139, %s29, 1
      %s2141 = smul.addr %s2140, 8
      %s2142 = scalar_lea.vmem %s18, %s2141
      // Predicated region
      $region93: #{tnt_block_forward.3} parent=91 // pred_check
        %p2143 = pneg %p435
      $region94: #{tnt_block_forward.3} parent=91 // pred_check_branch
        %2145 = sbr.rel (%p2143) target = $region96
      $region95: #{tnt_block_forward.3} parent=91 // pred_region
        _
      $region96: #{tnt_block_forward.3} parent=91 // pred_fallthru
        _
    $region92: #{tnt_block_forward.3} parent=5 // pred_fallthru
      _
    %p2146 = scmp.le.s32.totalorder 2, %s24
    // Predicated region
    $region97: #{tnt_block_forward.3} parent=5 // pred_check
      %p2147 = pneg %p2146
    $region98: #{tnt_block_forward.3} parent=5 // pred_check_branch
      %2149 = sbr.rel (%p2147) target = $region100
    $region99: #{tnt_block_forward.3} parent=5 // pred_region
      %s2150 = ssub.s32 %s24, 2
      // Predicated region
      $region101: #{tnt_block_forward.3} parent=99 // pred_check
        %p2151 = pneg %p441
      $region102: #{tnt_block_forward.3} parent=99 // pred_check_branch
        %2153 = sbr.rel (%p2151) target = $region104
      $region103: #{tnt_block_forward.3} parent=99 // pred_region
        %p2154 = scmp.lt.s32.totalorder %s30, 1
        %s2155 = scalar_select %p2154, %s30, 1
        %s2156 = smul.addr %s2155, 8
        %s2157 = scalar_lea.vmem %s18, %s2156
      $region104: #{tnt_block_forward.3} parent=99 // pred_fallthru
        _
    $region100: #{tnt_block_forward.3} parent=5 // pred_fallthru
      _
  $region6: #{tnt_block_forward.3} parent=0 // loop_footer
    %s28 = sadd.s32 1, %s24
  $region7: #{tnt_block_forward.3} parent=0 // loop_footer_branch
    %23 = sbr.rel target = $region3
  $region8: #{tnt_block_forward.3} parent=0 // loop_exit
    _

</llo_original>
